<compile_context>
chip_gen: v7x
topology: tpu7x:2x2x1
jax: 0.10.0
libtpu: 0.0.40
codegen_flags: <defaults>
</compile_context>

<pallas_src>
import jax
import jax.numpy as jnp
from jax.experimental import pallas as pl
from jax.experimental.pallas import tpu as pltpu

_PREC = jax.lax.Precision.HIGHEST


def _facmac_critic_kernel(obs_ref, act_ref, w1o_ref, w1a_ref, b1_ref,
                          w2_ref, b2_ref, w3_ref, b3_ref, q_ref):
    """One row tile: obs (tm, G*obs_dim), act (tm, G*n_act) -> q (tm, G)."""
    # fc1 as a split matmul (no [obs, act] concat); block-diagonal weights keep
    # the G packed logical rows independent.  f32 operands, f32 accumulate.
    h1 = jnp.dot(obs_ref[...], w1o_ref[...],
                 preferred_element_type=jnp.float32, precision=_PREC)
    h1 = h1 + jnp.dot(act_ref[...], w1a_ref[...],
                      preferred_element_type=jnp.float32, precision=_PREC)
    h1 = jnp.maximum(h1 + b1_ref[...], 0.0)           # lane-dense VPU bias+ReLU

    # fc2: block-diagonal (G*H, G*H) = 256x256 at the default pack, which fills
    # the v6e/v7x MXU output width.
    h2 = jnp.dot(h1, w2_ref[...],
                 preferred_element_type=jnp.float32, precision=_PREC)
    h2 = jnp.maximum(h2 + b2_ref[...], 0.0)

    # fc3 as a (G*H, G) block-selector matmul: lane g of the output is q of the
    # g-th packed logical row, so the tile output is already row-major packed.
    q = jnp.dot(h2, w3_ref[...],
                preferred_element_type=jnp.float32, precision=_PREC)
    q_ref[...] = q + b3_ref[0, 0]                      # b3 read from SMEM


def _round_up(x, m):
    return ((x + m - 1) // m) * m


def facmac_critic_forward(inputs, actions, params, *, tile_rows=16384, pack=None):
    """Pallas TPU implementation of FACMACCritic.forward.

    inputs : (..., obs_dim)    -> flattened to (-1, obs_dim)
    actions: (..., n_actions)  -> flattened to (-1, n_actions); if None,
             `inputs` must already carry obs_dim + n_actions features.
    Returns (q, hidden_state=None) with q of shape (N, 1), float32.

    tile_rows: logical rows per grid step (capped by a lane-padded ~24 MiB
               VMEM budget so it is safe on v7x's 64 MiB / 32 MiB-scoped VMEM).
    pack:      logical rows packed per vector row (block-diagonal weights).
               Default fills a 256-wide MXU (v6e/v7x); use 4 on v5e (128-wide).
    """
    n_actions = int(params["n_actions"])
    in_features, hidden = params["w1"].shape
    obs_dim = in_features - n_actions

    if actions is not None:
        obs = inputs.reshape(-1, obs_dim)
        act = actions.reshape(-1, n_actions)
    else:
        x = inputs.reshape(-1, in_features)
        obs, act = x[:, :obs_dim], x[:, obs_dim:]
    obs = obs.astype(jnp.float32)
    act = act.astype(jnp.float32)
    n_rows = obs.shape[0]

    if pack is None:
        pack = max(1, min(8, 256 // max(int(hidden), 1)))
    g = int(pack)

    # ---- lane-padded VMEM budgeting (VMEM tiles pad to (8, 128)) ------------
    def lane(n):
        return _round_up(max(int(n), 1), 128)

    def sub(n):
        return _round_up(max(int(n), 1), 8)

    # streamed blocks are double-buffered; ~3 (tm, G*H) f32 temporaries (h1/h2/
    # matmul results) of compiler scratch.
    bytes_per_packed_row = 4 * (2 * (lane(g * obs_dim) + lane(g * n_actions) + lane(g))
                                + 3 * lane(g * hidden))
    weight_bytes = 4 * 2 * (sub(g * obs_dim) * lane(g * hidden)
                            + sub(g * n_actions) * lane(g * hidden)
                            + sub(g * hidden) * lane(g * hidden)
                            + sub(g * hidden) * lane(g)
                            + 2 * sub(1) * lane(g * hidden))
    budget = 24 << 20                       # conservative: fits v7x / default scoped VMEM
    tm_cap = max(8, ((budget - weight_bytes) // bytes_per_packed_row) // 8 * 8)

    # ---- grid over packed-row tiles; force >=2 steps so both v7x TCs get work
    np_rows = _round_up(max(pl.cdiv(max(n_rows, 1), g), 1), 8)
    tm_req = min(max(8, _round_up(pl.cdiv(int(tile_rows), g), 8)), tm_cap)
    steps = max(1, pl.cdiv(np_rows, tm_req))
    if steps == 1 and np_rows >= 16:
        steps = 2
    tm_p = _round_up(pl.cdiv(np_rows, steps), 8)
    np_pad = tm_p * steps

    # ---- pack G logical rows per vector row (free, row-major reshape) -------
    n_logical_pad = np_pad * g
    if n_logical_pad != n_rows:
        obs = jnp.pad(obs, ((0, n_logical_pad - n_rows), (0, 0)))
        act = jnp.pad(act, ((0, n_logical_pad - n_rows), (0, 0)))
    obs_p = obs.reshape(np_pad, g * obs_dim)
    act_p = act.reshape(np_pad, g * n_actions)

    # ---- block-diagonal weights / tiled biases (tiny, built once, resident) -
    eye = jnp.eye(g, dtype=jnp.float32)
    w1 = params["w1"].astype(jnp.float32)
    w1o_bd = jnp.kron(eye, w1[:obs_dim])                                   # (G*obs, G*H)
    w1a_bd = jnp.kron(eye, w1[obs_dim:])                                   # (G*act, G*H)
    w2_bd = jnp.kron(eye, params["w2"].astype(jnp.float32))                # (G*H, G*H)
    w3_sel = jnp.kron(eye, params["w3"].reshape(hidden, 1).astype(jnp.float32))  # (G*H, G)
    b1_t = jnp.tile(params["b1"].reshape(1, hidden).astype(jnp.float32), (1, g))
    b2_t = jnp.tile(params["b2"].reshape(1, hidden).astype(jnp.float32), (1, g))
    b3 = params["b3"].reshape(1, 1).astype(jnp.float32)

    def const_spec(shape):
        # Same block every grid step -> fetched once, stays VMEM resident.
        return pl.BlockSpec(shape, lambda i: (0, 0))

    vmem_limit = int(min(48 << 20,
                         max(32 << 20,
                             weight_bytes + tm_p * bytes_per_packed_row + (8 << 20))))

    q_packed = pl.pallas_call(
        _facmac_critic_kernel,
        out_shape=jax.ShapeDtypeStruct((np_pad, g), jnp.float32),
        grid=(steps,),
        in_specs=[
            pl.BlockSpec((tm_p, g * obs_dim), lambda i: (i, 0)),    # streamed obs tile
            pl.BlockSpec((tm_p, g * n_actions), lambda i: (i, 0)),  # streamed act tile
            const_spec(w1o_bd.shape),
            const_spec(w1a_bd.shape),
            const_spec(b1_t.shape),
            const_spec(w2_bd.shape),
            const_spec(b2_t.shape),
            const_spec(w3_sel.shape),
            pl.BlockSpec((1, 1), lambda i: (0, 0),
                         memory_space=pltpu.MemorySpace.SMEM),       # b3 scalar
        ],
        out_specs=pl.BlockSpec((tm_p, g), lambda i: (i, 0)),
        compiler_params=pltpu.CompilerParams(
            dimension_semantics=("parallel",),
            vmem_limit_bytes=vmem_limit),
    )(obs_p, act_p, w1o_bd, w1a_bd, b1_t, w2_bd, b2_t, w3_sel, b3)

    # (np_pad, G) row-major == logical row order; drop padded rows.
    q = q_packed.reshape(-1, 1)[:n_rows]
    return q, None


def init_params(key, obs_dim, n_actions, hidden_dim):
    """PyTorch nn.Linear-style init (uniform +/- 1/sqrt(fan_in)), float32."""
    input_shape = obs_dim + n_actions
    ks = jax.random.split(key, 6)

    def linear(kw, kb, fan_in, fan_out):
        bound = 1.0 / float(fan_in) ** 0.5
        w = jax.random.uniform(kw, (fan_in, fan_out), jnp.float32, -bound, bound)
        b = jax.random.uniform(kb, (1, fan_out), jnp.float32, -bound, bound)
        return w, b

    w1, b1 = linear(ks[0], ks[1], input_shape, hidden_dim)
    w2, b2 = linear(ks[2], ks[3], hidden_dim, hidden_dim)
    w3, b3 = linear(ks[4], ks[5], hidden_dim, 1)
    return {"w1": w1, "b1": b1, "w2": w2, "b2": b2, "w3": w3, "b3": b3,
            "n_actions": n_actions}


def _reference_forward(inputs, actions, params):
    """Pure-JAX float32 reference matching the PyTorch module semantics."""
    n_actions = params["n_actions"]
    in_features = params["w1"].shape[0]
    x = jnp.concatenate(
        [inputs.reshape(-1, in_features - n_actions),
         actions.reshape(-1, n_actions)], axis=-1).astype(jnp.float32)
    h1 = jax.nn.relu(jnp.dot(x, params["w1"], precision=_PREC) + params["b1"])
    h2 = jax.nn.relu(jnp.dot(h1, params["w2"], precision=_PREC) + params["b2"])
    return jnp.dot(h2, params["w3"], precision=_PREC) + params["b3"]


if __name__ == "__main__":
    # Shapes consistent with the module: scheme['obs']['vshape']=16,
    # n_actions=4, rnn_hidden_dim=32.
    obs_dim, n_actions, hidden_dim = 16, 4, 32

    key = jax.random.PRNGKey(0)
    k_in, k_act, k_par, k_in2, k_act2 = jax.random.split(key, 5)
    params = init_params(k_par, obs_dim, n_actions, hidden_dim)

    # --- small case: batch=2, n_agents=3 -> N = 6 rows (single tile) ---------
    batch, n_agents = 2, 3
    inputs = jax.random.normal(k_in, (batch, n_agents, obs_dim), jnp.float32)
    actions = jax.random.normal(k_act, (batch, n_agents, n_actions), jnp.float32)

    q, hidden = facmac_critic_forward(inputs, actions, params)
    q = jax.block_until_ready(q)
    q_ref = _reference_forward(inputs, actions, params)
    assert q.shape == (batch * n_agents, 1), q.shape
    assert hidden is None
    assert jnp.allclose(q, q_ref, atol=2e-4, rtol=2e-4), \
        float(jnp.max(jnp.abs(q - q_ref)))

    # --- larger case: N = 1050 -> forced 2-step grid (streaming + padding) ---
    batch2, n_agents2 = 350, 3
    inputs2 = jax.random.normal(k_in2, (batch2, n_agents2, obs_dim), jnp.float32)
    actions2 = jax.random.normal(k_act2, (batch2, n_agents2, n_actions), jnp.float32)

    q2, _ = facmac_critic_forward(inputs2, actions2, params)
    q2 = jax.block_until_ready(q2)
    q2_ref = _reference_forward(inputs2, actions2, params)
    assert q2.shape == (batch2 * n_agents2, 1), q2.shape
    assert jnp.allclose(q2, q2_ref, atol=2e-4, rtol=2e-4), \
        float(jnp.max(jnp.abs(q2 - q2_ref)))

    # --- same inputs, small tile -> >=3 grid steps (multi-tile pipeline path) -
    q3, _ = facmac_critic_forward(inputs2, actions2, params, tile_rows=512)
    q3 = jax.block_until_ready(q3)
    assert jnp.allclose(q3, q2_ref, atol=2e-4, rtol=2e-4), \
        float(jnp.max(jnp.abs(q3 - q2_ref)))

    print("KERNEL_OK")
</pallas_src>

<mosaic_0001>
module attributes {stable_mosaic.version = 11 : i64} {
  func.func @_facmac_critic_kernel(%arg0: i32, %arg1: memref<8x128xf32, #tpu.memory_space<vmem>>, %arg2: memref<8x32xf32, #tpu.memory_space<vmem>>, %arg3: memref<128x256xf32, #tpu.memory_space<vmem>>, %arg4: memref<32x256xf32, #tpu.memory_space<vmem>>, %arg5: memref<1x256xf32, #tpu.memory_space<vmem>>, %arg6: memref<256x256xf32, #tpu.memory_space<vmem>>, %arg7: memref<1x256xf32, #tpu.memory_space<vmem>>, %arg8: memref<256x8xf32, #tpu.memory_space<vmem>>, %arg9: memref<1x1xf32, #tpu.memory_space<smem>>, %arg10: memref<8x8xf32, #tpu.memory_space<vmem>>) attributes {dimension_semantics = [#tpu.dimension_semantics<parallel>], iteration_bounds = array<i64: 1>, scalar_prefetch = 0 : i64, scratch_operands = 0 : i64, tpu.core_type = #tpu.core_type<tc>, window_params = [{transform_indices = @transform_0, window_bounds = array<i64: 8, 128>}, {transform_indices = @transform_1, window_bounds = array<i64: 8, 32>}, {pipeline_mode = #tpu.pipeline_mode<synchronous>, transform_indices = @transform_2, window_bounds = array<i64: 128, 256>}, {pipeline_mode = #tpu.pipeline_mode<synchronous>, transform_indices = @transform_3, window_bounds = array<i64: 32, 256>}, {pipeline_mode = #tpu.pipeline_mode<synchronous>, transform_indices = @transform_4, window_bounds = array<i64: 1, 256>}, {pipeline_mode = #tpu.pipeline_mode<synchronous>, transform_indices = @transform_5, window_bounds = array<i64: 256, 256>}, {pipeline_mode = #tpu.pipeline_mode<synchronous>, transform_indices = @transform_6, window_bounds = array<i64: 1, 256>}, {pipeline_mode = #tpu.pipeline_mode<synchronous>, transform_indices = @transform_7, window_bounds = array<i64: 256, 8>}, {transform_indices = @transform_8, window_bounds = array<i64: 1, 1>}, {transform_indices = @transform_9, window_bounds = array<i64: 8, 8>}]} {
    %c0 = arith.constant 0 : index
    %c0_0 = arith.constant 0 : index
    %0 = vector.load %arg1[%c0, %c0_0] : memref<8x128xf32, #tpu.memory_space<vmem>>, vector<8x128xf32>
    %c0_1 = arith.constant 0 : index
    %c0_2 = arith.constant 0 : index
    %1 = vector.load %arg3[%c0_1, %c0_2] : memref<128x256xf32, #tpu.memory_space<vmem>>, vector<128x256xf32>
    %cst = arith.constant dense<0.000000e+00> : vector<8x256xf32>
    %2 = tpu.matmul %0, %1, %cst {dimension_numbers = #tpu.dot_dimension_numbers<[1], [0], [0], [1], [0, 0, 1, 1], [], []>, precision = #tpu.contract_precision<fp32>} : vector<8x128xf32>, vector<128x256xf32>, vector<8x256xf32> -> vector<8x256xf32>
    %c0_3 = arith.constant 0 : index
    %c0_4 = arith.constant 0 : index
    %3 = vector.load %arg2[%c0_3, %c0_4] : memref<8x32xf32, #tpu.memory_space<vmem>>, vector<8x32xf32>
    %c0_5 = arith.constant 0 : index
    %c0_6 = arith.constant 0 : index
    %4 = vector.load %arg4[%c0_5, %c0_6] : memref<32x256xf32, #tpu.memory_space<vmem>>, vector<32x256xf32>
    %cst_7 = arith.constant dense<0.000000e+00> : vector<8x256xf32>
    %5 = tpu.matmul %3, %4, %cst_7 {dimension_numbers = #tpu.dot_dimension_numbers<[1], [0], [0], [1], [0, 0, 1, 1], [], []>, precision = #tpu.contract_precision<fp32>} : vector<8x32xf32>, vector<32x256xf32>, vector<8x256xf32> -> vector<8x256xf32>
    %6 = arith.addf %2, %5 : vector<8x256xf32>
    %c0_8 = arith.constant 0 : index
    %c0_9 = arith.constant 0 : index
    %7 = vector.load %arg5[%c0_8, %c0_9] : memref<1x256xf32, #tpu.memory_space<vmem>>, vector<1x256xf32>
    %8 = vector.broadcast %7 : vector<1x256xf32> to vector<8x256xf32>
    %9 = arith.addf %6, %8 : vector<8x256xf32>
    %cst_10 = arith.constant 0.000000e+00 : f32
    %10 = vector.broadcast %cst_10 : f32 to vector<8x256xf32>
    %11 = arith.maximumf %9, %10 : vector<8x256xf32>
    %c0_11 = arith.constant 0 : index
    %c0_12 = arith.constant 0 : index
    %12 = vector.load %arg6[%c0_11, %c0_12] : memref<256x256xf32, #tpu.memory_space<vmem>>, vector<256x256xf32>
    %cst_13 = arith.constant dense<0.000000e+00> : vector<8x256xf32>
    %13 = tpu.matmul %11, %12, %cst_13 {dimension_numbers = #tpu.dot_dimension_numbers<[1], [0], [0], [1], [0, 0, 1, 1], [], []>, precision = #tpu.contract_precision<fp32>} : vector<8x256xf32>, vector<256x256xf32>, vector<8x256xf32> -> vector<8x256xf32>
    %c0_14 = arith.constant 0 : index
    %c0_15 = arith.constant 0 : index
    %14 = vector.load %arg7[%c0_14, %c0_15] : memref<1x256xf32, #tpu.memory_space<vmem>>, vector<1x256xf32>
    %15 = vector.broadcast %14 : vector<1x256xf32> to vector<8x256xf32>
    %16 = arith.addf %13, %15 : vector<8x256xf32>
    %cst_16 = arith.constant 0.000000e+00 : f32
    %17 = vector.broadcast %cst_16 : f32 to vector<8x256xf32>
    %18 = arith.maximumf %16, %17 : vector<8x256xf32>
    %c0_17 = arith.constant 0 : index
    %c0_18 = arith.constant 0 : index
    %19 = vector.load %arg8[%c0_17, %c0_18] : memref<256x8xf32, #tpu.memory_space<vmem>>, vector<256x8xf32>
    %cst_19 = arith.constant dense<0.000000e+00> : vector<8x8xf32>
    %20 = tpu.matmul %18, %19, %cst_19 {dimension_numbers = #tpu.dot_dimension_numbers<[1], [0], [0], [1], [0, 0, 1, 1], [], []>, precision = #tpu.contract_precision<fp32>} : vector<8x256xf32>, vector<256x8xf32>, vector<8x8xf32> -> vector<8x8xf32>
    %c0_20 = arith.constant 0 : index
    %c0_21 = arith.constant 0 : index
    %21 = memref.load %arg9[%c0_20, %c0_21] : memref<1x1xf32, #tpu.memory_space<smem>>
    %22 = vector.broadcast %21 : f32 to vector<8x8xf32>
    %23 = arith.addf %20, %22 : vector<8x8xf32>
    %c0_22 = arith.constant 0 : index
    %c0_23 = arith.constant 0 : index
    %24 = vector.load %arg10[%c0_22, %c0_23] : memref<8x8xf32, #tpu.memory_space<vmem>>, vector<8x8xf32>
    tpu.vector_store %arg10[%c0_22, %c0_23], %23 {strides = array<i32>} : memref<8x8xf32, #tpu.memory_space<vmem>>, vector<8x8xf32>,
    return
  }
  func.func @transform_0(%arg0: i32) -> (i32, i32) {
    %c0_i32 = arith.constant 0 : i32
    %c0_i32_0 = arith.constant 0 : i32
    return %arg0, %c0_i32 : i32, i32
  }
  func.func @transform_1(%arg0: i32) -> (i32, i32) {
    %c0_i32 = arith.constant 0 : i32
    %c0_i32_0 = arith.constant 0 : i32
    return %arg0, %c0_i32 : i32, i32
  }
  func.func @transform_2(%arg0: i32) -> (i32, i32) {
    %c0_i32 = arith.constant 0 : i32
    %c0_i32_0 = arith.constant 0 : i32
    %c0_i32_1 = arith.constant 0 : i32
    return %c0_i32, %c0_i32_0 : i32, i32
  }
  func.func @transform_3(%arg0: i32) -> (i32, i32) {
    %c0_i32 = arith.constant 0 : i32
    %c0_i32_0 = arith.constant 0 : i32
    %c0_i32_1 = arith.constant 0 : i32
    return %c0_i32, %c0_i32_0 : i32, i32
  }
  func.func @transform_4(%arg0: i32) -> (i32, i32) {
    %c0_i32 = arith.constant 0 : i32
    %c0_i32_0 = arith.constant 0 : i32
    %c0_i32_1 = arith.constant 0 : i32
    return %c0_i32, %c0_i32_0 : i32, i32
  }
  func.func @transform_5(%arg0: i32) -> (i32, i32) {
    %c0_i32 = arith.constant 0 : i32
    %c0_i32_0 = arith.constant 0 : i32
    %c0_i32_1 = arith.constant 0 : i32
    return %c0_i32, %c0_i32_0 : i32, i32
  }
  func.func @transform_6(%arg0: i32) -> (i32, i32) {
    %c0_i32 = arith.constant 0 : i32
    %c0_i32_0 = arith.constant 0 : i32
    %c0_i32_1 = arith.constant 0 : i32
    return %c0_i32, %c0_i32_0 : i32, i32
  }
  func.func @transform_7(%arg0: i32) -> (i32, i32) {
    %c0_i32 = arith.constant 0 : i32
    %c0_i32_0 = arith.constant 0 : i32
    %c0_i32_1 = arith.constant 0 : i32
    return %c0_i32, %c0_i32_0 : i32, i32
  }
  func.func @transform_8(%arg0: i32) -> (i32, i32) {
    %c0_i32 = arith.constant 0 : i32
    %c0_i32_0 = arith.constant 0 : i32
    %c0_i32_1 = arith.constant 0 : i32
    return %c0_i32, %c0_i32_0 : i32, i32
  }
  func.func @transform_9(%arg0: i32) -> (i32, i32) {
    %c0_i32 = arith.constant 0 : i32
    %c0_i32_0 = arith.constant 0 : i32
    return %arg0, %c0_i32 : i32, i32
  }
}

</mosaic_0001>

<llo_original>
// kernel: tpu_custom_call.1
$region0: #{tpu_custom_call.1}
  #allocation0 [shape = 'u32[]', space=smem, size = 0x4, offset = 0x4, fixed_abs, tag = 'smem constant byte address 0x4 - core index']
  #allocation1 [shape = 'u32[144,128]{1,0:T(1,128)}', space=vmem, size = 0x12000, scoped, tag = 'internal scratch']
  #allocation2 [shape = 'f32[1,1]{1,0:T(1,128)S(6)}', space=smem, size = 0x200, scoped, tag = 'scoped memory for tpu_custom_call.1']
  %s0 = inlined_call_operand.vmem [shape: f32[8,128], index: 0, kind: input, shape index: {}]
  %s1 = inlined_call_operand.vmem [shape: f32[8,32], index: 1, kind: input, shape index: {}]
  %s2 = inlined_call_operand.vmem [shape: f32[128,256], index: 2, kind: input, shape index: {}]
  %s3 = inlined_call_operand.hbm [shape: f32[32,256], index: 3, kind: input, shape index: {}]
  %s4 = inlined_call_operand.vmem [shape: f32[1,256], index: 4, kind: input, shape index: {}]
  %s5 = inlined_call_operand.hbm [shape: f32[256,256], index: 5, kind: input, shape index: {}]
  %s6 = inlined_call_operand.vmem [shape: f32[1,256], index: 6, kind: input, shape index: {}]
  %s7 = inlined_call_operand.vmem [shape: f32[256,8], index: 7, kind: input, shape index: {}]
  %s8 = inlined_call_operand.<no memory space> [shape: f32[1,1], index: 8, kind: input, shape index: {}]
  %s9 = inlined_call_operand.hbm [shape: f32[8,8], index: 9, kind: output, shape index: {}]
  %s10 = sld [smem:[#allocation0]]
  $region54: #{tpu_custom_call.1} parent=0
    _
  %s12 = ssub.s32 1, %s10
  %s13 = scalar_select 0, %s12, %s10
  %14 = sst [smem:[#allocation2]] %s8
  $region1: #{tpu_custom_call.1} parent=0
    #allocation3 [shape = 'u8[32768]{0}', space=vmem, size = 0x8000, scoped, tag = 'input window, operand 3, single buffered']
    #allocation4 [shape = 's32[1]{0}', space=sflag, size = 0x4, scoped, tag = 'scoped memory for tpu_custom_call.1']
    #allocation5 [shape = 's32[1]{0}', space=sflag, size = 0x4, scoped, tag = 'scoped memory for tpu_custom_call.1']
    #allocation6 [shape = 'u8[262144]{0}', space=vmem, size = 0x40000, scoped, tag = 'input window, operand 5, single buffered']
    #allocation7 [shape = 's32[1]{0}', space=sflag, size = 0x4, scoped, tag = 'scoped memory for tpu_custom_call.1']
    #allocation8 [shape = 'u8[4096]{0}', space=vmem, size = 0x1000, scoped, tag = 'output window, operand 0, single buffered']
    %15 = vsyncpa [#allocation4], 0
    %16 = vsyncpa [#allocation7], 0
    %17 = vsyncpa [#allocation5], 0
    // Predicated region
    $region2: #{tpu_custom_call.1} parent=1 // pred_check
      _
    $region3: #{tpu_custom_call.1} parent=1 // pred_check_branch
      %19 = sbr.rel (0) target = $region5
    $region4: #{tpu_custom_call.1} parent=1 // pred_region
      _
    $region5: #{tpu_custom_call.1} parent=1 // pred_fallthru
      _
    // Predicated region
    $region6: #{tpu_custom_call.1} parent=1 // pred_check
      _
    $region7: #{tpu_custom_call.1} parent=1 // pred_check_branch
      %21 = sbr.rel (0) target = $region9
    $region8: #{tpu_custom_call.1} parent=1 // pred_region
      _
    $region9: #{tpu_custom_call.1} parent=1 // pred_fallthru
      _
    // Predicated region
    $region10: #{tpu_custom_call.1} parent=1 // pred_check
      _
    $region11: #{tpu_custom_call.1} parent=1 // pred_check_branch
      %23 = sbr.rel (0) target = $region13
    $region12: #{tpu_custom_call.1} parent=1 // pred_region
      _
    $region13: #{tpu_custom_call.1} parent=1 // pred_fallthru
      _
    // Predicated region
    $region14: #{tpu_custom_call.1} parent=1 // pred_check
      _
    $region15: #{tpu_custom_call.1} parent=1 // pred_check_branch
      %25 = sbr.rel (0) target = $region17
    $region16: #{tpu_custom_call.1} parent=1 // pred_region
      %s27 = ssub.s32 1024, 1024
      %28 = vsyncadd [#allocation4], %s27
      %s29 = sshll.u32 [#allocation3], 4
      %s30 = int_to_ptr.vmem [resolvable:$true] %s29
      %35 = dma.hbm_to_vmem [thread:$0]  %s3, 1024, %s30, [#allocation4], 256, 256, 16
    $region17: #{tpu_custom_call.1} parent=1 // pred_fallthru
      _
    // Predicated region
    $region18: #{tpu_custom_call.1} parent=1 // pred_check
      _
    $region19: #{tpu_custom_call.1} parent=1 // pred_check_branch
      %37 = sbr.rel (0) target = $region21
    $region20: #{tpu_custom_call.1} parent=1 // pred_region
      _
    $region21: #{tpu_custom_call.1} parent=1 // pred_fallthru
      _
    // Predicated region
    $region22: #{tpu_custom_call.1} parent=1 // pred_check
      _
    $region23: #{tpu_custom_call.1} parent=1 // pred_check_branch
      %39 = sbr.rel (0) target = $region25
    $region24: #{tpu_custom_call.1} parent=1 // pred_region
      %s41 = ssub.s32 8192, 8192
      %42 = vsyncadd [#allocation7], %s41
      %s43 = sshll.u32 [#allocation6], 4
      %s44 = int_to_ptr.vmem [resolvable:$true] %s43
      %49 = dma.hbm_to_vmem [thread:$0]  %s5, 8192, %s44, [#allocation7], 256, 256, 16
    $region25: #{tpu_custom_call.1} parent=1 // pred_fallthru
      _
    // Predicated region
    $region26: #{tpu_custom_call.1} parent=1 // pred_check
      _
    $region27: #{tpu_custom_call.1} parent=1 // pred_check_branch
      %51 = sbr.rel (0) target = $region29
    $region28: #{tpu_custom_call.1} parent=1 // pred_region
      _
    $region29: #{tpu_custom_call.1} parent=1 // pred_fallthru
      _
    // Predicated region
    $region30: #{tpu_custom_call.1} parent=1 // pred_check
      _
    $region31: #{tpu_custom_call.1} parent=1 // pred_check_branch
      %53 = sbr.rel (0) target = $region33
    $region32: #{tpu_custom_call.1} parent=1 // pred_region
      _
    $region33: #{tpu_custom_call.1} parent=1 // pred_fallthru
      _
    // Predicated region
    $region34: #{tpu_custom_call.1} parent=1 // pred_check
      _
    $region35: #{tpu_custom_call.1} parent=1 // pred_check_branch
      %55 = sbr.rel (0) target = $region37
    $region36: #{tpu_custom_call.1} parent=1 // pred_region
      _
    $region37: #{tpu_custom_call.1} parent=1 // pred_fallthru
      _
    // Predicated region
    $region38: #{tpu_custom_call.1} parent=1 // pred_check
      _
    $region39: #{tpu_custom_call.1} parent=1 // pred_check_branch
      %57 = sbr.rel (0) target = $region41
    $region40: #{tpu_custom_call.1} parent=1 // pred_region
      %58 = dma.done [#allocation4], 1024
    $region41: #{tpu_custom_call.1} parent=1 // pred_fallthru
      _
    // Predicated region
    $region42: #{tpu_custom_call.1} parent=1 // pred_check
      _
    $region43: #{tpu_custom_call.1} parent=1 // pred_check_branch
      %60 = sbr.rel (0) target = $region45
    $region44: #{tpu_custom_call.1} parent=1 // pred_region
      %61 = dma.done [#allocation7], 8192
    $region45: #{tpu_custom_call.1} parent=1 // pred_fallthru
      _
    %v62 = vld [vmem:[%s0] sm:$0xff]
    %v63 = vld [vmem:[%s2] sm:$0xff]
    %v64 = vld [vmem:[%s2 + $0x8] sm:$0xff]
    %v65 = vld [vmem:[%s2 + $0x10] sm:$0xff]
    %v66 = vld [vmem:[%s2 + $0x18] sm:$0xff]
    %v67 = vld [vmem:[%s2 + $0x20] sm:$0xff]
    %v68 = vld [vmem:[%s2 + $0x28] sm:$0xff]
    %v69 = vld [vmem:[%s2 + $0x30] sm:$0xff]
    %v70 = vld [vmem:[%s2 + $0x38] sm:$0xff]
    %v71 = vld [vmem:[%s2 + $0x40] sm:$0xff]
    %v72 = vld [vmem:[%s2 + $0x48] sm:$0xff]
    %v73 = vld [vmem:[%s2 + $0x50] sm:$0xff]
    %v74 = vld [vmem:[%s2 + $0x58] sm:$0xff]
    %v75 = vld [vmem:[%s2 + $0x60] sm:$0xff]
    %v76 = vld [vmem:[%s2 + $0x68] sm:$0xff]
    %v77 = vld [vmem:[%s2 + $0x70] sm:$0xff]
    %v78 = vld [vmem:[%s2 + $0x78] sm:$0xff]
    %v79 = vld [vmem:[%s2 + $0x80] sm:$0xff]
    %v80 = vld [vmem:[%s2 + $0x88] sm:$0xff]
    %v81 = vld [vmem:[%s2 + $0x90] sm:$0xff]
    %v82 = vld [vmem:[%s2 + $0x98] sm:$0xff]
    %v83 = vld [vmem:[%s2 + $0xa0] sm:$0xff]
    %v84 = vld [vmem:[%s2 + $0xa8] sm:$0xff]
    %v85 = vld [vmem:[%s2 + $0xb0] sm:$0xff]
    %v86 = vld [vmem:[%s2 + $0xb8] sm:$0xff]
    %v87 = vld [vmem:[%s2 + $0xc0] sm:$0xff]
    %v88 = vld [vmem:[%s2 + $0xc8] sm:$0xff]
    %v89 = vld [vmem:[%s2 + $0xd0] sm:$0xff]
    %v90 = vld [vmem:[%s2 + $0xd8] sm:$0xff]
    %v91 = vld [vmem:[%s2 + $0xe0] sm:$0xff]
    %v92 = vld [vmem:[%s2 + $0xe8] sm:$0xff]
    %v93 = vld [vmem:[%s2 + $0xf0] sm:$0xff]
    %v94 = vld [vmem:[%s2 + $0xf8] sm:$0xff]
    %v95 = vld [vmem:[%s1] sm:$0xff]
    %v96 = vld [vmem:[#allocation3] sm:$0xff]
    %v97 = vld [vmem:[#allocation3 + $0x8] sm:$0xff]
    %v98 = vld [vmem:[#allocation3 + $0x10] sm:$0xff]
    %v99 = vld [vmem:[#allocation3 + $0x18] sm:$0xff]
    %v100 = vld [vmem:[#allocation3 + $0x20] sm:$0xff]
    %v101 = vld [vmem:[#allocation3 + $0x28] sm:$0xff]
    %v102 = vld [vmem:[#allocation3 + $0x30] sm:$0xff]
    %v103 = vld [vmem:[#allocation3 + $0x38] sm:$0xff]
    %vm104 = vcmask 261120
    %v106 = vsel %vm104, %v95, 0
    %v108 = vand.u32 %v97, 4294901760
    %109 = vmatprep.subr.mxu0 %v108
    %v110 = vand.u32 %v96, 4294901760
    %111 = vmatpush1.msra.mxu0 %v110
    %v112 = vand.u32 %v99, 4294901760
    %113 = vmatprep.subr.mxu0 %v112
    %v114 = vand.u32 %v98, 4294901760
    %115 = vmatpush1.msra.mxu0 %v114
    %v116 = vand.u32 %v101, 4294901760
    %117 = vmatprep.subr.mxu0 %v116
    %v118 = vand.u32 %v100, 4294901760
    %119 = vmatpush1.msra.mxu0 %v118
    %v120 = vand.u32 %v103, 4294901760
    %121 = vmatprep.subr.mxu0 %v120
    %v122 = vand.u32 %v102, 4294901760
    %123 = vmatpush1.msra.mxu0 %v122
    %124 = vmatprep.subr.mxu0 0.0
    %125 = vmatpush1.msra.mxu0 0.0
    %126 = vmatprep.subr.mxu0 0.0
    %127 = vmatpush1.msra.mxu0 0.0
    %128 = vmatprep.subr.mxu0 0.0
    %129 = vmatpush1.msra.mxu0 0.0
    %130 = vmatprep.subr.mxu0 0.0
    %131 = vmatpush1.msra.mxu0 0.0
    %132 = vmatprep.subr.mxu0 0.0
    %133 = vmatpush1.msra.mxu0 0.0
    %134 = vmatprep.subr.mxu0 0.0
    %135 = vmatpush1.msra.mxu0 0.0
    %136 = vmatprep.subr.mxu0 0.0
    %137 = vmatpush1.msra.mxu0 0.0
    %138 = vmatprep.subr.mxu0 0.0
    %139 = vmatpush1.msra.mxu0 0.0
    %140 = vmatprep.subr.mxu0 0.0
    %141 = vmatpush1.msra.mxu0 0.0
    %142 = vmatprep.subr.mxu0 0.0
    %143 = vmatpush1.msra.mxu0 0.0
    %144 = vmatprep.subr.mxu0 0.0
    %145 = vmatpush1.msra.mxu0 0.0
    %146 = vmatprep.subr.mxu0 0.0
    %147 = vmatpush1.msra.mxu0 0.0
    %148 = vmatprep.subr.mxu0 0.0
    %149 = vmatpush1.msra.mxu0 0.0
    %150 = vmatprep.subr.mxu0 0.0
    %151 = vmatpush1.msra.mxu0 0.0
    %152 = vmatprep.subr.mxu0 0.0
    %153 = vmatpush1.msra.mxu0 0.0
    %154 = vmatprep.subr.mxu0 0.0
    %155 = vmatpush1.msra.mxu0 0.0
    %156 = vmatprep.subr.mxu0 0.0
    %157 = vmatpush1.msra.mxu0 0.0
    %158 = vmatprep.subr.mxu0 0.0
    %159 = vmatpush1.msra.mxu0 0.0
    %160 = vmatprep.subr.mxu0 0.0
    %161 = vmatpush1.msra.mxu0 0.0
    %162 = vmatprep.subr.mxu0 0.0
    %163 = vmatpush1.msra.mxu0 0.0
    %164 = vmatprep.subr.mxu0 0.0
    %165 = vmatpush1.msra.mxu0 0.0
    %166 = vmatprep.subr.mxu0 0.0
    %167 = vmatpush1.msra.mxu0 0.0
    %168 = vmatprep.subr.mxu0 0.0
    %169 = vmatpush1.msra.mxu0 0.0
    %170 = vmatprep.subr.mxu0 0.0
    %171 = vmatpush1.msra.mxu0 0.0
    %172 = vmatprep.subr.mxu0 0.0
    %173 = vmatpush1.msra.mxu0 0.0
    %174 = vmatprep.subr.mxu0 0.0
    %175 = vmatpush1.msra.mxu0 0.0
    %176 = vmatprep.subr.mxu0 0.0
    %177 = vmatpush1.msra.mxu0 0.0
    %178 = vmatprep.subr.mxu0 0.0
    %179 = vmatpush1.msra.mxu0 0.0
    %180 = vmatprep.mubr.f32.mxu0 0.0
    %v181 = vand.u32 %v106, 4294901760
    %v182 = vsub.f32 %v106, %v181
    %v183 = vand.u32 %v182, 4294901760
    %v184 = vsub.f32 %v182, %v183
    %v185 = vand.u32 %v184, 4294901760
    %186 = vmatmul.mubr.f32.gmra.mrb[0].mxu0 %v185
    %v187 = vpop.f32.mrb[0].mxu0
    %v188 = vadd.f32 0.0, %v187
    %v189 = vpop.f32.mrb[0].mxu0
    %v190 = vadd.f32 0.0, %v189
    %191 = vdwg.mxu0
    %v192 = vand.u32 %v97, 4294901760
    %v193 = vsub.f32 %v97, %v192
    %v194 = vand.u32 %v193, 4294901760
    %v195 = vsub.f32 %v193, %v194
    %v196 = vand.u32 %v195, 4294901760
    %197 = vmatprep.subr.mxu0 %v196
    %v198 = vand.u32 %v96, 4294901760
    %v199 = vsub.f32 %v96, %v198
    %v200 = vand.u32 %v199, 4294901760
    %v201 = vsub.f32 %v199, %v200
    %v202 = vand.u32 %v201, 4294901760
    %203 = vmatpush1.msra.mxu0 %v202
    %v204 = vand.u32 %v99, 4294901760
    %v205 = vsub.f32 %v99, %v204
    %v206 = vand.u32 %v205, 4294901760
    %v207 = vsub.f32 %v205, %v206
    %v208 = vand.u32 %v207, 4294901760
    %209 = vmatprep.subr.mxu0 %v208
    %v210 = vand.u32 %v98, 4294901760
    %v211 = vsub.f32 %v98, %v210
    %v212 = vand.u32 %v211, 4294901760
    %v213 = vsub.f32 %v211, %v212
    %v214 = vand.u32 %v213, 4294901760
    %215 = vmatpush1.msra.mxu0 %v214
    %v216 = vand.u32 %v101, 4294901760
    %v217 = vsub.f32 %v101, %v216
    %v218 = vand.u32 %v217, 4294901760
    %v219 = vsub.f32 %v217, %v218
    %v220 = vand.u32 %v219, 4294901760
    %221 = vmatprep.subr.mxu0 %v220
    %v222 = vand.u32 %v100, 4294901760
    %v223 = vsub.f32 %v100, %v222
    %v224 = vand.u32 %v223, 4294901760
    %v225 = vsub.f32 %v223, %v224
    %v226 = vand.u32 %v225, 4294901760
    %227 = vmatpush1.msra.mxu0 %v226
    %v228 = vand.u32 %v103, 4294901760
    %v229 = vsub.f32 %v103, %v228
    %v230 = vand.u32 %v229, 4294901760
    %v231 = vsub.f32 %v229, %v230
    %v232 = vand.u32 %v231, 4294901760
    %233 = vmatprep.subr.mxu0 %v232
    %v234 = vand.u32 %v102, 4294901760
    %v235 = vsub.f32 %v102, %v234
    %v236 = vand.u32 %v235, 4294901760
    %v237 = vsub.f32 %v235, %v236
    %v238 = vand.u32 %v237, 4294901760
    %239 = vmatpush1.msra.mxu0 %v238
    %240 = vmatprep.subr.mxu0 0.0
    %241 = vmatpush1.msra.mxu0 0.0
    %242 = vmatprep.subr.mxu0 0.0
    %243 = vmatpush1.msra.mxu0 0.0
    %244 = vmatprep.subr.mxu0 0.0
    %245 = vmatpush1.msra.mxu0 0.0
    %246 = vmatprep.subr.mxu0 0.0
    %247 = vmatpush1.msra.mxu0 0.0
    %248 = vmatprep.subr.mxu0 0.0
    %249 = vmatpush1.msra.mxu0 0.0
    %250 = vmatprep.subr.mxu0 0.0
    %251 = vmatpush1.msra.mxu0 0.0
    %252 = vmatprep.subr.mxu0 0.0
    %253 = vmatpush1.msra.mxu0 0.0
    %254 = vmatprep.subr.mxu0 0.0
    %255 = vmatpush1.msra.mxu0 0.0
    %256 = vmatprep.subr.mxu0 0.0
    %257 = vmatpush1.msra.mxu0 0.0
    %258 = vmatprep.subr.mxu0 0.0
    %259 = vmatpush1.msra.mxu0 0.0
    %260 = vmatprep.subr.mxu0 0.0
    %261 = vmatpush1.msra.mxu0 0.0
    %262 = vmatprep.subr.mxu0 0.0
    %263 = vmatpush1.msra.mxu0 0.0
    %264 = vmatprep.subr.mxu0 0.0
    %265 = vmatpush1.msra.mxu0 0.0
    %266 = vmatprep.subr.mxu0 0.0
    %267 = vmatpush1.msra.mxu0 0.0
    %268 = vmatprep.subr.mxu0 0.0
    %269 = vmatpush1.msra.mxu0 0.0
    %270 = vmatprep.subr.mxu0 0.0
    %271 = vmatpush1.msra.mxu0 0.0
    %272 = vmatprep.subr.mxu0 0.0
    %273 = vmatpush1.msra.mxu0 0.0
    %274 = vmatprep.subr.mxu0 0.0
    %275 = vmatpush1.msra.mxu0 0.0
    %276 = vmatprep.subr.mxu0 0.0
    %277 = vmatpush1.msra.mxu0 0.0
    %278 = vmatprep.subr.mxu0 0.0
    %279 = vmatpush1.msra.mxu0 0.0
    %280 = vmatprep.subr.mxu0 0.0
    %281 = vmatpush1.msra.mxu0 0.0
    %282 = vmatprep.subr.mxu0 0.0
    %283 = vmatpush1.msra.mxu0 0.0
    %284 = vmatprep.subr.mxu0 0.0
    %285 = vmatpush1.msra.mxu0 0.0
    %286 = vmatprep.subr.mxu0 0.0
    %287 = vmatpush1.msra.mxu0 0.0
    %288 = vmatprep.subr.mxu0 0.0
    %289 = vmatpush1.msra.mxu0 0.0
    %290 = vmatprep.subr.mxu0 0.0
    %291 = vmatpush1.msra.mxu0 0.0
    %292 = vmatprep.subr.mxu0 0.0
    %293 = vmatpush1.msra.mxu0 0.0
    %294 = vmatprep.subr.mxu0 0.0
    %295 = vmatpush1.msra.mxu0 0.0
    %296 = vmatprep.mubr.f32.mxu0 0.0
    %v297 = vand.u32 %v106, 4294901760
    %298 = vmatmul.mubr.f32.gmra.mrb[0].mxu0 %v297
    %v299 = vpop.f32.mrb[0].mxu0
    %v300 = vadd.f32 %v188, %v299
    %v301 = vpop.f32.mrb[0].mxu0
    %v302 = vadd.f32 %v190, %v301
    %303 = vdwg.mxu0
    %v304 = vand.u32 %v97, 4294901760
    %v305 = vsub.f32 %v97, %v304
    %306 = vmatprep.subr.mxu0 %v305
    %v307 = vand.u32 %v96, 4294901760
    %v308 = vsub.f32 %v96, %v307
    %309 = vmatpush1.msra.mxu0 %v308
    %v310 = vand.u32 %v99, 4294901760
    %v311 = vsub.f32 %v99, %v310
    %312 = vmatprep.subr.mxu0 %v311
    %v313 = vand.u32 %v98, 4294901760
    %v314 = vsub.f32 %v98, %v313
    %315 = vmatpush1.msra.mxu0 %v314
    %v316 = vand.u32 %v101, 4294901760
    %v317 = vsub.f32 %v101, %v316
    %318 = vmatprep.subr.mxu0 %v317
    %v319 = vand.u32 %v100, 4294901760
    %v320 = vsub.f32 %v100, %v319
    %321 = vmatpush1.msra.mxu0 %v320
    %v322 = vand.u32 %v103, 4294901760
    %v323 = vsub.f32 %v103, %v322
    %324 = vmatprep.subr.mxu0 %v323
    %v325 = vand.u32 %v102, 4294901760
    %v326 = vsub.f32 %v102, %v325
    %327 = vmatpush1.msra.mxu0 %v326
    %328 = vmatprep.subr.mxu0 0.0
    %329 = vmatpush1.msra.mxu0 0.0
    %330 = vmatprep.subr.mxu0 0.0
    %331 = vmatpush1.msra.mxu0 0.0
    %332 = vmatprep.subr.mxu0 0.0
    %333 = vmatpush1.msra.mxu0 0.0
    %334 = vmatprep.subr.mxu0 0.0
    %335 = vmatpush1.msra.mxu0 0.0
    %336 = vmatprep.subr.mxu0 0.0
    %337 = vmatpush1.msra.mxu0 0.0
    %338 = vmatprep.subr.mxu0 0.0
    %339 = vmatpush1.msra.mxu0 0.0
    %340 = vmatprep.subr.mxu0 0.0
    %341 = vmatpush1.msra.mxu0 0.0
    %342 = vmatprep.subr.mxu0 0.0
    %343 = vmatpush1.msra.mxu0 0.0
    %344 = vmatprep.subr.mxu0 0.0
    %345 = vmatpush1.msra.mxu0 0.0
    %346 = vmatprep.subr.mxu0 0.0
    %347 = vmatpush1.msra.mxu0 0.0
    %348 = vmatprep.subr.mxu0 0.0
    %349 = vmatpush1.msra.mxu0 0.0
    %350 = vmatprep.subr.mxu0 0.0
    %351 = vmatpush1.msra.mxu0 0.0
    %352 = vmatprep.subr.mxu0 0.0
    %353 = vmatpush1.msra.mxu0 0.0
    %354 = vmatprep.subr.mxu0 0.0
    %355 = vmatpush1.msra.mxu0 0.0
    %356 = vmatprep.subr.mxu0 0.0
    %357 = vmatpush1.msra.mxu0 0.0
    %358 = vmatprep.subr.mxu0 0.0
    %359 = vmatpush1.msra.mxu0 0.0
    %360 = vmatprep.subr.mxu0 0.0
    %361 = vmatpush1.msra.mxu0 0.0
    %362 = vmatprep.subr.mxu0 0.0
    %363 = vmatpush1.msra.mxu0 0.0
    %364 = vmatprep.subr.mxu0 0.0
    %365 = vmatpush1.msra.mxu0 0.0
    %366 = vmatprep.subr.mxu0 0.0
    %367 = vmatpush1.msra.mxu0 0.0
    %368 = vmatprep.subr.mxu0 0.0
    %369 = vmatpush1.msra.mxu0 0.0
    %370 = vmatprep.subr.mxu0 0.0
    %371 = vmatpush1.msra.mxu0 0.0
    %372 = vmatprep.subr.mxu0 0.0
    %373 = vmatpush1.msra.mxu0 0.0
    %374 = vmatprep.subr.mxu0 0.0
    %375 = vmatpush1.msra.mxu0 0.0
    %376 = vmatprep.subr.mxu0 0.0
    %377 = vmatpush1.msra.mxu0 0.0
    %378 = vmatprep.subr.mxu0 0.0
    %379 = vmatpush1.msra.mxu0 0.0
    %380 = vmatprep.subr.mxu0 0.0
    %381 = vmatpush1.msra.mxu0 0.0
    %382 = vmatprep.subr.mxu0 0.0
    %383 = vmatpush1.msra.mxu0 0.0
    %384 = vmatprep.mubr.f32.mxu0 0.0
    %v385 = vand.u32 %v106, 4294901760
    %v386 = vsub.f32 %v106, %v385
    %387 = vmatmul.mubr.f32.gmra.mrb[0].mxu0 %v386
    %v388 = vpop.f32.mrb[0].mxu0
    %v389 = vadd.f32 %v300, %v388
    %v390 = vpop.f32.mrb[0].mxu0
    %v391 = vadd.f32 %v302, %v390
    %392 = vdwg.mxu0
    %v393 = vand.u32 %v97, 4294901760
    %394 = vmatprep.subr.mxu0 %v393
    %v395 = vand.u32 %v96, 4294901760
    %396 = vmatpush1.msra.mxu0 %v395
    %v397 = vand.u32 %v99, 4294901760
    %398 = vmatprep.subr.mxu0 %v397
    %v399 = vand.u32 %v98, 4294901760
    %400 = vmatpush1.msra.mxu0 %v399
    %v401 = vand.u32 %v101, 4294901760
    %402 = vmatprep.subr.mxu0 %v401
    %v403 = vand.u32 %v100, 4294901760
    %404 = vmatpush1.msra.mxu0 %v403
    %v405 = vand.u32 %v103, 4294901760
    %406 = vmatprep.subr.mxu0 %v405
    %v407 = vand.u32 %v102, 4294901760
    %408 = vmatpush1.msra.mxu0 %v407
    %409 = vmatprep.subr.mxu0 0.0
    %410 = vmatpush1.msra.mxu0 0.0
    %411 = vmatprep.subr.mxu0 0.0
    %412 = vmatpush1.msra.mxu0 0.0
    %413 = vmatprep.subr.mxu0 0.0
    %414 = vmatpush1.msra.mxu0 0.0
    %415 = vmatprep.subr.mxu0 0.0
    %416 = vmatpush1.msra.mxu0 0.0
    %417 = vmatprep.subr.mxu0 0.0
    %418 = vmatpush1.msra.mxu0 0.0
    %419 = vmatprep.subr.mxu0 0.0
    %420 = vmatpush1.msra.mxu0 0.0
    %421 = vmatprep.subr.mxu0 0.0
    %422 = vmatpush1.msra.mxu0 0.0
    %423 = vmatprep.subr.mxu0 0.0
    %424 = vmatpush1.msra.mxu0 0.0
    %425 = vmatprep.subr.mxu0 0.0
    %426 = vmatpush1.msra.mxu0 0.0
    %427 = vmatprep.subr.mxu0 0.0
    %428 = vmatpush1.msra.mxu0 0.0
    %429 = vmatprep.subr.mxu0 0.0
    %430 = vmatpush1.msra.mxu0 0.0
    %431 = vmatprep.subr.mxu0 0.0
    %432 = vmatpush1.msra.mxu0 0.0
    %433 = vmatprep.subr.mxu0 0.0
    %434 = vmatpush1.msra.mxu0 0.0
    %435 = vmatprep.subr.mxu0 0.0
    %436 = vmatpush1.msra.mxu0 0.0
    %437 = vmatprep.subr.mxu0 0.0
    %438 = vmatpush1.msra.mxu0 0.0
    %439 = vmatprep.subr.mxu0 0.0
    %440 = vmatpush1.msra.mxu0 0.0
    %441 = vmatprep.subr.mxu0 0.0
    %442 = vmatpush1.msra.mxu0 0.0
    %443 = vmatprep.subr.mxu0 0.0
    %444 = vmatpush1.msra.mxu0 0.0
    %445 = vmatprep.subr.mxu0 0.0
    %446 = vmatpush1.msra.mxu0 0.0
    %447 = vmatprep.subr.mxu0 0.0
    %448 = vmatpush1.msra.mxu0 0.0
    %449 = vmatprep.subr.mxu0 0.0
    %450 = vmatpush1.msra.mxu0 0.0
    %451 = vmatprep.subr.mxu0 0.0
    %452 = vmatpush1.msra.mxu0 0.0
    %453 = vmatprep.subr.mxu0 0.0
    %454 = vmatpush1.msra.mxu0 0.0
    %455 = vmatprep.subr.mxu0 0.0
    %456 = vmatpush1.msra.mxu0 0.0
    %457 = vmatprep.subr.mxu0 0.0
    %458 = vmatpush1.msra.mxu0 0.0
    %459 = vmatprep.subr.mxu0 0.0
    %460 = vmatpush1.msra.mxu0 0.0
    %461 = vmatprep.subr.mxu0 0.0
    %462 = vmatpush1.msra.mxu0 0.0
    %463 = vmatprep.subr.mxu0 0.0
    %464 = vmatpush1.msra.mxu0 0.0
    %465 = vmatprep.mubr.f32.mxu0 0.0
    %v466 = vand.u32 %v106, 4294901760
    %v467 = vsub.f32 %v106, %v466
    %v468 = vand.u32 %v467, 4294901760
    %469 = vmatmul.mubr.f32.gmra.mrb[0].mxu0 %v468
    %v470 = vpop.f32.mrb[0].mxu0
    %v471 = vadd.f32 %v389, %v470
    %v472 = vpop.f32.mrb[0].mxu0
    %v473 = vadd.f32 %v391, %v472
    %474 = vdwg.mxu0
    %v475 = vand.u32 %v97, 4294901760
    %v476 = vsub.f32 %v97, %v475
    %v477 = vand.u32 %v476, 4294901760
    %478 = vmatprep.subr.mxu0 %v477
    %v479 = vand.u32 %v96, 4294901760
    %v480 = vsub.f32 %v96, %v479
    %v481 = vand.u32 %v480, 4294901760
    %482 = vmatpush1.msra.mxu0 %v481
    %v483 = vand.u32 %v99, 4294901760
    %v484 = vsub.f32 %v99, %v483
    %v485 = vand.u32 %v484, 4294901760
    %486 = vmatprep.subr.mxu0 %v485
    %v487 = vand.u32 %v98, 4294901760
    %v488 = vsub.f32 %v98, %v487
    %v489 = vand.u32 %v488, 4294901760
    %490 = vmatpush1.msra.mxu0 %v489
    %v491 = vand.u32 %v101, 4294901760
    %v492 = vsub.f32 %v101, %v491
    %v493 = vand.u32 %v492, 4294901760
    %494 = vmatprep.subr.mxu0 %v493
    %v495 = vand.u32 %v100, 4294901760
    %v496 = vsub.f32 %v100, %v495
    %v497 = vand.u32 %v496, 4294901760
    %498 = vmatpush1.msra.mxu0 %v497
    %v499 = vand.u32 %v103, 4294901760
    %v500 = vsub.f32 %v103, %v499
    %v501 = vand.u32 %v500, 4294901760
    %502 = vmatprep.subr.mxu0 %v501
    %v503 = vand.u32 %v102, 4294901760
    %v504 = vsub.f32 %v102, %v503
    %v505 = vand.u32 %v504, 4294901760
    %506 = vmatpush1.msra.mxu0 %v505
    %507 = vmatprep.subr.mxu0 0.0
    %508 = vmatpush1.msra.mxu0 0.0
    %509 = vmatprep.subr.mxu0 0.0
    %510 = vmatpush1.msra.mxu0 0.0
    %511 = vmatprep.subr.mxu0 0.0
    %512 = vmatpush1.msra.mxu0 0.0
    %513 = vmatprep.subr.mxu0 0.0
    %514 = vmatpush1.msra.mxu0 0.0
    %515 = vmatprep.subr.mxu0 0.0
    %516 = vmatpush1.msra.mxu0 0.0
    %517 = vmatprep.subr.mxu0 0.0
    %518 = vmatpush1.msra.mxu0 0.0
    %519 = vmatprep.subr.mxu0 0.0
    %520 = vmatpush1.msra.mxu0 0.0
    %521 = vmatprep.subr.mxu0 0.0
    %522 = vmatpush1.msra.mxu0 0.0
    %523 = vmatprep.subr.mxu0 0.0
    %524 = vmatpush1.msra.mxu0 0.0
    %525 = vmatprep.subr.mxu0 0.0
    %526 = vmatpush1.msra.mxu0 0.0
    %527 = vmatprep.subr.mxu0 0.0
    %528 = vmatpush1.msra.mxu0 0.0
    %529 = vmatprep.subr.mxu0 0.0
    %530 = vmatpush1.msra.mxu0 0.0
    %531 = vmatprep.subr.mxu0 0.0
    %532 = vmatpush1.msra.mxu0 0.0
    %533 = vmatprep.subr.mxu0 0.0
    %534 = vmatpush1.msra.mxu0 0.0
    %535 = vmatprep.subr.mxu0 0.0
    %536 = vmatpush1.msra.mxu0 0.0
    %537 = vmatprep.subr.mxu0 0.0
    %538 = vmatpush1.msra.mxu0 0.0
    %539 = vmatprep.subr.mxu0 0.0
    %540 = vmatpush1.msra.mxu0 0.0
    %541 = vmatprep.subr.mxu0 0.0
    %542 = vmatpush1.msra.mxu0 0.0
    %543 = vmatprep.subr.mxu0 0.0
    %544 = vmatpush1.msra.mxu0 0.0
    %545 = vmatprep.subr.mxu0 0.0
    %546 = vmatpush1.msra.mxu0 0.0
    %547 = vmatprep.subr.mxu0 0.0
    %548 = vmatpush1.msra.mxu0 0.0
    %549 = vmatprep.subr.mxu0 0.0
    %550 = vmatpush1.msra.mxu0 0.0
    %551 = vmatprep.subr.mxu0 0.0
    %552 = vmatpush1.msra.mxu0 0.0
    %553 = vmatprep.subr.mxu0 0.0
    %554 = vmatpush1.msra.mxu0 0.0
    %555 = vmatprep.subr.mxu0 0.0
    %556 = vmatpush1.msra.mxu0 0.0
    %557 = vmatprep.subr.mxu0 0.0
    %558 = vmatpush1.msra.mxu0 0.0
    %559 = vmatprep.subr.mxu0 0.0
    %560 = vmatpush1.msra.mxu0 0.0
    %561 = vmatprep.subr.mxu0 0.0
    %562 = vmatpush1.msra.mxu0 0.0
    %563 = vmatprep.mubr.f32.mxu0 0.0
    %v564 = vand.u32 %v106, 4294901760
    %565 = vmatmul.mubr.f32.gmra.mrb[0].mxu0 %v564
    %v566 = vpop.f32.mrb[0].mxu0
    %v567 = vadd.f32 %v471, %v566
    %v568 = vpop.f32.mrb[0].mxu0
    %v569 = vadd.f32 %v473, %v568
    %570 = vdwg.mxu0
    %v571 = vand.u32 %v97, 4294901760
    %572 = vmatprep.subr.mxu0 %v571
    %v573 = vand.u32 %v96, 4294901760
    %574 = vmatpush1.msra.mxu0 %v573
    %v575 = vand.u32 %v99, 4294901760
    %576 = vmatprep.subr.mxu0 %v575
    %v577 = vand.u32 %v98, 4294901760
    %578 = vmatpush1.msra.mxu0 %v577
    %v579 = vand.u32 %v101, 4294901760
    %580 = vmatprep.subr.mxu0 %v579
    %v581 = vand.u32 %v100, 4294901760
    %582 = vmatpush1.msra.mxu0 %v581
    %v583 = vand.u32 %v103, 4294901760
    %584 = vmatprep.subr.mxu0 %v583
    %v585 = vand.u32 %v102, 4294901760
    %586 = vmatpush1.msra.mxu0 %v585
    %587 = vmatprep.subr.mxu0 0.0
    %588 = vmatpush1.msra.mxu0 0.0
    %589 = vmatprep.subr.mxu0 0.0
    %590 = vmatpush1.msra.mxu0 0.0
    %591 = vmatprep.subr.mxu0 0.0
    %592 = vmatpush1.msra.mxu0 0.0
    %593 = vmatprep.subr.mxu0 0.0
    %594 = vmatpush1.msra.mxu0 0.0
    %595 = vmatprep.subr.mxu0 0.0
    %596 = vmatpush1.msra.mxu0 0.0
    %597 = vmatprep.subr.mxu0 0.0
    %598 = vmatpush1.msra.mxu0 0.0
    %599 = vmatprep.subr.mxu0 0.0
    %600 = vmatpush1.msra.mxu0 0.0
    %601 = vmatprep.subr.mxu0 0.0
    %602 = vmatpush1.msra.mxu0 0.0
    %603 = vmatprep.subr.mxu0 0.0
    %604 = vmatpush1.msra.mxu0 0.0
    %605 = vmatprep.subr.mxu0 0.0
    %606 = vmatpush1.msra.mxu0 0.0
    %607 = vmatprep.subr.mxu0 0.0
    %608 = vmatpush1.msra.mxu0 0.0
    %609 = vmatprep.subr.mxu0 0.0
    %610 = vmatpush1.msra.mxu0 0.0
    %611 = vmatprep.subr.mxu0 0.0
    %612 = vmatpush1.msra.mxu0 0.0
    %613 = vmatprep.subr.mxu0 0.0
    %614 = vmatpush1.msra.mxu0 0.0
    %615 = vmatprep.subr.mxu0 0.0
    %616 = vmatpush1.msra.mxu0 0.0
    %617 = vmatprep.subr.mxu0 0.0
    %618 = vmatpush1.msra.mxu0 0.0
    %619 = vmatprep.subr.mxu0 0.0
    %620 = vmatpush1.msra.mxu0 0.0
    %621 = vmatprep.subr.mxu0 0.0
    %622 = vmatpush1.msra.mxu0 0.0
    %623 = vmatprep.subr.mxu0 0.0
    %624 = vmatpush1.msra.mxu0 0.0
    %625 = vmatprep.subr.mxu0 0.0
    %626 = vmatpush1.msra.mxu0 0.0
    %627 = vmatprep.subr.mxu0 0.0
    %628 = vmatpush1.msra.mxu0 0.0
    %629 = vmatprep.subr.mxu0 0.0
    %630 = vmatpush1.msra.mxu0 0.0
    %631 = vmatprep.subr.mxu0 0.0
    %632 = vmatpush1.msra.mxu0 0.0
    %633 = vmatprep.subr.mxu0 0.0
    %634 = vmatpush1.msra.mxu0 0.0
    %635 = vmatprep.subr.mxu0 0.0
    %636 = vmatpush1.msra.mxu0 0.0
    %637 = vmatprep.subr.mxu0 0.0
    %638 = vmatpush1.msra.mxu0 0.0
    %639 = vmatprep.subr.mxu0 0.0
    %640 = vmatpush1.msra.mxu0 0.0
    %641 = vmatprep.subr.mxu0 0.0
    %642 = vmatpush1.msra.mxu0 0.0
    %643 = vmatprep.mubr.f32.mxu0 0.0
    %v644 = vand.u32 %v106, 4294901760
    %645 = vmatmul.mubr.f32.gmra.mrb[0].mxu0 %v644
    %v646 = vpop.f32.mrb[0].mxu0
    %v647 = vadd.f32 %v567, %v646
    %v648 = vpop.f32.mrb[0].mxu0
    %v649 = vadd.f32 %v569, %v648
    %650 = vdwg.mxu0
    %v651 = vand.u32 %v64, 4294901760
    %652 = vmatprep.subr.mxu0 %v651
    %v653 = vand.u32 %v63, 4294901760
    %654 = vmatpush1.msra.mxu0 %v653
    %v655 = vand.u32 %v66, 4294901760
    %656 = vmatprep.subr.mxu0 %v655
    %v657 = vand.u32 %v65, 4294901760
    %658 = vmatpush1.msra.mxu0 %v657
    %v659 = vand.u32 %v68, 4294901760
    %660 = vmatprep.subr.mxu0 %v659
    %v661 = vand.u32 %v67, 4294901760
    %662 = vmatpush1.msra.mxu0 %v661
    %v663 = vand.u32 %v70, 4294901760
    %664 = vmatprep.subr.mxu0 %v663
    %v665 = vand.u32 %v69, 4294901760
    %666 = vmatpush1.msra.mxu0 %v665
    %v667 = vand.u32 %v72, 4294901760
    %668 = vmatprep.subr.mxu0 %v667
    %v669 = vand.u32 %v71, 4294901760
    %670 = vmatpush1.msra.mxu0 %v669
    %v671 = vand.u32 %v74, 4294901760
    %672 = vmatprep.subr.mxu0 %v671
    %v673 = vand.u32 %v73, 4294901760
    %674 = vmatpush1.msra.mxu0 %v673
    %v675 = vand.u32 %v76, 4294901760
    %676 = vmatprep.subr.mxu0 %v675
    %v677 = vand.u32 %v75, 4294901760
    %678 = vmatpush1.msra.mxu0 %v677
    %v679 = vand.u32 %v78, 4294901760
    %680 = vmatprep.subr.mxu0 %v679
    %v681 = vand.u32 %v77, 4294901760
    %682 = vmatpush1.msra.mxu0 %v681
    %v683 = vand.u32 %v80, 4294901760
    %684 = vmatprep.subr.mxu0 %v683
    %v685 = vand.u32 %v79, 4294901760
    %686 = vmatpush1.msra.mxu0 %v685
    %v687 = vand.u32 %v82, 4294901760
    %688 = vmatprep.subr.mxu0 %v687
    %v689 = vand.u32 %v81, 4294901760
    %690 = vmatpush1.msra.mxu0 %v689
    %v691 = vand.u32 %v84, 4294901760
    %692 = vmatprep.subr.mxu0 %v691
    %v693 = vand.u32 %v83, 4294901760
    %694 = vmatpush1.msra.mxu0 %v693
    %v695 = vand.u32 %v86, 4294901760
    %696 = vmatprep.subr.mxu0 %v695
    %v697 = vand.u32 %v85, 4294901760
    %698 = vmatpush1.msra.mxu0 %v697
    %v699 = vand.u32 %v88, 4294901760
    %700 = vmatprep.subr.mxu0 %v699
    %v701 = vand.u32 %v87, 4294901760
    %702 = vmatpush1.msra.mxu0 %v701
    %v703 = vand.u32 %v90, 4294901760
    %704 = vmatprep.subr.mxu0 %v703
    %v705 = vand.u32 %v89, 4294901760
    %706 = vmatpush1.msra.mxu0 %v705
    %v707 = vand.u32 %v92, 4294901760
    %708 = vmatprep.subr.mxu0 %v707
    %v709 = vand.u32 %v91, 4294901760
    %710 = vmatpush1.msra.mxu0 %v709
    %v711 = vand.u32 %v94, 4294901760
    %712 = vmatprep.subr.mxu0 %v711
    %v713 = vand.u32 %v93, 4294901760
    %714 = vmatpush1.msra.mxu0 %v713
    %715 = vmatprep.subr.mxu0 0.0
    %716 = vmatpush1.msra.mxu0 0.0
    %717 = vmatprep.subr.mxu0 0.0
    %718 = vmatpush1.msra.mxu0 0.0
    %719 = vmatprep.subr.mxu0 0.0
    %720 = vmatpush1.msra.mxu0 0.0
    %721 = vmatprep.subr.mxu0 0.0
    %722 = vmatpush1.msra.mxu0 0.0
    %723 = vmatprep.subr.mxu0 0.0
    %724 = vmatpush1.msra.mxu0 0.0
    %725 = vmatprep.subr.mxu0 0.0
    %726 = vmatpush1.msra.mxu0 0.0
    %727 = vmatprep.subr.mxu0 0.0
    %728 = vmatpush1.msra.mxu0 0.0
    %729 = vmatprep.subr.mxu0 0.0
    %730 = vmatpush1.msra.mxu0 0.0
    %731 = vmatprep.subr.mxu0 0.0
    %732 = vmatpush1.msra.mxu0 0.0
    %733 = vmatprep.subr.mxu0 0.0
    %734 = vmatpush1.msra.mxu0 0.0
    %735 = vmatprep.subr.mxu0 0.0
    %736 = vmatpush1.msra.mxu0 0.0
    %737 = vmatprep.subr.mxu0 0.0
    %738 = vmatpush1.msra.mxu0 0.0
    %739 = vmatprep.subr.mxu0 0.0
    %740 = vmatpush1.msra.mxu0 0.0
    %741 = vmatprep.subr.mxu0 0.0
    %742 = vmatpush1.msra.mxu0 0.0
    %743 = vmatprep.subr.mxu0 0.0
    %744 = vmatpush1.msra.mxu0 0.0
    %745 = vmatprep.subr.mxu0 0.0
    %746 = vmatpush1.msra.mxu0 0.0
    %747 = vmatprep.mubr.f32.mxu0 0.0
    %v748 = vand.u32 %v62, 4294901760
    %v749 = vsub.f32 %v62, %v748
    %v750 = vand.u32 %v749, 4294901760
    %v751 = vsub.f32 %v749, %v750
    %v752 = vand.u32 %v751, 4294901760
    %753 = vmatmul.mubr.f32.gmra.mrb[0].mxu0 %v752
    %v754 = vpop.f32.mrb[0].mxu0
    %v755 = vadd.f32 %v647, %v754
    %v756 = vpop.f32.mrb[0].mxu0
    %v757 = vadd.f32 %v649, %v756
    %758 = vdwg.mxu0
    %v759 = vand.u32 %v64, 4294901760
    %v760 = vsub.f32 %v64, %v759
    %v761 = vand.u32 %v760, 4294901760
    %v762 = vsub.f32 %v760, %v761
    %v763 = vand.u32 %v762, 4294901760
    %764 = vmatprep.subr.mxu0 %v763
    %v765 = vand.u32 %v63, 4294901760
    %v766 = vsub.f32 %v63, %v765
    %v767 = vand.u32 %v766, 4294901760
    %v768 = vsub.f32 %v766, %v767
    %v769 = vand.u32 %v768, 4294901760
    %770 = vmatpush1.msra.mxu0 %v769
    %v771 = vand.u32 %v66, 4294901760
    %v772 = vsub.f32 %v66, %v771
    %v773 = vand.u32 %v772, 4294901760
    %v774 = vsub.f32 %v772, %v773
    %v775 = vand.u32 %v774, 4294901760
    %776 = vmatprep.subr.mxu0 %v775
    %v777 = vand.u32 %v65, 4294901760
    %v778 = vsub.f32 %v65, %v777
    %v779 = vand.u32 %v778, 4294901760
    %v780 = vsub.f32 %v778, %v779
    %v781 = vand.u32 %v780, 4294901760
    %782 = vmatpush1.msra.mxu0 %v781
    %v783 = vand.u32 %v68, 4294901760
    %v784 = vsub.f32 %v68, %v783
    %v785 = vand.u32 %v784, 4294901760
    %v786 = vsub.f32 %v784, %v785
    %v787 = vand.u32 %v786, 4294901760
    %788 = vmatprep.subr.mxu0 %v787
    %v789 = vand.u32 %v67, 4294901760
    %v790 = vsub.f32 %v67, %v789
    %v791 = vand.u32 %v790, 4294901760
    %v792 = vsub.f32 %v790, %v791
    %v793 = vand.u32 %v792, 4294901760
    %794 = vmatpush1.msra.mxu0 %v793
    %v795 = vand.u32 %v70, 4294901760
    %v796 = vsub.f32 %v70, %v795
    %v797 = vand.u32 %v796, 4294901760
    %v798 = vsub.f32 %v796, %v797
    %v799 = vand.u32 %v798, 4294901760
    %800 = vmatprep.subr.mxu0 %v799
    %v801 = vand.u32 %v69, 4294901760
    %v802 = vsub.f32 %v69, %v801
    %v803 = vand.u32 %v802, 4294901760
    %v804 = vsub.f32 %v802, %v803
    %v805 = vand.u32 %v804, 4294901760
    %806 = vmatpush1.msra.mxu0 %v805
    %v807 = vand.u32 %v72, 4294901760
    %v808 = vsub.f32 %v72, %v807
    %v809 = vand.u32 %v808, 4294901760
    %v810 = vsub.f32 %v808, %v809
    %v811 = vand.u32 %v810, 4294901760
    %812 = vmatprep.subr.mxu0 %v811
    %v813 = vand.u32 %v71, 4294901760
    %v814 = vsub.f32 %v71, %v813
    %v815 = vand.u32 %v814, 4294901760
    %v816 = vsub.f32 %v814, %v815
    %v817 = vand.u32 %v816, 4294901760
    %818 = vmatpush1.msra.mxu0 %v817
    %v819 = vand.u32 %v74, 4294901760
    %v820 = vsub.f32 %v74, %v819
    %v821 = vand.u32 %v820, 4294901760
    %v822 = vsub.f32 %v820, %v821
    %v823 = vand.u32 %v822, 4294901760
    %824 = vmatprep.subr.mxu0 %v823
    %v825 = vand.u32 %v73, 4294901760
    %v826 = vsub.f32 %v73, %v825
    %v827 = vand.u32 %v826, 4294901760
    %v828 = vsub.f32 %v826, %v827
    %v829 = vand.u32 %v828, 4294901760
    %830 = vmatpush1.msra.mxu0 %v829
    %v831 = vand.u32 %v76, 4294901760
    %v832 = vsub.f32 %v76, %v831
    %v833 = vand.u32 %v832, 4294901760
    %v834 = vsub.f32 %v832, %v833
    %v835 = vand.u32 %v834, 4294901760
    %836 = vmatprep.subr.mxu0 %v835
    %v837 = vand.u32 %v75, 4294901760
    %v838 = vsub.f32 %v75, %v837
    %v839 = vand.u32 %v838, 4294901760
    %v840 = vsub.f32 %v838, %v839
    %v841 = vand.u32 %v840, 4294901760
    %842 = vmatpush1.msra.mxu0 %v841
    %v843 = vand.u32 %v78, 4294901760
    %v844 = vsub.f32 %v78, %v843
    %v845 = vand.u32 %v844, 4294901760
    %v846 = vsub.f32 %v844, %v845
    %v847 = vand.u32 %v846, 4294901760
    %848 = vmatprep.subr.mxu0 %v847
    %v849 = vand.u32 %v77, 4294901760
    %v850 = vsub.f32 %v77, %v849
    %v851 = vand.u32 %v850, 4294901760
    %v852 = vsub.f32 %v850, %v851
    %v853 = vand.u32 %v852, 4294901760
    %854 = vmatpush1.msra.mxu0 %v853
    %v855 = vand.u32 %v80, 4294901760
    %v856 = vsub.f32 %v80, %v855
    %v857 = vand.u32 %v856, 4294901760
    %v858 = vsub.f32 %v856, %v857
    %v859 = vand.u32 %v858, 4294901760
    %860 = vmatprep.subr.mxu0 %v859
    %v861 = vand.u32 %v79, 4294901760
    %v862 = vsub.f32 %v79, %v861
    %v863 = vand.u32 %v862, 4294901760
    %v864 = vsub.f32 %v862, %v863
    %v865 = vand.u32 %v864, 4294901760
    %866 = vmatpush1.msra.mxu0 %v865
    %v867 = vand.u32 %v82, 4294901760
    %v868 = vsub.f32 %v82, %v867
    %v869 = vand.u32 %v868, 4294901760
    %v870 = vsub.f32 %v868, %v869
    %v871 = vand.u32 %v870, 4294901760
    %872 = vmatprep.subr.mxu0 %v871
    %v873 = vand.u32 %v81, 4294901760
    %v874 = vsub.f32 %v81, %v873
    %v875 = vand.u32 %v874, 4294901760
    %v876 = vsub.f32 %v874, %v875
    %v877 = vand.u32 %v876, 4294901760
    %878 = vmatpush1.msra.mxu0 %v877
    %v879 = vand.u32 %v84, 4294901760
    %v880 = vsub.f32 %v84, %v879
    %v881 = vand.u32 %v880, 4294901760
    %v882 = vsub.f32 %v880, %v881
    %v883 = vand.u32 %v882, 4294901760
    %884 = vmatprep.subr.mxu0 %v883
    %v885 = vand.u32 %v83, 4294901760
    %v886 = vsub.f32 %v83, %v885
    %v887 = vand.u32 %v886, 4294901760
    %v888 = vsub.f32 %v886, %v887
    %v889 = vand.u32 %v888, 4294901760
    %890 = vmatpush1.msra.mxu0 %v889
    %v891 = vand.u32 %v86, 4294901760
    %v892 = vsub.f32 %v86, %v891
    %v893 = vand.u32 %v892, 4294901760
    %v894 = vsub.f32 %v892, %v893
    %v895 = vand.u32 %v894, 4294901760
    %896 = vmatprep.subr.mxu0 %v895
    %v897 = vand.u32 %v85, 4294901760
    %v898 = vsub.f32 %v85, %v897
    %v899 = vand.u32 %v898, 4294901760
    %v900 = vsub.f32 %v898, %v899
    %v901 = vand.u32 %v900, 4294901760
    %902 = vmatpush1.msra.mxu0 %v901
    %v903 = vand.u32 %v88, 4294901760
    %v904 = vsub.f32 %v88, %v903
    %v905 = vand.u32 %v904, 4294901760
    %v906 = vsub.f32 %v904, %v905
    %v907 = vand.u32 %v906, 4294901760
    %908 = vmatprep.subr.mxu0 %v907
    %v909 = vand.u32 %v87, 4294901760
    %v910 = vsub.f32 %v87, %v909
    %v911 = vand.u32 %v910, 4294901760
    %v912 = vsub.f32 %v910, %v911
    %v913 = vand.u32 %v912, 4294901760
    %914 = vmatpush1.msra.mxu0 %v913
    %v915 = vand.u32 %v90, 4294901760
    %v916 = vsub.f32 %v90, %v915
    %v917 = vand.u32 %v916, 4294901760
    %v918 = vsub.f32 %v916, %v917
    %v919 = vand.u32 %v918, 4294901760
    %920 = vmatprep.subr.mxu0 %v919
    %v921 = vand.u32 %v89, 4294901760
    %v922 = vsub.f32 %v89, %v921
    %v923 = vand.u32 %v922, 4294901760
    %v924 = vsub.f32 %v922, %v923
    %v925 = vand.u32 %v924, 4294901760
    %926 = vmatpush1.msra.mxu0 %v925
    %v927 = vand.u32 %v92, 4294901760
    %v928 = vsub.f32 %v92, %v927
    %v929 = vand.u32 %v928, 4294901760
    %v930 = vsub.f32 %v928, %v929
    %v931 = vand.u32 %v930, 4294901760
    %932 = vmatprep.subr.mxu0 %v931
    %v933 = vand.u32 %v91, 4294901760
    %v934 = vsub.f32 %v91, %v933
    %v935 = vand.u32 %v934, 4294901760
    %v936 = vsub.f32 %v934, %v935
    %v937 = vand.u32 %v936, 4294901760
    %938 = vmatpush1.msra.mxu0 %v937
    %v939 = vand.u32 %v94, 4294901760
    %v940 = vsub.f32 %v94, %v939
    %v941 = vand.u32 %v940, 4294901760
    %v942 = vsub.f32 %v940, %v941
    %v943 = vand.u32 %v942, 4294901760
    %944 = vmatprep.subr.mxu0 %v943
    %v945 = vand.u32 %v93, 4294901760
    %v946 = vsub.f32 %v93, %v945
    %v947 = vand.u32 %v946, 4294901760
    %v948 = vsub.f32 %v946, %v947
    %v949 = vand.u32 %v948, 4294901760
    %950 = vmatpush1.msra.mxu0 %v949
    %951 = vmatprep.subr.mxu0 0.0
    %952 = vmatpush1.msra.mxu0 0.0
    %953 = vmatprep.subr.mxu0 0.0
    %954 = vmatpush1.msra.mxu0 0.0
    %955 = vmatprep.subr.mxu0 0.0
    %956 = vmatpush1.msra.mxu0 0.0
    %957 = vmatprep.subr.mxu0 0.0
    %958 = vmatpush1.msra.mxu0 0.0
    %959 = vmatprep.subr.mxu0 0.0
    %960 = vmatpush1.msra.mxu0 0.0
    %961 = vmatprep.subr.mxu0 0.0
    %962 = vmatpush1.msra.mxu0 0.0
    %963 = vmatprep.subr.mxu0 0.0
    %964 = vmatpush1.msra.mxu0 0.0
    %965 = vmatprep.subr.mxu0 0.0
    %966 = vmatpush1.msra.mxu0 0.0
    %967 = vmatprep.subr.mxu0 0.0
    %968 = vmatpush1.msra.mxu0 0.0
    %969 = vmatprep.subr.mxu0 0.0
    %970 = vmatpush1.msra.mxu0 0.0
    %971 = vmatprep.subr.mxu0 0.0
    %972 = vmatpush1.msra.mxu0 0.0
    %973 = vmatprep.subr.mxu0 0.0
    %974 = vmatpush1.msra.mxu0 0.0
    %975 = vmatprep.subr.mxu0 0.0
    %976 = vmatpush1.msra.mxu0 0.0
    %977 = vmatprep.subr.mxu0 0.0
    %978 = vmatpush1.msra.mxu0 0.0
    %979 = vmatprep.subr.mxu0 0.0
    %980 = vmatpush1.msra.mxu0 0.0
    %981 = vmatprep.subr.mxu0 0.0
    %982 = vmatpush1.msra.mxu0 0.0
    %983 = vmatprep.mubr.f32.mxu0 0.0
    %v984 = vand.u32 %v62, 4294901760
    %985 = vmatmul.mubr.f32.gmra.mrb[0].mxu0 %v984
    %v986 = vpop.f32.mrb[0].mxu0
    %v987 = vadd.f32 %v755, %v986
    %v988 = vpop.f32.mrb[0].mxu0
    %v989 = vadd.f32 %v757, %v988
    %990 = vdwg.mxu0
    %v991 = vand.u32 %v64, 4294901760
    %v992 = vsub.f32 %v64, %v991
    %993 = vmatprep.subr.mxu0 %v992
    %v994 = vand.u32 %v63, 4294901760
    %v995 = vsub.f32 %v63, %v994
    %996 = vmatpush1.msra.mxu0 %v995
    %v997 = vand.u32 %v66, 4294901760
    %v998 = vsub.f32 %v66, %v997
    %999 = vmatprep.subr.mxu0 %v998
    %v1000 = vand.u32 %v65, 4294901760
    %v1001 = vsub.f32 %v65, %v1000
    %1002 = vmatpush1.msra.mxu0 %v1001
    %v1003 = vand.u32 %v68, 4294901760
    %v1004 = vsub.f32 %v68, %v1003
    %1005 = vmatprep.subr.mxu0 %v1004
    %v1006 = vand.u32 %v67, 4294901760
    %v1007 = vsub.f32 %v67, %v1006
    %1008 = vmatpush1.msra.mxu0 %v1007
    %v1009 = vand.u32 %v70, 4294901760
    %v1010 = vsub.f32 %v70, %v1009
    %1011 = vmatprep.subr.mxu0 %v1010
    %v1012 = vand.u32 %v69, 4294901760
    %v1013 = vsub.f32 %v69, %v1012
    %1014 = vmatpush1.msra.mxu0 %v1013
    %v1015 = vand.u32 %v72, 4294901760
    %v1016 = vsub.f32 %v72, %v1015
    %1017 = vmatprep.subr.mxu0 %v1016
    %v1018 = vand.u32 %v71, 4294901760
    %v1019 = vsub.f32 %v71, %v1018
    %1020 = vmatpush1.msra.mxu0 %v1019
    %v1021 = vand.u32 %v74, 4294901760
    %v1022 = vsub.f32 %v74, %v1021
    %1023 = vmatprep.subr.mxu0 %v1022
    %v1024 = vand.u32 %v73, 4294901760
    %v1025 = vsub.f32 %v73, %v1024
    %1026 = vmatpush1.msra.mxu0 %v1025
    %v1027 = vand.u32 %v76, 4294901760
    %v1028 = vsub.f32 %v76, %v1027
    %1029 = vmatprep.subr.mxu0 %v1028
    %v1030 = vand.u32 %v75, 4294901760
    %v1031 = vsub.f32 %v75, %v1030
    %1032 = vmatpush1.msra.mxu0 %v1031
    %v1033 = vand.u32 %v78, 4294901760
    %v1034 = vsub.f32 %v78, %v1033
    %1035 = vmatprep.subr.mxu0 %v1034
    %v1036 = vand.u32 %v77, 4294901760
    %v1037 = vsub.f32 %v77, %v1036
    %1038 = vmatpush1.msra.mxu0 %v1037
    %v1039 = vand.u32 %v80, 4294901760
    %v1040 = vsub.f32 %v80, %v1039
    %1041 = vmatprep.subr.mxu0 %v1040
    %v1042 = vand.u32 %v79, 4294901760
    %v1043 = vsub.f32 %v79, %v1042
    %1044 = vmatpush1.msra.mxu0 %v1043
    %v1045 = vand.u32 %v82, 4294901760
    %v1046 = vsub.f32 %v82, %v1045
    %1047 = vmatprep.subr.mxu0 %v1046
    %v1048 = vand.u32 %v81, 4294901760
    %v1049 = vsub.f32 %v81, %v1048
    %1050 = vmatpush1.msra.mxu0 %v1049
    %v1051 = vand.u32 %v84, 4294901760
    %v1052 = vsub.f32 %v84, %v1051
    %1053 = vmatprep.subr.mxu0 %v1052
    %v1054 = vand.u32 %v83, 4294901760
    %v1055 = vsub.f32 %v83, %v1054
    %1056 = vmatpush1.msra.mxu0 %v1055
    %v1057 = vand.u32 %v86, 4294901760
    %v1058 = vsub.f32 %v86, %v1057
    %1059 = vmatprep.subr.mxu0 %v1058
    %v1060 = vand.u32 %v85, 4294901760
    %v1061 = vsub.f32 %v85, %v1060
    %1062 = vmatpush1.msra.mxu0 %v1061
    %v1063 = vand.u32 %v88, 4294901760
    %v1064 = vsub.f32 %v88, %v1063
    %1065 = vmatprep.subr.mxu0 %v1064
    %v1066 = vand.u32 %v87, 4294901760
    %v1067 = vsub.f32 %v87, %v1066
    %1068 = vmatpush1.msra.mxu0 %v1067
    %v1069 = vand.u32 %v90, 4294901760
    %v1070 = vsub.f32 %v90, %v1069
    %1071 = vmatprep.subr.mxu0 %v1070
    %v1072 = vand.u32 %v89, 4294901760
    %v1073 = vsub.f32 %v89, %v1072
    %1074 = vmatpush1.msra.mxu0 %v1073
    %v1075 = vand.u32 %v92, 4294901760
    %v1076 = vsub.f32 %v92, %v1075
    %1077 = vmatprep.subr.mxu0 %v1076
    %v1078 = vand.u32 %v91, 4294901760
    %v1079 = vsub.f32 %v91, %v1078
    %1080 = vmatpush1.msra.mxu0 %v1079
    %v1081 = vand.u32 %v94, 4294901760
    %v1082 = vsub.f32 %v94, %v1081
    %1083 = vmatprep.subr.mxu0 %v1082
    %v1084 = vand.u32 %v93, 4294901760
    %v1085 = vsub.f32 %v93, %v1084
    %1086 = vmatpush1.msra.mxu0 %v1085
    %1087 = vmatprep.subr.mxu0 0.0
    %1088 = vmatpush1.msra.mxu0 0.0
    %1089 = vmatprep.subr.mxu0 0.0
    %1090 = vmatpush1.msra.mxu0 0.0
    %1091 = vmatprep.subr.mxu0 0.0
    %1092 = vmatpush1.msra.mxu0 0.0
    %1093 = vmatprep.subr.mxu0 0.0
    %1094 = vmatpush1.msra.mxu0 0.0
    %1095 = vmatprep.subr.mxu0 0.0
    %1096 = vmatpush1.msra.mxu0 0.0
    %1097 = vmatprep.subr.mxu0 0.0
    %1098 = vmatpush1.msra.mxu0 0.0
    %1099 = vmatprep.subr.mxu0 0.0
    %1100 = vmatpush1.msra.mxu0 0.0
    %1101 = vmatprep.subr.mxu0 0.0
    %1102 = vmatpush1.msra.mxu0 0.0
    %1103 = vmatprep.subr.mxu0 0.0
    %1104 = vmatpush1.msra.mxu0 0.0
    %1105 = vmatprep.subr.mxu0 0.0
    %1106 = vmatpush1.msra.mxu0 0.0
    %1107 = vmatprep.subr.mxu0 0.0
    %1108 = vmatpush1.msra.mxu0 0.0
    %1109 = vmatprep.subr.mxu0 0.0
    %1110 = vmatpush1.msra.mxu0 0.0
    %1111 = vmatprep.subr.mxu0 0.0
    %1112 = vmatpush1.msra.mxu0 0.0
    %1113 = vmatprep.subr.mxu0 0.0
    %1114 = vmatpush1.msra.mxu0 0.0
    %1115 = vmatprep.subr.mxu0 0.0
    %1116 = vmatpush1.msra.mxu0 0.0
    %1117 = vmatprep.subr.mxu0 0.0
    %1118 = vmatpush1.msra.mxu0 0.0
    %1119 = vmatprep.mubr.f32.mxu0 0.0
    %v1120 = vand.u32 %v62, 4294901760
    %v1121 = vsub.f32 %v62, %v1120
    %1122 = vmatmul.mubr.f32.gmra.mrb[0].mxu0 %v1121
    %v1123 = vpop.f32.mrb[0].mxu0
    %v1124 = vadd.f32 %v987, %v1123
    %v1125 = vpop.f32.mrb[0].mxu0
    %v1126 = vadd.f32 %v989, %v1125
    %1127 = vdwg.mxu0
    %v1128 = vand.u32 %v64, 4294901760
    %1129 = vmatprep.subr.mxu0 %v1128
    %v1130 = vand.u32 %v63, 4294901760
    %1131 = vmatpush1.msra.mxu0 %v1130
    %v1132 = vand.u32 %v66, 4294901760
    %1133 = vmatprep.subr.mxu0 %v1132
    %v1134 = vand.u32 %v65, 4294901760
    %1135 = vmatpush1.msra.mxu0 %v1134
    %v1136 = vand.u32 %v68, 4294901760
    %1137 = vmatprep.subr.mxu0 %v1136
    %v1138 = vand.u32 %v67, 4294901760
    %1139 = vmatpush1.msra.mxu0 %v1138
    %v1140 = vand.u32 %v70, 4294901760
    %1141 = vmatprep.subr.mxu0 %v1140
    %v1142 = vand.u32 %v69, 4294901760
    %1143 = vmatpush1.msra.mxu0 %v1142
    %v1144 = vand.u32 %v72, 4294901760
    %1145 = vmatprep.subr.mxu0 %v1144
    %v1146 = vand.u32 %v71, 4294901760
    %1147 = vmatpush1.msra.mxu0 %v1146
    %v1148 = vand.u32 %v74, 4294901760
    %1149 = vmatprep.subr.mxu0 %v1148
    %v1150 = vand.u32 %v73, 4294901760
    %1151 = vmatpush1.msra.mxu0 %v1150
    %v1152 = vand.u32 %v76, 4294901760
    %1153 = vmatprep.subr.mxu0 %v1152
    %v1154 = vand.u32 %v75, 4294901760
    %1155 = vmatpush1.msra.mxu0 %v1154
    %v1156 = vand.u32 %v78, 4294901760
    %1157 = vmatprep.subr.mxu0 %v1156
    %v1158 = vand.u32 %v77, 4294901760
    %1159 = vmatpush1.msra.mxu0 %v1158
    %v1160 = vand.u32 %v80, 4294901760
    %1161 = vmatprep.subr.mxu0 %v1160
    %v1162 = vand.u32 %v79, 4294901760
    %1163 = vmatpush1.msra.mxu0 %v1162
    %v1164 = vand.u32 %v82, 4294901760
    %1165 = vmatprep.subr.mxu0 %v1164
    %v1166 = vand.u32 %v81, 4294901760
    %1167 = vmatpush1.msra.mxu0 %v1166
    %v1168 = vand.u32 %v84, 4294901760
    %1169 = vmatprep.subr.mxu0 %v1168
    %v1170 = vand.u32 %v83, 4294901760
    %1171 = vmatpush1.msra.mxu0 %v1170
    %v1172 = vand.u32 %v86, 4294901760
    %1173 = vmatprep.subr.mxu0 %v1172
    %v1174 = vand.u32 %v85, 4294901760
    %1175 = vmatpush1.msra.mxu0 %v1174
    %v1176 = vand.u32 %v88, 4294901760
    %1177 = vmatprep.subr.mxu0 %v1176
    %v1178 = vand.u32 %v87, 4294901760
    %1179 = vmatpush1.msra.mxu0 %v1178
    %v1180 = vand.u32 %v90, 4294901760
    %1181 = vmatprep.subr.mxu0 %v1180
    %v1182 = vand.u32 %v89, 4294901760
    %1183 = vmatpush1.msra.mxu0 %v1182
    %v1184 = vand.u32 %v92, 4294901760
    %1185 = vmatprep.subr.mxu0 %v1184
    %v1186 = vand.u32 %v91, 4294901760
    %1187 = vmatpush1.msra.mxu0 %v1186
    %v1188 = vand.u32 %v94, 4294901760
    %1189 = vmatprep.subr.mxu0 %v1188
    %v1190 = vand.u32 %v93, 4294901760
    %1191 = vmatpush1.msra.mxu0 %v1190
    %1192 = vmatprep.subr.mxu0 0.0
    %1193 = vmatpush1.msra.mxu0 0.0
    %1194 = vmatprep.subr.mxu0 0.0
    %1195 = vmatpush1.msra.mxu0 0.0
    %1196 = vmatprep.subr.mxu0 0.0
    %1197 = vmatpush1.msra.mxu0 0.0
    %1198 = vmatprep.subr.mxu0 0.0
    %1199 = vmatpush1.msra.mxu0 0.0
    %1200 = vmatprep.subr.mxu0 0.0
    %1201 = vmatpush1.msra.mxu0 0.0
    %1202 = vmatprep.subr.mxu0 0.0
    %1203 = vmatpush1.msra.mxu0 0.0
    %1204 = vmatprep.subr.mxu0 0.0
    %1205 = vmatpush1.msra.mxu0 0.0
    %1206 = vmatprep.subr.mxu0 0.0
    %1207 = vmatpush1.msra.mxu0 0.0
    %1208 = vmatprep.subr.mxu0 0.0
    %1209 = vmatpush1.msra.mxu0 0.0
    %1210 = vmatprep.subr.mxu0 0.0
    %1211 = vmatpush1.msra.mxu0 0.0
    %1212 = vmatprep.subr.mxu0 0.0
    %1213 = vmatpush1.msra.mxu0 0.0
    %1214 = vmatprep.subr.mxu0 0.0
    %1215 = vmatpush1.msra.mxu0 0.0
    %1216 = vmatprep.subr.mxu0 0.0
    %1217 = vmatpush1.msra.mxu0 0.0
    %1218 = vmatprep.subr.mxu0 0.0
    %1219 = vmatpush1.msra.mxu0 0.0
    %1220 = vmatprep.subr.mxu0 0.0
    %1221 = vmatpush1.msra.mxu0 0.0
    %1222 = vmatprep.subr.mxu0 0.0
    %1223 = vmatpush1.msra.mxu0 0.0
    %1224 = vmatprep.mubr.f32.mxu0 0.0
    %v1225 = vand.u32 %v62, 4294901760
    %v1226 = vsub.f32 %v62, %v1225
    %v1227 = vand.u32 %v1226, 4294901760
    %1228 = vmatmul.mubr.f32.gmra.mrb[0].mxu0 %v1227
    %v1229 = vpop.f32.mrb[0].mxu0
    %v1230 = vadd.f32 %v1124, %v1229
    %v1231 = vpop.f32.mrb[0].mxu0
    %v1232 = vadd.f32 %v1126, %v1231
    %1233 = vdwg.mxu0
    %v1234 = vand.u32 %v64, 4294901760
    %v1235 = vsub.f32 %v64, %v1234
    %v1236 = vand.u32 %v1235, 4294901760
    %1237 = vmatprep.subr.mxu0 %v1236
    %v1238 = vand.u32 %v63, 4294901760
    %v1239 = vsub.f32 %v63, %v1238
    %v1240 = vand.u32 %v1239, 4294901760
    %1241 = vmatpush1.msra.mxu0 %v1240
    %v1242 = vand.u32 %v66, 4294901760
    %v1243 = vsub.f32 %v66, %v1242
    %v1244 = vand.u32 %v1243, 4294901760
    %1245 = vmatprep.subr.mxu0 %v1244
    %v1246 = vand.u32 %v65, 4294901760
    %v1247 = vsub.f32 %v65, %v1246
    %v1248 = vand.u32 %v1247, 4294901760
    %1249 = vmatpush1.msra.mxu0 %v1248
    %v1250 = vand.u32 %v68, 4294901760
    %v1251 = vsub.f32 %v68, %v1250
    %v1252 = vand.u32 %v1251, 4294901760
    %1253 = vmatprep.subr.mxu0 %v1252
    %v1254 = vand.u32 %v67, 4294901760
    %v1255 = vsub.f32 %v67, %v1254
    %v1256 = vand.u32 %v1255, 4294901760
    %1257 = vmatpush1.msra.mxu0 %v1256
    %v1258 = vand.u32 %v70, 4294901760
    %v1259 = vsub.f32 %v70, %v1258
    %v1260 = vand.u32 %v1259, 4294901760
    %1261 = vmatprep.subr.mxu0 %v1260
    %v1262 = vand.u32 %v69, 4294901760
    %v1263 = vsub.f32 %v69, %v1262
    %v1264 = vand.u32 %v1263, 4294901760
    %1265 = vmatpush1.msra.mxu0 %v1264
    %v1266 = vand.u32 %v72, 4294901760
    %v1267 = vsub.f32 %v72, %v1266
    %v1268 = vand.u32 %v1267, 4294901760
    %1269 = vmatprep.subr.mxu0 %v1268
    %v1270 = vand.u32 %v71, 4294901760
    %v1271 = vsub.f32 %v71, %v1270
    %v1272 = vand.u32 %v1271, 4294901760
    %1273 = vmatpush1.msra.mxu0 %v1272
    %v1274 = vand.u32 %v74, 4294901760
    %v1275 = vsub.f32 %v74, %v1274
    %v1276 = vand.u32 %v1275, 4294901760
    %1277 = vmatprep.subr.mxu0 %v1276
    %v1278 = vand.u32 %v73, 4294901760
    %v1279 = vsub.f32 %v73, %v1278
    %v1280 = vand.u32 %v1279, 4294901760
    %1281 = vmatpush1.msra.mxu0 %v1280
    %v1282 = vand.u32 %v76, 4294901760
    %v1283 = vsub.f32 %v76, %v1282
    %v1284 = vand.u32 %v1283, 4294901760
    %1285 = vmatprep.subr.mxu0 %v1284
    %v1286 = vand.u32 %v75, 4294901760
    %v1287 = vsub.f32 %v75, %v1286
    %v1288 = vand.u32 %v1287, 4294901760
    %1289 = vmatpush1.msra.mxu0 %v1288
    %v1290 = vand.u32 %v78, 4294901760
    %v1291 = vsub.f32 %v78, %v1290
    %v1292 = vand.u32 %v1291, 4294901760
    %1293 = vmatprep.subr.mxu0 %v1292
    %v1294 = vand.u32 %v77, 4294901760
    %v1295 = vsub.f32 %v77, %v1294
    %v1296 = vand.u32 %v1295, 4294901760
    %1297 = vmatpush1.msra.mxu0 %v1296
    %v1298 = vand.u32 %v80, 4294901760
    %v1299 = vsub.f32 %v80, %v1298
    %v1300 = vand.u32 %v1299, 4294901760
    %1301 = vmatprep.subr.mxu0 %v1300
    %v1302 = vand.u32 %v79, 4294901760
    %v1303 = vsub.f32 %v79, %v1302
    %v1304 = vand.u32 %v1303, 4294901760
    %1305 = vmatpush1.msra.mxu0 %v1304
    %v1306 = vand.u32 %v82, 4294901760
    %v1307 = vsub.f32 %v82, %v1306
    %v1308 = vand.u32 %v1307, 4294901760
    %1309 = vmatprep.subr.mxu0 %v1308
    %v1310 = vand.u32 %v81, 4294901760
    %v1311 = vsub.f32 %v81, %v1310
    %v1312 = vand.u32 %v1311, 4294901760
    %1313 = vmatpush1.msra.mxu0 %v1312
    %v1314 = vand.u32 %v84, 4294901760
    %v1315 = vsub.f32 %v84, %v1314
    %v1316 = vand.u32 %v1315, 4294901760
    %1317 = vmatprep.subr.mxu0 %v1316
    %v1318 = vand.u32 %v83, 4294901760
    %v1319 = vsub.f32 %v83, %v1318
    %v1320 = vand.u32 %v1319, 4294901760
    %1321 = vmatpush1.msra.mxu0 %v1320
    %v1322 = vand.u32 %v86, 4294901760
    %v1323 = vsub.f32 %v86, %v1322
    %v1324 = vand.u32 %v1323, 4294901760
    %1325 = vmatprep.subr.mxu0 %v1324
    %v1326 = vand.u32 %v85, 4294901760
    %v1327 = vsub.f32 %v85, %v1326
    %v1328 = vand.u32 %v1327, 4294901760
    %1329 = vmatpush1.msra.mxu0 %v1328
    %v1330 = vand.u32 %v88, 4294901760
    %v1331 = vsub.f32 %v88, %v1330
    %v1332 = vand.u32 %v1331, 4294901760
    %1333 = vmatprep.subr.mxu0 %v1332
    %v1334 = vand.u32 %v87, 4294901760
    %v1335 = vsub.f32 %v87, %v1334
    %v1336 = vand.u32 %v1335, 4294901760
    %1337 = vmatpush1.msra.mxu0 %v1336
    %v1338 = vand.u32 %v90, 4294901760
    %v1339 = vsub.f32 %v90, %v1338
    %v1340 = vand.u32 %v1339, 4294901760
    %1341 = vmatprep.subr.mxu0 %v1340
    %v1342 = vand.u32 %v89, 4294901760
    %v1343 = vsub.f32 %v89, %v1342
    %v1344 = vand.u32 %v1343, 4294901760
    %1345 = vmatpush1.msra.mxu0 %v1344
    %v1346 = vand.u32 %v92, 4294901760
    %v1347 = vsub.f32 %v92, %v1346
    %v1348 = vand.u32 %v1347, 4294901760
    %1349 = vmatprep.subr.mxu0 %v1348
    %v1350 = vand.u32 %v91, 4294901760
    %v1351 = vsub.f32 %v91, %v1350
    %v1352 = vand.u32 %v1351, 4294901760
    %1353 = vmatpush1.msra.mxu0 %v1352
    %v1354 = vand.u32 %v94, 4294901760
    %v1355 = vsub.f32 %v94, %v1354
    %v1356 = vand.u32 %v1355, 4294901760
    %1357 = vmatprep.subr.mxu0 %v1356
    %v1358 = vand.u32 %v93, 4294901760
    %v1359 = vsub.f32 %v93, %v1358
    %v1360 = vand.u32 %v1359, 4294901760
    %1361 = vmatpush1.msra.mxu0 %v1360
    %1362 = vmatprep.subr.mxu0 0.0
    %1363 = vmatpush1.msra.mxu0 0.0
    %1364 = vmatprep.subr.mxu0 0.0
    %1365 = vmatpush1.msra.mxu0 0.0
    %1366 = vmatprep.subr.mxu0 0.0
    %1367 = vmatpush1.msra.mxu0 0.0
    %1368 = vmatprep.subr.mxu0 0.0
    %1369 = vmatpush1.msra.mxu0 0.0
    %1370 = vmatprep.subr.mxu0 0.0
    %1371 = vmatpush1.msra.mxu0 0.0
    %1372 = vmatprep.subr.mxu0 0.0
    %1373 = vmatpush1.msra.mxu0 0.0
    %1374 = vmatprep.subr.mxu0 0.0
    %1375 = vmatpush1.msra.mxu0 0.0
    %1376 = vmatprep.subr.mxu0 0.0
    %1377 = vmatpush1.msra.mxu0 0.0
    %1378 = vmatprep.subr.mxu0 0.0
    %1379 = vmatpush1.msra.mxu0 0.0
    %1380 = vmatprep.subr.mxu0 0.0
    %1381 = vmatpush1.msra.mxu0 0.0
    %1382 = vmatprep.subr.mxu0 0.0
    %1383 = vmatpush1.msra.mxu0 0.0
    %1384 = vmatprep.subr.mxu0 0.0
    %1385 = vmatpush1.msra.mxu0 0.0
    %1386 = vmatprep.subr.mxu0 0.0
    %1387 = vmatpush1.msra.mxu0 0.0
    %1388 = vmatprep.subr.mxu0 0.0
    %1389 = vmatpush1.msra.mxu0 0.0
    %1390 = vmatprep.subr.mxu0 0.0
    %1391 = vmatpush1.msra.mxu0 0.0
    %1392 = vmatprep.subr.mxu0 0.0
    %1393 = vmatpush1.msra.mxu0 0.0
    %1394 = vmatprep.mubr.f32.mxu0 0.0
    %v1395 = vand.u32 %v62, 4294901760
    %1396 = vmatmul.mubr.f32.gmra.mrb[0].mxu0 %v1395
    %v1397 = vpop.f32.mrb[0].mxu0
    %v1398 = vadd.f32 %v1230, %v1397
    %v1399 = vpop.f32.mrb[0].mxu0
    %v1400 = vadd.f32 %v1232, %v1399
    %1401 = vdwg.mxu0
    %v1402 = vand.u32 %v64, 4294901760
    %1403 = vmatprep.subr.mxu0 %v1402
    %v1404 = vand.u32 %v63, 4294901760
    %1405 = vmatpush1.msra.mxu0 %v1404
    %v1406 = vand.u32 %v66, 4294901760
    %1407 = vmatprep.subr.mxu0 %v1406
    %v1408 = vand.u32 %v65, 4294901760
    %1409 = vmatpush1.msra.mxu0 %v1408
    %v1410 = vand.u32 %v68, 4294901760
    %1411 = vmatprep.subr.mxu0 %v1410
    %v1412 = vand.u32 %v67, 4294901760
    %1413 = vmatpush1.msra.mxu0 %v1412
    %v1414 = vand.u32 %v70, 4294901760
    %1415 = vmatprep.subr.mxu0 %v1414
    %v1416 = vand.u32 %v69, 4294901760
    %1417 = vmatpush1.msra.mxu0 %v1416
    %v1418 = vand.u32 %v72, 4294901760
    %1419 = vmatprep.subr.mxu0 %v1418
    %v1420 = vand.u32 %v71, 4294901760
    %1421 = vmatpush1.msra.mxu0 %v1420
    %v1422 = vand.u32 %v74, 4294901760
    %1423 = vmatprep.subr.mxu0 %v1422
    %v1424 = vand.u32 %v73, 4294901760
    %1425 = vmatpush1.msra.mxu0 %v1424
    %v1426 = vand.u32 %v76, 4294901760
    %1427 = vmatprep.subr.mxu0 %v1426
    %v1428 = vand.u32 %v75, 4294901760
    %1429 = vmatpush1.msra.mxu0 %v1428
    %v1430 = vand.u32 %v78, 4294901760
    %1431 = vmatprep.subr.mxu0 %v1430
    %v1432 = vand.u32 %v77, 4294901760
    %1433 = vmatpush1.msra.mxu0 %v1432
    %v1434 = vand.u32 %v80, 4294901760
    %1435 = vmatprep.subr.mxu0 %v1434
    %v1436 = vand.u32 %v79, 4294901760
    %1437 = vmatpush1.msra.mxu0 %v1436
    %v1438 = vand.u32 %v82, 4294901760
    %1439 = vmatprep.subr.mxu0 %v1438
    %v1440 = vand.u32 %v81, 4294901760
    %1441 = vmatpush1.msra.mxu0 %v1440
    %v1442 = vand.u32 %v84, 4294901760
    %1443 = vmatprep.subr.mxu0 %v1442
    %v1444 = vand.u32 %v83, 4294901760
    %1445 = vmatpush1.msra.mxu0 %v1444
    %v1446 = vand.u32 %v86, 4294901760
    %1447 = vmatprep.subr.mxu0 %v1446
    %v1448 = vand.u32 %v85, 4294901760
    %1449 = vmatpush1.msra.mxu0 %v1448
    %v1450 = vand.u32 %v88, 4294901760
    %1451 = vmatprep.subr.mxu0 %v1450
    %v1452 = vand.u32 %v87, 4294901760
    %1453 = vmatpush1.msra.mxu0 %v1452
    %v1454 = vand.u32 %v90, 4294901760
    %1455 = vmatprep.subr.mxu0 %v1454
    %v1456 = vand.u32 %v89, 4294901760
    %1457 = vmatpush1.msra.mxu0 %v1456
    %v1458 = vand.u32 %v92, 4294901760
    %1459 = vmatprep.subr.mxu0 %v1458
    %v1460 = vand.u32 %v91, 4294901760
    %1461 = vmatpush1.msra.mxu0 %v1460
    %v1462 = vand.u32 %v94, 4294901760
    %1463 = vmatprep.subr.mxu0 %v1462
    %v1464 = vand.u32 %v93, 4294901760
    %1465 = vmatpush1.msra.mxu0 %v1464
    %1466 = vmatprep.subr.mxu0 0.0
    %1467 = vmatpush1.msra.mxu0 0.0
    %1468 = vmatprep.subr.mxu0 0.0
    %1469 = vmatpush1.msra.mxu0 0.0
    %1470 = vmatprep.subr.mxu0 0.0
    %1471 = vmatpush1.msra.mxu0 0.0
    %1472 = vmatprep.subr.mxu0 0.0
    %1473 = vmatpush1.msra.mxu0 0.0
    %1474 = vmatprep.subr.mxu0 0.0
    %1475 = vmatpush1.msra.mxu0 0.0
    %1476 = vmatprep.subr.mxu0 0.0
    %1477 = vmatpush1.msra.mxu0 0.0
    %1478 = vmatprep.subr.mxu0 0.0
    %1479 = vmatpush1.msra.mxu0 0.0
    %1480 = vmatprep.subr.mxu0 0.0
    %1481 = vmatpush1.msra.mxu0 0.0
    %1482 = vmatprep.subr.mxu0 0.0
    %1483 = vmatpush1.msra.mxu0 0.0
    %1484 = vmatprep.subr.mxu0 0.0
    %1485 = vmatpush1.msra.mxu0 0.0
    %1486 = vmatprep.subr.mxu0 0.0
    %1487 = vmatpush1.msra.mxu0 0.0
    %1488 = vmatprep.subr.mxu0 0.0
    %1489 = vmatpush1.msra.mxu0 0.0
    %1490 = vmatprep.subr.mxu0 0.0
    %1491 = vmatpush1.msra.mxu0 0.0
    %1492 = vmatprep.subr.mxu0 0.0
    %1493 = vmatpush1.msra.mxu0 0.0
    %1494 = vmatprep.subr.mxu0 0.0
    %1495 = vmatpush1.msra.mxu0 0.0
    %1496 = vmatprep.subr.mxu0 0.0
    %1497 = vmatpush1.msra.mxu0 0.0
    %1498 = vmatprep.mubr.f32.mxu0 0.0
    %v1499 = vand.u32 %v62, 4294901760
    %1500 = vmatmul.mubr.f32.gmra.mrb[0].mxu0 %v1499
    %v1501 = vpop.f32.mrb[0].mxu0
    %v1502 = vadd.f32 %v1398, %v1501
    %v1503 = vpop.f32.mrb[0].mxu0
    %v1504 = vadd.f32 %v1400, %v1503
    %1505 = vdwg.mxu0
    %v1506 = vld [vmem:[%s4] sm:$0x3]
    %v1508 = vlaneseq
    %v1509 = vshrl.u32 %v1508, 7
    %v1510 = vsub.s32 0, %v1509
    %v1511 = vrot.slane %v1506, %v1510
    %v1512 = vlaneseq
    %v1513 = vshrl.u32 %v1512, 7
    %v1514 = vsub.s32 1, %v1513
    %v1515 = vrot.slane %v1506, %v1514
    %v1518 = vadd.f32 %v1502, %v1511
    %v1519 = vadd.f32 %v1504, %v1515
    %v1520 = vmax.f32 %v1518, 0.0
    %v1521 = vmax.f32 %v1519, 0.0
    %v1522 = vld [vmem:[#allocation6] sm:$0xff]
    %v1523 = vld [vmem:[#allocation6 + $0x8] sm:$0xff]
    %v1524 = vld [vmem:[#allocation6 + $0x10] sm:$0xff]
    %v1525 = vld [vmem:[#allocation6 + $0x18] sm:$0xff]
    %v1526 = vld [vmem:[#allocation6 + $0x20] sm:$0xff]
    %v1527 = vld [vmem:[#allocation6 + $0x28] sm:$0xff]
    %v1528 = vld [vmem:[#allocation6 + $0x30] sm:$0xff]
    %v1529 = vld [vmem:[#allocation6 + $0x38] sm:$0xff]
    %v1530 = vld [vmem:[#allocation6 + $0x40] sm:$0xff]
    %v1531 = vld [vmem:[#allocation6 + $0x48] sm:$0xff]
    %v1532 = vld [vmem:[#allocation6 + $0x50] sm:$0xff]
    %v1533 = vld [vmem:[#allocation6 + $0x58] sm:$0xff]
    %v1534 = vld [vmem:[#allocation6 + $0x60] sm:$0xff]
    %v1535 = vld [vmem:[#allocation6 + $0x68] sm:$0xff]
    %v1536 = vld [vmem:[#allocation6 + $0x70] sm:$0xff]
    %v1537 = vld [vmem:[#allocation6 + $0x78] sm:$0xff]
    %v1538 = vld [vmem:[#allocation6 + $0x80] sm:$0xff]
    %v1539 = vld [vmem:[#allocation6 + $0x88] sm:$0xff]
    %v1540 = vld [vmem:[#allocation6 + $0x90] sm:$0xff]
    %v1541 = vld [vmem:[#allocation6 + $0x98] sm:$0xff]
    %v1542 = vld [vmem:[#allocation6 + $0xa0] sm:$0xff]
    %v1543 = vld [vmem:[#allocation6 + $0xa8] sm:$0xff]
    %v1544 = vld [vmem:[#allocation6 + $0xb0] sm:$0xff]
    %v1545 = vld [vmem:[#allocation6 + $0xb8] sm:$0xff]
    %v1546 = vld [vmem:[#allocation6 + $0xc0] sm:$0xff]
    %v1547 = vld [vmem:[#allocation6 + $0xc8] sm:$0xff]
    %v1548 = vld [vmem:[#allocation6 + $0xd0] sm:$0xff]
    %v1549 = vld [vmem:[#allocation6 + $0xd8] sm:$0xff]
    %v1550 = vld [vmem:[#allocation6 + $0xe0] sm:$0xff]
    %v1551 = vld [vmem:[#allocation6 + $0xe8] sm:$0xff]
    %v1552 = vld [vmem:[#allocation6 + $0xf0] sm:$0xff]
    %v1553 = vld [vmem:[#allocation6 + $0xf8] sm:$0xff]
    %v1554 = vld [vmem:[#allocation6 + $0x100] sm:$0xff]
    %v1555 = vld [vmem:[#allocation6 + $0x108] sm:$0xff]
    %v1556 = vld [vmem:[#allocation6 + $0x110] sm:$0xff]
    %v1557 = vld [vmem:[#allocation6 + $0x118] sm:$0xff]
    %v1558 = vld [vmem:[#allocation6 + $0x120] sm:$0xff]
    %v1559 = vld [vmem:[#allocation6 + $0x128] sm:$0xff]
    %v1560 = vld [vmem:[#allocation6 + $0x130] sm:$0xff]
    %v1561 = vld [vmem:[#allocation6 + $0x138] sm:$0xff]
    %v1562 = vld [vmem:[#allocation6 + $0x140] sm:$0xff]
    %v1563 = vld [vmem:[#allocation6 + $0x148] sm:$0xff]
    %v1564 = vld [vmem:[#allocation6 + $0x150] sm:$0xff]
    %v1565 = vld [vmem:[#allocation6 + $0x158] sm:$0xff]
    %v1566 = vld [vmem:[#allocation6 + $0x160] sm:$0xff]
    %v1567 = vld [vmem:[#allocation6 + $0x168] sm:$0xff]
    %v1568 = vld [vmem:[#allocation6 + $0x170] sm:$0xff]
    %v1569 = vld [vmem:[#allocation6 + $0x178] sm:$0xff]
    %v1570 = vld [vmem:[#allocation6 + $0x180] sm:$0xff]
    %v1571 = vld [vmem:[#allocation6 + $0x188] sm:$0xff]
    %v1572 = vld [vmem:[#allocation6 + $0x190] sm:$0xff]
    %v1573 = vld [vmem:[#allocation6 + $0x198] sm:$0xff]
    %v1574 = vld [vmem:[#allocation6 + $0x1a0] sm:$0xff]
    %v1575 = vld [vmem:[#allocation6 + $0x1a8] sm:$0xff]
    %v1576 = vld [vmem:[#allocation6 + $0x1b0] sm:$0xff]
    %v1577 = vld [vmem:[#allocation6 + $0x1b8] sm:$0xff]
    %v1578 = vld [vmem:[#allocation6 + $0x1c0] sm:$0xff]
    %v1579 = vld [vmem:[#allocation6 + $0x1c8] sm:$0xff]
    %v1580 = vld [vmem:[#allocation6 + $0x1d0] sm:$0xff]
    %v1581 = vld [vmem:[#allocation6 + $0x1d8] sm:$0xff]
    %v1582 = vld [vmem:[#allocation6 + $0x1e0] sm:$0xff]
    %v1583 = vld [vmem:[#allocation6 + $0x1e8] sm:$0xff]
    %v1584 = vld [vmem:[#allocation6 + $0x1f0] sm:$0xff]
    %v1585 = vld [vmem:[#allocation6 + $0x1f8] sm:$0xff]
    %v1586 = vld [vmem:[%s6] sm:$0x3]
    %v1588 = vlaneseq
    %v1589 = vshrl.u32 %v1588, 7
    %v1590 = vsub.s32 0, %v1589
    %v1591 = vrot.slane %v1586, %v1590
    %v1592 = vlaneseq
    %v1593 = vshrl.u32 %v1592, 7
    %v1594 = vsub.s32 1, %v1593
    %v1595 = vrot.slane %v1586, %v1594
    %v1598 = vand.u32 %v1523, 4294901760
    %1599 = vmatprep.subr.mxu0 %v1598
    %v1600 = vand.u32 %v1522, 4294901760
    %1601 = vmatpush1.msra.mxu0 %v1600
    %v1602 = vand.u32 %v1525, 4294901760
    %1603 = vmatprep.subr.mxu0 %v1602
    %v1604 = vand.u32 %v1524, 4294901760
    %1605 = vmatpush1.msra.mxu0 %v1604
    %v1606 = vand.u32 %v1527, 4294901760
    %1607 = vmatprep.subr.mxu0 %v1606
    %v1608 = vand.u32 %v1526, 4294901760
    %1609 = vmatpush1.msra.mxu0 %v1608
    %v1610 = vand.u32 %v1529, 4294901760
    %1611 = vmatprep.subr.mxu0 %v1610
    %v1612 = vand.u32 %v1528, 4294901760
    %1613 = vmatpush1.msra.mxu0 %v1612
    %v1614 = vand.u32 %v1531, 4294901760
    %1615 = vmatprep.subr.mxu0 %v1614
    %v1616 = vand.u32 %v1530, 4294901760
    %1617 = vmatpush1.msra.mxu0 %v1616
    %v1618 = vand.u32 %v1533, 4294901760
    %1619 = vmatprep.subr.mxu0 %v1618
    %v1620 = vand.u32 %v1532, 4294901760
    %1621 = vmatpush1.msra.mxu0 %v1620
    %v1622 = vand.u32 %v1535, 4294901760
    %1623 = vmatprep.subr.mxu0 %v1622
    %v1624 = vand.u32 %v1534, 4294901760
    %1625 = vmatpush1.msra.mxu0 %v1624
    %v1626 = vand.u32 %v1537, 4294901760
    %1627 = vmatprep.subr.mxu0 %v1626
    %v1628 = vand.u32 %v1536, 4294901760
    %1629 = vmatpush1.msra.mxu0 %v1628
    %v1630 = vand.u32 %v1539, 4294901760
    %1631 = vmatprep.subr.mxu0 %v1630
    %v1632 = vand.u32 %v1538, 4294901760
    %1633 = vmatpush1.msra.mxu0 %v1632
    %v1634 = vand.u32 %v1541, 4294901760
    %1635 = vmatprep.subr.mxu0 %v1634
    %v1636 = vand.u32 %v1540, 4294901760
    %1637 = vmatpush1.msra.mxu0 %v1636
    %v1638 = vand.u32 %v1543, 4294901760
    %1639 = vmatprep.subr.mxu0 %v1638
    %v1640 = vand.u32 %v1542, 4294901760
    %1641 = vmatpush1.msra.mxu0 %v1640
    %v1642 = vand.u32 %v1545, 4294901760
    %1643 = vmatprep.subr.mxu0 %v1642
    %v1644 = vand.u32 %v1544, 4294901760
    %1645 = vmatpush1.msra.mxu0 %v1644
    %v1646 = vand.u32 %v1547, 4294901760
    %1647 = vmatprep.subr.mxu0 %v1646
    %v1648 = vand.u32 %v1546, 4294901760
    %1649 = vmatpush1.msra.mxu0 %v1648
    %v1650 = vand.u32 %v1549, 4294901760
    %1651 = vmatprep.subr.mxu0 %v1650
    %v1652 = vand.u32 %v1548, 4294901760
    %1653 = vmatpush1.msra.mxu0 %v1652
    %v1654 = vand.u32 %v1551, 4294901760
    %1655 = vmatprep.subr.mxu0 %v1654
    %v1656 = vand.u32 %v1550, 4294901760
    %1657 = vmatpush1.msra.mxu0 %v1656
    %v1658 = vand.u32 %v1553, 4294901760
    %1659 = vmatprep.subr.mxu0 %v1658
    %v1660 = vand.u32 %v1552, 4294901760
    %1661 = vmatpush1.msra.mxu0 %v1660
    %v1662 = vand.u32 %v1555, 4294901760
    %1663 = vmatprep.subr.mxu0 %v1662
    %v1664 = vand.u32 %v1554, 4294901760
    %1665 = vmatpush1.msra.mxu0 %v1664
    %v1666 = vand.u32 %v1557, 4294901760
    %1667 = vmatprep.subr.mxu0 %v1666
    %v1668 = vand.u32 %v1556, 4294901760
    %1669 = vmatpush1.msra.mxu0 %v1668
    %v1670 = vand.u32 %v1559, 4294901760
    %1671 = vmatprep.subr.mxu0 %v1670
    %v1672 = vand.u32 %v1558, 4294901760
    %1673 = vmatpush1.msra.mxu0 %v1672
    %v1674 = vand.u32 %v1561, 4294901760
    %1675 = vmatprep.subr.mxu0 %v1674
    %v1676 = vand.u32 %v1560, 4294901760
    %1677 = vmatpush1.msra.mxu0 %v1676
    %v1678 = vand.u32 %v1563, 4294901760
    %1679 = vmatprep.subr.mxu0 %v1678
    %v1680 = vand.u32 %v1562, 4294901760
    %1681 = vmatpush1.msra.mxu0 %v1680
    %v1682 = vand.u32 %v1565, 4294901760
    %1683 = vmatprep.subr.mxu0 %v1682
    %v1684 = vand.u32 %v1564, 4294901760
    %1685 = vmatpush1.msra.mxu0 %v1684
    %v1686 = vand.u32 %v1567, 4294901760
    %1687 = vmatprep.subr.mxu0 %v1686
    %v1688 = vand.u32 %v1566, 4294901760
    %1689 = vmatpush1.msra.mxu0 %v1688
    %v1690 = vand.u32 %v1569, 4294901760
    %1691 = vmatprep.subr.mxu0 %v1690
    %v1692 = vand.u32 %v1568, 4294901760
    %1693 = vmatpush1.msra.mxu0 %v1692
    %v1694 = vand.u32 %v1571, 4294901760
    %1695 = vmatprep.subr.mxu0 %v1694
    %v1696 = vand.u32 %v1570, 4294901760
    %1697 = vmatpush1.msra.mxu0 %v1696
    %v1698 = vand.u32 %v1573, 4294901760
    %1699 = vmatprep.subr.mxu0 %v1698
    %v1700 = vand.u32 %v1572, 4294901760
    %1701 = vmatpush1.msra.mxu0 %v1700
    %v1702 = vand.u32 %v1575, 4294901760
    %1703 = vmatprep.subr.mxu0 %v1702
    %v1704 = vand.u32 %v1574, 4294901760
    %1705 = vmatpush1.msra.mxu0 %v1704
    %v1706 = vand.u32 %v1577, 4294901760
    %1707 = vmatprep.subr.mxu0 %v1706
    %v1708 = vand.u32 %v1576, 4294901760
    %1709 = vmatpush1.msra.mxu0 %v1708
    %v1710 = vand.u32 %v1579, 4294901760
    %1711 = vmatprep.subr.mxu0 %v1710
    %v1712 = vand.u32 %v1578, 4294901760
    %1713 = vmatpush1.msra.mxu0 %v1712
    %v1714 = vand.u32 %v1581, 4294901760
    %1715 = vmatprep.subr.mxu0 %v1714
    %v1716 = vand.u32 %v1580, 4294901760
    %1717 = vmatpush1.msra.mxu0 %v1716
    %v1718 = vand.u32 %v1583, 4294901760
    %1719 = vmatprep.subr.mxu0 %v1718
    %v1720 = vand.u32 %v1582, 4294901760
    %1721 = vmatpush1.msra.mxu0 %v1720
    %v1722 = vand.u32 %v1585, 4294901760
    %1723 = vmatprep.subr.mxu0 %v1722
    %v1724 = vand.u32 %v1584, 4294901760
    %1725 = vmatpush1.msra.mxu0 %v1724
    %v1726 = vand.u32 %v1521, 4294901760
    %v1727 = vsub.f32 %v1521, %v1726
    %v1728 = vand.u32 %v1727, 4294901760
    %v1729 = vsub.f32 %v1727, %v1728
    %v1730 = vand.u32 %v1729, 4294901760
    %1731 = vmatprep.mubr.f32.mxu0 %v1730
    %v1732 = vand.u32 %v1520, 4294901760
    %v1733 = vsub.f32 %v1520, %v1732
    %v1734 = vand.u32 %v1733, 4294901760
    %v1735 = vsub.f32 %v1733, %v1734
    %v1736 = vand.u32 %v1735, 4294901760
    %1737 = vmatmul.mubr.f32.gmra.mrb[0].mxu0 %v1736
    %v1738 = vpop.f32.mrb[0].mxu0
    %v1739 = vadd.f32 %v1591, %v1738
    %v1740 = vpop.f32.mrb[0].mxu0
    %v1741 = vadd.f32 %v1595, %v1740
    %1742 = vdwg.mxu0
    %v1743 = vand.u32 %v1523, 4294901760
    %v1744 = vsub.f32 %v1523, %v1743
    %v1745 = vand.u32 %v1744, 4294901760
    %v1746 = vsub.f32 %v1744, %v1745
    %v1747 = vand.u32 %v1746, 4294901760
    %1748 = vmatprep.subr.mxu0 %v1747
    %v1749 = vand.u32 %v1522, 4294901760
    %v1750 = vsub.f32 %v1522, %v1749
    %v1751 = vand.u32 %v1750, 4294901760
    %v1752 = vsub.f32 %v1750, %v1751
    %v1753 = vand.u32 %v1752, 4294901760
    %1754 = vmatpush1.msra.mxu0 %v1753
    %v1755 = vand.u32 %v1525, 4294901760
    %v1756 = vsub.f32 %v1525, %v1755
    %v1757 = vand.u32 %v1756, 4294901760
    %v1758 = vsub.f32 %v1756, %v1757
    %v1759 = vand.u32 %v1758, 4294901760
    %1760 = vmatprep.subr.mxu0 %v1759
    %v1761 = vand.u32 %v1524, 4294901760
    %v1762 = vsub.f32 %v1524, %v1761
    %v1763 = vand.u32 %v1762, 4294901760
    %v1764 = vsub.f32 %v1762, %v1763
    %v1765 = vand.u32 %v1764, 4294901760
    %1766 = vmatpush1.msra.mxu0 %v1765
    %v1767 = vand.u32 %v1527, 4294901760
    %v1768 = vsub.f32 %v1527, %v1767
    %v1769 = vand.u32 %v1768, 4294901760
    %v1770 = vsub.f32 %v1768, %v1769
    %v1771 = vand.u32 %v1770, 4294901760
    %1772 = vmatprep.subr.mxu0 %v1771
    %v1773 = vand.u32 %v1526, 4294901760
    %v1774 = vsub.f32 %v1526, %v1773
    %v1775 = vand.u32 %v1774, 4294901760
    %v1776 = vsub.f32 %v1774, %v1775
    %v1777 = vand.u32 %v1776, 4294901760
    %1778 = vmatpush1.msra.mxu0 %v1777
    %v1779 = vand.u32 %v1529, 4294901760
    %v1780 = vsub.f32 %v1529, %v1779
    %v1781 = vand.u32 %v1780, 4294901760
    %v1782 = vsub.f32 %v1780, %v1781
    %v1783 = vand.u32 %v1782, 4294901760
    %1784 = vmatprep.subr.mxu0 %v1783
    %v1785 = vand.u32 %v1528, 4294901760
    %v1786 = vsub.f32 %v1528, %v1785
    %v1787 = vand.u32 %v1786, 4294901760
    %v1788 = vsub.f32 %v1786, %v1787
    %v1789 = vand.u32 %v1788, 4294901760
    %1790 = vmatpush1.msra.mxu0 %v1789
    %v1791 = vand.u32 %v1531, 4294901760
    %v1792 = vsub.f32 %v1531, %v1791
    %v1793 = vand.u32 %v1792, 4294901760
    %v1794 = vsub.f32 %v1792, %v1793
    %v1795 = vand.u32 %v1794, 4294901760
    %1796 = vmatprep.subr.mxu0 %v1795
    %v1797 = vand.u32 %v1530, 4294901760
    %v1798 = vsub.f32 %v1530, %v1797
    %v1799 = vand.u32 %v1798, 4294901760
    %v1800 = vsub.f32 %v1798, %v1799
    %v1801 = vand.u32 %v1800, 4294901760
    %1802 = vmatpush1.msra.mxu0 %v1801
    %v1803 = vand.u32 %v1533, 4294901760
    %v1804 = vsub.f32 %v1533, %v1803
    %v1805 = vand.u32 %v1804, 4294901760
    %v1806 = vsub.f32 %v1804, %v1805
    %v1807 = vand.u32 %v1806, 4294901760
    %1808 = vmatprep.subr.mxu0 %v1807
    %v1809 = vand.u32 %v1532, 4294901760
    %v1810 = vsub.f32 %v1532, %v1809
    %v1811 = vand.u32 %v1810, 4294901760
    %v1812 = vsub.f32 %v1810, %v1811
    %v1813 = vand.u32 %v1812, 4294901760
    %1814 = vmatpush1.msra.mxu0 %v1813
    %v1815 = vand.u32 %v1535, 4294901760
    %v1816 = vsub.f32 %v1535, %v1815
    %v1817 = vand.u32 %v1816, 4294901760
    %v1818 = vsub.f32 %v1816, %v1817
    %v1819 = vand.u32 %v1818, 4294901760
    %1820 = vmatprep.subr.mxu0 %v1819
    %v1821 = vand.u32 %v1534, 4294901760
    %v1822 = vsub.f32 %v1534, %v1821
    %v1823 = vand.u32 %v1822, 4294901760
    %v1824 = vsub.f32 %v1822, %v1823
    %v1825 = vand.u32 %v1824, 4294901760
    %1826 = vmatpush1.msra.mxu0 %v1825
    %v1827 = vand.u32 %v1537, 4294901760
    %v1828 = vsub.f32 %v1537, %v1827
    %v1829 = vand.u32 %v1828, 4294901760
    %v1830 = vsub.f32 %v1828, %v1829
    %v1831 = vand.u32 %v1830, 4294901760
    %1832 = vmatprep.subr.mxu0 %v1831
    %v1833 = vand.u32 %v1536, 4294901760
    %v1834 = vsub.f32 %v1536, %v1833
    %v1835 = vand.u32 %v1834, 4294901760
    %v1836 = vsub.f32 %v1834, %v1835
    %v1837 = vand.u32 %v1836, 4294901760
    %1838 = vmatpush1.msra.mxu0 %v1837
    %v1839 = vand.u32 %v1539, 4294901760
    %v1840 = vsub.f32 %v1539, %v1839
    %v1841 = vand.u32 %v1840, 4294901760
    %v1842 = vsub.f32 %v1840, %v1841
    %v1843 = vand.u32 %v1842, 4294901760
    %1844 = vmatprep.subr.mxu0 %v1843
    %v1845 = vand.u32 %v1538, 4294901760
    %v1846 = vsub.f32 %v1538, %v1845
    %v1847 = vand.u32 %v1846, 4294901760
    %v1848 = vsub.f32 %v1846, %v1847
    %v1849 = vand.u32 %v1848, 4294901760
    %1850 = vmatpush1.msra.mxu0 %v1849
    %v1851 = vand.u32 %v1541, 4294901760
    %v1852 = vsub.f32 %v1541, %v1851
    %v1853 = vand.u32 %v1852, 4294901760
    %v1854 = vsub.f32 %v1852, %v1853
    %v1855 = vand.u32 %v1854, 4294901760
    %1856 = vmatprep.subr.mxu0 %v1855
    %v1857 = vand.u32 %v1540, 4294901760
    %v1858 = vsub.f32 %v1540, %v1857
    %v1859 = vand.u32 %v1858, 4294901760
    %v1860 = vsub.f32 %v1858, %v1859
    %v1861 = vand.u32 %v1860, 4294901760
    %1862 = vmatpush1.msra.mxu0 %v1861
    %v1863 = vand.u32 %v1543, 4294901760
    %v1864 = vsub.f32 %v1543, %v1863
    %v1865 = vand.u32 %v1864, 4294901760
    %v1866 = vsub.f32 %v1864, %v1865
    %v1867 = vand.u32 %v1866, 4294901760
    %1868 = vmatprep.subr.mxu0 %v1867
    %v1869 = vand.u32 %v1542, 4294901760
    %v1870 = vsub.f32 %v1542, %v1869
    %v1871 = vand.u32 %v1870, 4294901760
    %v1872 = vsub.f32 %v1870, %v1871
    %v1873 = vand.u32 %v1872, 4294901760
    %1874 = vmatpush1.msra.mxu0 %v1873
    %v1875 = vand.u32 %v1545, 4294901760
    %v1876 = vsub.f32 %v1545, %v1875
    %v1877 = vand.u32 %v1876, 4294901760
    %v1878 = vsub.f32 %v1876, %v1877
    %v1879 = vand.u32 %v1878, 4294901760
    %1880 = vmatprep.subr.mxu0 %v1879
    %v1881 = vand.u32 %v1544, 4294901760
    %v1882 = vsub.f32 %v1544, %v1881
    %v1883 = vand.u32 %v1882, 4294901760
    %v1884 = vsub.f32 %v1882, %v1883
    %v1885 = vand.u32 %v1884, 4294901760
    %1886 = vmatpush1.msra.mxu0 %v1885
    %v1887 = vand.u32 %v1547, 4294901760
    %v1888 = vsub.f32 %v1547, %v1887
    %v1889 = vand.u32 %v1888, 4294901760
    %v1890 = vsub.f32 %v1888, %v1889
    %v1891 = vand.u32 %v1890, 4294901760
    %1892 = vmatprep.subr.mxu0 %v1891
    %v1893 = vand.u32 %v1546, 4294901760
    %v1894 = vsub.f32 %v1546, %v1893
    %v1895 = vand.u32 %v1894, 4294901760
    %v1896 = vsub.f32 %v1894, %v1895
    %v1897 = vand.u32 %v1896, 4294901760
    %1898 = vmatpush1.msra.mxu0 %v1897
    %v1899 = vand.u32 %v1549, 4294901760
    %v1900 = vsub.f32 %v1549, %v1899
    %v1901 = vand.u32 %v1900, 4294901760
    %v1902 = vsub.f32 %v1900, %v1901
    %v1903 = vand.u32 %v1902, 4294901760
    %1904 = vmatprep.subr.mxu0 %v1903
    %v1905 = vand.u32 %v1548, 4294901760
    %v1906 = vsub.f32 %v1548, %v1905
    %v1907 = vand.u32 %v1906, 4294901760
    %v1908 = vsub.f32 %v1906, %v1907
    %v1909 = vand.u32 %v1908, 4294901760
    %1910 = vmatpush1.msra.mxu0 %v1909
    %v1911 = vand.u32 %v1551, 4294901760
    %v1912 = vsub.f32 %v1551, %v1911
    %v1913 = vand.u32 %v1912, 4294901760
    %v1914 = vsub.f32 %v1912, %v1913
    %v1915 = vand.u32 %v1914, 4294901760
    %1916 = vmatprep.subr.mxu0 %v1915
    %v1917 = vand.u32 %v1550, 4294901760
    %v1918 = vsub.f32 %v1550, %v1917
    %v1919 = vand.u32 %v1918, 4294901760
    %v1920 = vsub.f32 %v1918, %v1919
    %v1921 = vand.u32 %v1920, 4294901760
    %1922 = vmatpush1.msra.mxu0 %v1921
    %v1923 = vand.u32 %v1553, 4294901760
    %v1924 = vsub.f32 %v1553, %v1923
    %v1925 = vand.u32 %v1924, 4294901760
    %v1926 = vsub.f32 %v1924, %v1925
    %v1927 = vand.u32 %v1926, 4294901760
    %1928 = vmatprep.subr.mxu0 %v1927
    %v1929 = vand.u32 %v1552, 4294901760
    %v1930 = vsub.f32 %v1552, %v1929
    %v1931 = vand.u32 %v1930, 4294901760
    %v1932 = vsub.f32 %v1930, %v1931
    %v1933 = vand.u32 %v1932, 4294901760
    %1934 = vmatpush1.msra.mxu0 %v1933
    %v1935 = vand.u32 %v1555, 4294901760
    %v1936 = vsub.f32 %v1555, %v1935
    %v1937 = vand.u32 %v1936, 4294901760
    %v1938 = vsub.f32 %v1936, %v1937
    %v1939 = vand.u32 %v1938, 4294901760
    %1940 = vmatprep.subr.mxu0 %v1939
    %v1941 = vand.u32 %v1554, 4294901760
    %v1942 = vsub.f32 %v1554, %v1941
    %v1943 = vand.u32 %v1942, 4294901760
    %v1944 = vsub.f32 %v1942, %v1943
    %v1945 = vand.u32 %v1944, 4294901760
    %1946 = vmatpush1.msra.mxu0 %v1945
    %v1947 = vand.u32 %v1557, 4294901760
    %v1948 = vsub.f32 %v1557, %v1947
    %v1949 = vand.u32 %v1948, 4294901760
    %v1950 = vsub.f32 %v1948, %v1949
    %v1951 = vand.u32 %v1950, 4294901760
    %1952 = vmatprep.subr.mxu0 %v1951
    %v1953 = vand.u32 %v1556, 4294901760
    %v1954 = vsub.f32 %v1556, %v1953
    %v1955 = vand.u32 %v1954, 4294901760
    %v1956 = vsub.f32 %v1954, %v1955
    %v1957 = vand.u32 %v1956, 4294901760
    %1958 = vmatpush1.msra.mxu0 %v1957
    %v1959 = vand.u32 %v1559, 4294901760
    %v1960 = vsub.f32 %v1559, %v1959
    %v1961 = vand.u32 %v1960, 4294901760
    %v1962 = vsub.f32 %v1960, %v1961
    %v1963 = vand.u32 %v1962, 4294901760
    %1964 = vmatprep.subr.mxu0 %v1963
    %v1965 = vand.u32 %v1558, 4294901760
    %v1966 = vsub.f32 %v1558, %v1965
    %v1967 = vand.u32 %v1966, 4294901760
    %v1968 = vsub.f32 %v1966, %v1967
    %v1969 = vand.u32 %v1968, 4294901760
    %1970 = vmatpush1.msra.mxu0 %v1969
    %v1971 = vand.u32 %v1561, 4294901760
    %v1972 = vsub.f32 %v1561, %v1971
    %v1973 = vand.u32 %v1972, 4294901760
    %v1974 = vsub.f32 %v1972, %v1973
    %v1975 = vand.u32 %v1974, 4294901760
    %1976 = vmatprep.subr.mxu0 %v1975
    %v1977 = vand.u32 %v1560, 4294901760
    %v1978 = vsub.f32 %v1560, %v1977
    %v1979 = vand.u32 %v1978, 4294901760
    %v1980 = vsub.f32 %v1978, %v1979
    %v1981 = vand.u32 %v1980, 4294901760
    %1982 = vmatpush1.msra.mxu0 %v1981
    %v1983 = vand.u32 %v1563, 4294901760
    %v1984 = vsub.f32 %v1563, %v1983
    %v1985 = vand.u32 %v1984, 4294901760
    %v1986 = vsub.f32 %v1984, %v1985
    %v1987 = vand.u32 %v1986, 4294901760
    %1988 = vmatprep.subr.mxu0 %v1987
    %v1989 = vand.u32 %v1562, 4294901760
    %v1990 = vsub.f32 %v1562, %v1989
    %v1991 = vand.u32 %v1990, 4294901760
    %v1992 = vsub.f32 %v1990, %v1991
    %v1993 = vand.u32 %v1992, 4294901760
    %1994 = vmatpush1.msra.mxu0 %v1993
    %v1995 = vand.u32 %v1565, 4294901760
    %v1996 = vsub.f32 %v1565, %v1995
    %v1997 = vand.u32 %v1996, 4294901760
    %v1998 = vsub.f32 %v1996, %v1997
    %v1999 = vand.u32 %v1998, 4294901760
    %2000 = vmatprep.subr.mxu0 %v1999
    %v2001 = vand.u32 %v1564, 4294901760
    %v2002 = vsub.f32 %v1564, %v2001
    %v2003 = vand.u32 %v2002, 4294901760
    %v2004 = vsub.f32 %v2002, %v2003
    %v2005 = vand.u32 %v2004, 4294901760
    %2006 = vmatpush1.msra.mxu0 %v2005
    %v2007 = vand.u32 %v1567, 4294901760
    %v2008 = vsub.f32 %v1567, %v2007
    %v2009 = vand.u32 %v2008, 4294901760
    %v2010 = vsub.f32 %v2008, %v2009
    %v2011 = vand.u32 %v2010, 4294901760
    %2012 = vmatprep.subr.mxu0 %v2011
    %v2013 = vand.u32 %v1566, 4294901760
    %v2014 = vsub.f32 %v1566, %v2013
    %v2015 = vand.u32 %v2014, 4294901760
    %v2016 = vsub.f32 %v2014, %v2015
    %v2017 = vand.u32 %v2016, 4294901760
    %2018 = vmatpush1.msra.mxu0 %v2017
    %v2019 = vand.u32 %v1569, 4294901760
    %v2020 = vsub.f32 %v1569, %v2019
    %v2021 = vand.u32 %v2020, 4294901760
    %v2022 = vsub.f32 %v2020, %v2021
    %v2023 = vand.u32 %v2022, 4294901760
    %2024 = vmatprep.subr.mxu0 %v2023
    %v2025 = vand.u32 %v1568, 4294901760
    %v2026 = vsub.f32 %v1568, %v2025
    %v2027 = vand.u32 %v2026, 4294901760
    %v2028 = vsub.f32 %v2026, %v2027
    %v2029 = vand.u32 %v2028, 4294901760
    %2030 = vmatpush1.msra.mxu0 %v2029
    %v2031 = vand.u32 %v1571, 4294901760
    %v2032 = vsub.f32 %v1571, %v2031
    %v2033 = vand.u32 %v2032, 4294901760
    %v2034 = vsub.f32 %v2032, %v2033
    %v2035 = vand.u32 %v2034, 4294901760
    %2036 = vmatprep.subr.mxu0 %v2035
    %v2037 = vand.u32 %v1570, 4294901760
    %v2038 = vsub.f32 %v1570, %v2037
    %v2039 = vand.u32 %v2038, 4294901760
    %v2040 = vsub.f32 %v2038, %v2039
    %v2041 = vand.u32 %v2040, 4294901760
    %2042 = vmatpush1.msra.mxu0 %v2041
    %v2043 = vand.u32 %v1573, 4294901760
    %v2044 = vsub.f32 %v1573, %v2043
    %v2045 = vand.u32 %v2044, 4294901760
    %v2046 = vsub.f32 %v2044, %v2045
    %v2047 = vand.u32 %v2046, 4294901760
    %2048 = vmatprep.subr.mxu0 %v2047
    %v2049 = vand.u32 %v1572, 4294901760
    %v2050 = vsub.f32 %v1572, %v2049
    %v2051 = vand.u32 %v2050, 4294901760
    %v2052 = vsub.f32 %v2050, %v2051
    %v2053 = vand.u32 %v2052, 4294901760
    %2054 = vmatpush1.msra.mxu0 %v2053
    %v2055 = vand.u32 %v1575, 4294901760
    %v2056 = vsub.f32 %v1575, %v2055
    %v2057 = vand.u32 %v2056, 4294901760
    %v2058 = vsub.f32 %v2056, %v2057
    %v2059 = vand.u32 %v2058, 4294901760
    %2060 = vmatprep.subr.mxu0 %v2059
    %v2061 = vand.u32 %v1574, 4294901760
    %v2062 = vsub.f32 %v1574, %v2061
    %v2063 = vand.u32 %v2062, 4294901760
    %v2064 = vsub.f32 %v2062, %v2063
    %v2065 = vand.u32 %v2064, 4294901760
    %2066 = vmatpush1.msra.mxu0 %v2065
    %v2067 = vand.u32 %v1577, 4294901760
    %v2068 = vsub.f32 %v1577, %v2067
    %v2069 = vand.u32 %v2068, 4294901760
    %v2070 = vsub.f32 %v2068, %v2069
    %v2071 = vand.u32 %v2070, 4294901760
    %2072 = vmatprep.subr.mxu0 %v2071
    %v2073 = vand.u32 %v1576, 4294901760
    %v2074 = vsub.f32 %v1576, %v2073
    %v2075 = vand.u32 %v2074, 4294901760
    %v2076 = vsub.f32 %v2074, %v2075
    %v2077 = vand.u32 %v2076, 4294901760
    %2078 = vmatpush1.msra.mxu0 %v2077
    %v2079 = vand.u32 %v1579, 4294901760
    %v2080 = vsub.f32 %v1579, %v2079
    %v2081 = vand.u32 %v2080, 4294901760
    %v2082 = vsub.f32 %v2080, %v2081
    %v2083 = vand.u32 %v2082, 4294901760
    %2084 = vmatprep.subr.mxu0 %v2083
    %v2085 = vand.u32 %v1578, 4294901760
    %v2086 = vsub.f32 %v1578, %v2085
    %v2087 = vand.u32 %v2086, 4294901760
    %v2088 = vsub.f32 %v2086, %v2087
    %v2089 = vand.u32 %v2088, 4294901760
    %2090 = vmatpush1.msra.mxu0 %v2089
    %v2091 = vand.u32 %v1581, 4294901760
    %v2092 = vsub.f32 %v1581, %v2091
    %v2093 = vand.u32 %v2092, 4294901760
    %v2094 = vsub.f32 %v2092, %v2093
    %v2095 = vand.u32 %v2094, 4294901760
    %2096 = vmatprep.subr.mxu0 %v2095
    %v2097 = vand.u32 %v1580, 4294901760
    %v2098 = vsub.f32 %v1580, %v2097
    %v2099 = vand.u32 %v2098, 4294901760
    %v2100 = vsub.f32 %v2098, %v2099
    %v2101 = vand.u32 %v2100, 4294901760
    %2102 = vmatpush1.msra.mxu0 %v2101
    %v2103 = vand.u32 %v1583, 4294901760
    %v2104 = vsub.f32 %v1583, %v2103
    %v2105 = vand.u32 %v2104, 4294901760
    %v2106 = vsub.f32 %v2104, %v2105
    %v2107 = vand.u32 %v2106, 4294901760
    %2108 = vmatprep.subr.mxu0 %v2107
    %v2109 = vand.u32 %v1582, 4294901760
    %v2110 = vsub.f32 %v1582, %v2109
    %v2111 = vand.u32 %v2110, 4294901760
    %v2112 = vsub.f32 %v2110, %v2111
    %v2113 = vand.u32 %v2112, 4294901760
    %2114 = vmatpush1.msra.mxu0 %v2113
    %v2115 = vand.u32 %v1585, 4294901760
    %v2116 = vsub.f32 %v1585, %v2115
    %v2117 = vand.u32 %v2116, 4294901760
    %v2118 = vsub.f32 %v2116, %v2117
    %v2119 = vand.u32 %v2118, 4294901760
    %2120 = vmatprep.subr.mxu0 %v2119
    %v2121 = vand.u32 %v1584, 4294901760
    %v2122 = vsub.f32 %v1584, %v2121
    %v2123 = vand.u32 %v2122, 4294901760
    %v2124 = vsub.f32 %v2122, %v2123
    %v2125 = vand.u32 %v2124, 4294901760
    %2126 = vmatpush1.msra.mxu0 %v2125
    %v2127 = vand.u32 %v1521, 4294901760
    %2128 = vmatprep.mubr.f32.mxu0 %v2127
    %v2129 = vand.u32 %v1520, 4294901760
    %2130 = vmatmul.mubr.f32.gmra.mrb[0].mxu0 %v2129
    %v2131 = vpop.f32.mrb[0].mxu0
    %v2132 = vadd.f32 %v1739, %v2131
    %v2133 = vpop.f32.mrb[0].mxu0
    %v2134 = vadd.f32 %v1741, %v2133
    %2135 = vdwg.mxu0
    %v2136 = vand.u32 %v1523, 4294901760
    %v2137 = vsub.f32 %v1523, %v2136
    %2138 = vmatprep.subr.mxu0 %v2137
    %v2139 = vand.u32 %v1522, 4294901760
    %v2140 = vsub.f32 %v1522, %v2139
    %2141 = vmatpush1.msra.mxu0 %v2140
    %v2142 = vand.u32 %v1525, 4294901760
    %v2143 = vsub.f32 %v1525, %v2142
    %2144 = vmatprep.subr.mxu0 %v2143
    %v2145 = vand.u32 %v1524, 4294901760
    %v2146 = vsub.f32 %v1524, %v2145
    %2147 = vmatpush1.msra.mxu0 %v2146
    %v2148 = vand.u32 %v1527, 4294901760
    %v2149 = vsub.f32 %v1527, %v2148
    %2150 = vmatprep.subr.mxu0 %v2149
    %v2151 = vand.u32 %v1526, 4294901760
    %v2152 = vsub.f32 %v1526, %v2151
    %2153 = vmatpush1.msra.mxu0 %v2152
    %v2154 = vand.u32 %v1529, 4294901760
    %v2155 = vsub.f32 %v1529, %v2154
    %2156 = vmatprep.subr.mxu0 %v2155
    %v2157 = vand.u32 %v1528, 4294901760
    %v2158 = vsub.f32 %v1528, %v2157
    %2159 = vmatpush1.msra.mxu0 %v2158
    %v2160 = vand.u32 %v1531, 4294901760
    %v2161 = vsub.f32 %v1531, %v2160
    %2162 = vmatprep.subr.mxu0 %v2161
    %v2163 = vand.u32 %v1530, 4294901760
    %v2164 = vsub.f32 %v1530, %v2163
    %2165 = vmatpush1.msra.mxu0 %v2164
    %v2166 = vand.u32 %v1533, 4294901760
    %v2167 = vsub.f32 %v1533, %v2166
    %2168 = vmatprep.subr.mxu0 %v2167
    %v2169 = vand.u32 %v1532, 4294901760
    %v2170 = vsub.f32 %v1532, %v2169
    %2171 = vmatpush1.msra.mxu0 %v2170
    %v2172 = vand.u32 %v1535, 4294901760
    %v2173 = vsub.f32 %v1535, %v2172
    %2174 = vmatprep.subr.mxu0 %v2173
    %v2175 = vand.u32 %v1534, 4294901760
    %v2176 = vsub.f32 %v1534, %v2175
    %2177 = vmatpush1.msra.mxu0 %v2176
    %v2178 = vand.u32 %v1537, 4294901760
    %v2179 = vsub.f32 %v1537, %v2178
    %2180 = vmatprep.subr.mxu0 %v2179
    %v2181 = vand.u32 %v1536, 4294901760
    %v2182 = vsub.f32 %v1536, %v2181
    %2183 = vmatpush1.msra.mxu0 %v2182
    %v2184 = vand.u32 %v1539, 4294901760
    %v2185 = vsub.f32 %v1539, %v2184
    %2186 = vmatprep.subr.mxu0 %v2185
    %v2187 = vand.u32 %v1538, 4294901760
    %v2188 = vsub.f32 %v1538, %v2187
    %2189 = vmatpush1.msra.mxu0 %v2188
    %v2190 = vand.u32 %v1541, 4294901760
    %v2191 = vsub.f32 %v1541, %v2190
    %2192 = vmatprep.subr.mxu0 %v2191
    %v2193 = vand.u32 %v1540, 4294901760
    %v2194 = vsub.f32 %v1540, %v2193
    %2195 = vmatpush1.msra.mxu0 %v2194
    %v2196 = vand.u32 %v1543, 4294901760
    %v2197 = vsub.f32 %v1543, %v2196
    %2198 = vmatprep.subr.mxu0 %v2197
    %v2199 = vand.u32 %v1542, 4294901760
    %v2200 = vsub.f32 %v1542, %v2199
    %2201 = vmatpush1.msra.mxu0 %v2200
    %v2202 = vand.u32 %v1545, 4294901760
    %v2203 = vsub.f32 %v1545, %v2202
    %2204 = vmatprep.subr.mxu0 %v2203
    %v2205 = vand.u32 %v1544, 4294901760
    %v2206 = vsub.f32 %v1544, %v2205
    %2207 = vmatpush1.msra.mxu0 %v2206
    %v2208 = vand.u32 %v1547, 4294901760
    %v2209 = vsub.f32 %v1547, %v2208
    %2210 = vmatprep.subr.mxu0 %v2209
    %v2211 = vand.u32 %v1546, 4294901760
    %v2212 = vsub.f32 %v1546, %v2211
    %2213 = vmatpush1.msra.mxu0 %v2212
    %v2214 = vand.u32 %v1549, 4294901760
    %v2215 = vsub.f32 %v1549, %v2214
    %2216 = vmatprep.subr.mxu0 %v2215
    %v2217 = vand.u32 %v1548, 4294901760
    %v2218 = vsub.f32 %v1548, %v2217
    %2219 = vmatpush1.msra.mxu0 %v2218
    %v2220 = vand.u32 %v1551, 4294901760
    %v2221 = vsub.f32 %v1551, %v2220
    %2222 = vmatprep.subr.mxu0 %v2221
    %v2223 = vand.u32 %v1550, 4294901760
    %v2224 = vsub.f32 %v1550, %v2223
    %2225 = vmatpush1.msra.mxu0 %v2224
    %v2226 = vand.u32 %v1553, 4294901760
    %v2227 = vsub.f32 %v1553, %v2226
    %2228 = vmatprep.subr.mxu0 %v2227
    %v2229 = vand.u32 %v1552, 4294901760
    %v2230 = vsub.f32 %v1552, %v2229
    %2231 = vmatpush1.msra.mxu0 %v2230
    %v2232 = vand.u32 %v1555, 4294901760
    %v2233 = vsub.f32 %v1555, %v2232
    %2234 = vmatprep.subr.mxu0 %v2233
    %v2235 = vand.u32 %v1554, 4294901760
    %v2236 = vsub.f32 %v1554, %v2235
    %2237 = vmatpush1.msra.mxu0 %v2236
    %v2238 = vand.u32 %v1557, 4294901760
    %v2239 = vsub.f32 %v1557, %v2238
    %2240 = vmatprep.subr.mxu0 %v2239
    %v2241 = vand.u32 %v1556, 4294901760
    %v2242 = vsub.f32 %v1556, %v2241
    %2243 = vmatpush1.msra.mxu0 %v2242
    %v2244 = vand.u32 %v1559, 4294901760
    %v2245 = vsub.f32 %v1559, %v2244
    %2246 = vmatprep.subr.mxu0 %v2245
    %v2247 = vand.u32 %v1558, 4294901760
    %v2248 = vsub.f32 %v1558, %v2247
    %2249 = vmatpush1.msra.mxu0 %v2248
    %v2250 = vand.u32 %v1561, 4294901760
    %v2251 = vsub.f32 %v1561, %v2250
    %2252 = vmatprep.subr.mxu0 %v2251
    %v2253 = vand.u32 %v1560, 4294901760
    %v2254 = vsub.f32 %v1560, %v2253
    %2255 = vmatpush1.msra.mxu0 %v2254
    %v2256 = vand.u32 %v1563, 4294901760
    %v2257 = vsub.f32 %v1563, %v2256
    %2258 = vmatprep.subr.mxu0 %v2257
    %v2259 = vand.u32 %v1562, 4294901760
    %v2260 = vsub.f32 %v1562, %v2259
    %2261 = vmatpush1.msra.mxu0 %v2260
    %v2262 = vand.u32 %v1565, 4294901760
    %v2263 = vsub.f32 %v1565, %v2262
    %2264 = vmatprep.subr.mxu0 %v2263
    %v2265 = vand.u32 %v1564, 4294901760
    %v2266 = vsub.f32 %v1564, %v2265
    %2267 = vmatpush1.msra.mxu0 %v2266
    %v2268 = vand.u32 %v1567, 4294901760
    %v2269 = vsub.f32 %v1567, %v2268
    %2270 = vmatprep.subr.mxu0 %v2269
    %v2271 = vand.u32 %v1566, 4294901760
    %v2272 = vsub.f32 %v1566, %v2271
    %2273 = vmatpush1.msra.mxu0 %v2272
    %v2274 = vand.u32 %v1569, 4294901760
    %v2275 = vsub.f32 %v1569, %v2274
    %2276 = vmatprep.subr.mxu0 %v2275
    %v2277 = vand.u32 %v1568, 4294901760
    %v2278 = vsub.f32 %v1568, %v2277
    %2279 = vmatpush1.msra.mxu0 %v2278
    %v2280 = vand.u32 %v1571, 4294901760
    %v2281 = vsub.f32 %v1571, %v2280
    %2282 = vmatprep.subr.mxu0 %v2281
    %v2283 = vand.u32 %v1570, 4294901760
    %v2284 = vsub.f32 %v1570, %v2283
    %2285 = vmatpush1.msra.mxu0 %v2284
    %v2286 = vand.u32 %v1573, 4294901760
    %v2287 = vsub.f32 %v1573, %v2286
    %2288 = vmatprep.subr.mxu0 %v2287
    %v2289 = vand.u32 %v1572, 4294901760
    %v2290 = vsub.f32 %v1572, %v2289
    %2291 = vmatpush1.msra.mxu0 %v2290
    %v2292 = vand.u32 %v1575, 4294901760
    %v2293 = vsub.f32 %v1575, %v2292
    %2294 = vmatprep.subr.mxu0 %v2293
    %v2295 = vand.u32 %v1574, 4294901760
    %v2296 = vsub.f32 %v1574, %v2295
    %2297 = vmatpush1.msra.mxu0 %v2296
    %v2298 = vand.u32 %v1577, 4294901760
    %v2299 = vsub.f32 %v1577, %v2298
    %2300 = vmatprep.subr.mxu0 %v2299
    %v2301 = vand.u32 %v1576, 4294901760
    %v2302 = vsub.f32 %v1576, %v2301
    %2303 = vmatpush1.msra.mxu0 %v2302
    %v2304 = vand.u32 %v1579, 4294901760
    %v2305 = vsub.f32 %v1579, %v2304
    %2306 = vmatprep.subr.mxu0 %v2305
    %v2307 = vand.u32 %v1578, 4294901760
    %v2308 = vsub.f32 %v1578, %v2307
    %2309 = vmatpush1.msra.mxu0 %v2308
    %v2310 = vand.u32 %v1581, 4294901760
    %v2311 = vsub.f32 %v1581, %v2310
    %2312 = vmatprep.subr.mxu0 %v2311
    %v2313 = vand.u32 %v1580, 4294901760
    %v2314 = vsub.f32 %v1580, %v2313
    %2315 = vmatpush1.msra.mxu0 %v2314
    %v2316 = vand.u32 %v1583, 4294901760
    %v2317 = vsub.f32 %v1583, %v2316
    %2318 = vmatprep.subr.mxu0 %v2317
    %v2319 = vand.u32 %v1582, 4294901760
    %v2320 = vsub.f32 %v1582, %v2319
    %2321 = vmatpush1.msra.mxu0 %v2320
    %v2322 = vand.u32 %v1585, 4294901760
    %v2323 = vsub.f32 %v1585, %v2322
    %2324 = vmatprep.subr.mxu0 %v2323
    %v2325 = vand.u32 %v1584, 4294901760
    %v2326 = vsub.f32 %v1584, %v2325
    %2327 = vmatpush1.msra.mxu0 %v2326
    %v2328 = vand.u32 %v1521, 4294901760
    %v2329 = vsub.f32 %v1521, %v2328
    %2330 = vmatprep.mubr.f32.mxu0 %v2329
    %v2331 = vand.u32 %v1520, 4294901760
    %v2332 = vsub.f32 %v1520, %v2331
    %2333 = vmatmul.mubr.f32.gmra.mrb[0].mxu0 %v2332
    %v2334 = vpop.f32.mrb[0].mxu0
    %v2335 = vadd.f32 %v2132, %v2334
    %v2336 = vpop.f32.mrb[0].mxu0
    %v2337 = vadd.f32 %v2134, %v2336
    %2338 = vdwg.mxu0
    %v2339 = vand.u32 %v1523, 4294901760
    %2340 = vmatprep.subr.mxu0 %v2339
    %v2341 = vand.u32 %v1522, 4294901760
    %2342 = vmatpush1.msra.mxu0 %v2341
    %v2343 = vand.u32 %v1525, 4294901760
    %2344 = vmatprep.subr.mxu0 %v2343
    %v2345 = vand.u32 %v1524, 4294901760
    %2346 = vmatpush1.msra.mxu0 %v2345
    %v2347 = vand.u32 %v1527, 4294901760
    %2348 = vmatprep.subr.mxu0 %v2347
    %v2349 = vand.u32 %v1526, 4294901760
    %2350 = vmatpush1.msra.mxu0 %v2349
    %v2351 = vand.u32 %v1529, 4294901760
    %2352 = vmatprep.subr.mxu0 %v2351
    %v2353 = vand.u32 %v1528, 4294901760
    %2354 = vmatpush1.msra.mxu0 %v2353
    %v2355 = vand.u32 %v1531, 4294901760
    %2356 = vmatprep.subr.mxu0 %v2355
    %v2357 = vand.u32 %v1530, 4294901760
    %2358 = vmatpush1.msra.mxu0 %v2357
    %v2359 = vand.u32 %v1533, 4294901760
    %2360 = vmatprep.subr.mxu0 %v2359
    %v2361 = vand.u32 %v1532, 4294901760
    %2362 = vmatpush1.msra.mxu0 %v2361
    %v2363 = vand.u32 %v1535, 4294901760
    %2364 = vmatprep.subr.mxu0 %v2363
    %v2365 = vand.u32 %v1534, 4294901760
    %2366 = vmatpush1.msra.mxu0 %v2365
    %v2367 = vand.u32 %v1537, 4294901760
    %2368 = vmatprep.subr.mxu0 %v2367
    %v2369 = vand.u32 %v1536, 4294901760
    %2370 = vmatpush1.msra.mxu0 %v2369
    %v2371 = vand.u32 %v1539, 4294901760
    %2372 = vmatprep.subr.mxu0 %v2371
    %v2373 = vand.u32 %v1538, 4294901760
    %2374 = vmatpush1.msra.mxu0 %v2373
    %v2375 = vand.u32 %v1541, 4294901760
    %2376 = vmatprep.subr.mxu0 %v2375
    %v2377 = vand.u32 %v1540, 4294901760
    %2378 = vmatpush1.msra.mxu0 %v2377
    %v2379 = vand.u32 %v1543, 4294901760
    %2380 = vmatprep.subr.mxu0 %v2379
    %v2381 = vand.u32 %v1542, 4294901760
    %2382 = vmatpush1.msra.mxu0 %v2381
    %v2383 = vand.u32 %v1545, 4294901760
    %2384 = vmatprep.subr.mxu0 %v2383
    %v2385 = vand.u32 %v1544, 4294901760
    %2386 = vmatpush1.msra.mxu0 %v2385
    %v2387 = vand.u32 %v1547, 4294901760
    %2388 = vmatprep.subr.mxu0 %v2387
    %v2389 = vand.u32 %v1546, 4294901760
    %2390 = vmatpush1.msra.mxu0 %v2389
    %v2391 = vand.u32 %v1549, 4294901760
    %2392 = vmatprep.subr.mxu0 %v2391
    %v2393 = vand.u32 %v1548, 4294901760
    %2394 = vmatpush1.msra.mxu0 %v2393
    %v2395 = vand.u32 %v1551, 4294901760
    %2396 = vmatprep.subr.mxu0 %v2395
    %v2397 = vand.u32 %v1550, 4294901760
    %2398 = vmatpush1.msra.mxu0 %v2397
    %v2399 = vand.u32 %v1553, 4294901760
    %2400 = vmatprep.subr.mxu0 %v2399
    %v2401 = vand.u32 %v1552, 4294901760
    %2402 = vmatpush1.msra.mxu0 %v2401
    %v2403 = vand.u32 %v1555, 4294901760
    %2404 = vmatprep.subr.mxu0 %v2403
    %v2405 = vand.u32 %v1554, 4294901760
    %2406 = vmatpush1.msra.mxu0 %v2405
    %v2407 = vand.u32 %v1557, 4294901760
    %2408 = vmatprep.subr.mxu0 %v2407
    %v2409 = vand.u32 %v1556, 4294901760
    %2410 = vmatpush1.msra.mxu0 %v2409
    %v2411 = vand.u32 %v1559, 4294901760
    %2412 = vmatprep.subr.mxu0 %v2411
    %v2413 = vand.u32 %v1558, 4294901760
    %2414 = vmatpush1.msra.mxu0 %v2413
    %v2415 = vand.u32 %v1561, 4294901760
    %2416 = vmatprep.subr.mxu0 %v2415
    %v2417 = vand.u32 %v1560, 4294901760
    %2418 = vmatpush1.msra.mxu0 %v2417
    %v2419 = vand.u32 %v1563, 4294901760
    %2420 = vmatprep.subr.mxu0 %v2419
    %v2421 = vand.u32 %v1562, 4294901760
    %2422 = vmatpush1.msra.mxu0 %v2421
    %v2423 = vand.u32 %v1565, 4294901760
    %2424 = vmatprep.subr.mxu0 %v2423
    %v2425 = vand.u32 %v1564, 4294901760
    %2426 = vmatpush1.msra.mxu0 %v2425
    %v2427 = vand.u32 %v1567, 4294901760
    %2428 = vmatprep.subr.mxu0 %v2427
    %v2429 = vand.u32 %v1566, 4294901760
    %2430 = vmatpush1.msra.mxu0 %v2429
    %v2431 = vand.u32 %v1569, 4294901760
    %2432 = vmatprep.subr.mxu0 %v2431
    %v2433 = vand.u32 %v1568, 4294901760
    %2434 = vmatpush1.msra.mxu0 %v2433
    %v2435 = vand.u32 %v1571, 4294901760
    %2436 = vmatprep.subr.mxu0 %v2435
    %v2437 = vand.u32 %v1570, 4294901760
    %2438 = vmatpush1.msra.mxu0 %v2437
    %v2439 = vand.u32 %v1573, 4294901760
    %2440 = vmatprep.subr.mxu0 %v2439
    %v2441 = vand.u32 %v1572, 4294901760
    %2442 = vmatpush1.msra.mxu0 %v2441
    %v2443 = vand.u32 %v1575, 4294901760
    %2444 = vmatprep.subr.mxu0 %v2443
    %v2445 = vand.u32 %v1574, 4294901760
    %2446 = vmatpush1.msra.mxu0 %v2445
    %v2447 = vand.u32 %v1577, 4294901760
    %2448 = vmatprep.subr.mxu0 %v2447
    %v2449 = vand.u32 %v1576, 4294901760
    %2450 = vmatpush1.msra.mxu0 %v2449
    %v2451 = vand.u32 %v1579, 4294901760
    %2452 = vmatprep.subr.mxu0 %v2451
    %v2453 = vand.u32 %v1578, 4294901760
    %2454 = vmatpush1.msra.mxu0 %v2453
    %v2455 = vand.u32 %v1581, 4294901760
    %2456 = vmatprep.subr.mxu0 %v2455
    %v2457 = vand.u32 %v1580, 4294901760
    %2458 = vmatpush1.msra.mxu0 %v2457
    %v2459 = vand.u32 %v1583, 4294901760
    %2460 = vmatprep.subr.mxu0 %v2459
    %v2461 = vand.u32 %v1582, 4294901760
    %2462 = vmatpush1.msra.mxu0 %v2461
    %v2463 = vand.u32 %v1585, 4294901760
    %2464 = vmatprep.subr.mxu0 %v2463
    %v2465 = vand.u32 %v1584, 4294901760
    %2466 = vmatpush1.msra.mxu0 %v2465
    %v2467 = vand.u32 %v1521, 4294901760
    %v2468 = vsub.f32 %v1521, %v2467
    %v2469 = vand.u32 %v2468, 4294901760
    %2470 = vmatprep.mubr.f32.mxu0 %v2469
    %v2471 = vand.u32 %v1520, 4294901760
    %v2472 = vsub.f32 %v1520, %v2471
    %v2473 = vand.u32 %v2472, 4294901760
    %2474 = vmatmul.mubr.f32.gmra.mrb[0].mxu0 %v2473
    %v2475 = vpop.f32.mrb[0].mxu0
    %v2476 = vadd.f32 %v2335, %v2475
    %v2477 = vpop.f32.mrb[0].mxu0
    %v2478 = vadd.f32 %v2337, %v2477
    %2479 = vdwg.mxu0
    %v2480 = vand.u32 %v1523, 4294901760
    %v2481 = vsub.f32 %v1523, %v2480
    %v2482 = vand.u32 %v2481, 4294901760
    %2483 = vmatprep.subr.mxu0 %v2482
    %v2484 = vand.u32 %v1522, 4294901760
    %v2485 = vsub.f32 %v1522, %v2484
    %v2486 = vand.u32 %v2485, 4294901760
    %2487 = vmatpush1.msra.mxu0 %v2486
    %v2488 = vand.u32 %v1525, 4294901760
    %v2489 = vsub.f32 %v1525, %v2488
    %v2490 = vand.u32 %v2489, 4294901760
    %2491 = vmatprep.subr.mxu0 %v2490
    %v2492 = vand.u32 %v1524, 4294901760
    %v2493 = vsub.f32 %v1524, %v2492
    %v2494 = vand.u32 %v2493, 4294901760
    %2495 = vmatpush1.msra.mxu0 %v2494
    %v2496 = vand.u32 %v1527, 4294901760
    %v2497 = vsub.f32 %v1527, %v2496
    %v2498 = vand.u32 %v2497, 4294901760
    %2499 = vmatprep.subr.mxu0 %v2498
    %v2500 = vand.u32 %v1526, 4294901760
    %v2501 = vsub.f32 %v1526, %v2500
    %v2502 = vand.u32 %v2501, 4294901760
    %2503 = vmatpush1.msra.mxu0 %v2502
    %v2504 = vand.u32 %v1529, 4294901760
    %v2505 = vsub.f32 %v1529, %v2504
    %v2506 = vand.u32 %v2505, 4294901760
    %2507 = vmatprep.subr.mxu0 %v2506
    %v2508 = vand.u32 %v1528, 4294901760
    %v2509 = vsub.f32 %v1528, %v2508
    %v2510 = vand.u32 %v2509, 4294901760
    %2511 = vmatpush1.msra.mxu0 %v2510
    %v2512 = vand.u32 %v1531, 4294901760
    %v2513 = vsub.f32 %v1531, %v2512
    %v2514 = vand.u32 %v2513, 4294901760
    %2515 = vmatprep.subr.mxu0 %v2514
    %v2516 = vand.u32 %v1530, 4294901760
    %v2517 = vsub.f32 %v1530, %v2516
    %v2518 = vand.u32 %v2517, 4294901760
    %2519 = vmatpush1.msra.mxu0 %v2518
    %v2520 = vand.u32 %v1533, 4294901760
    %v2521 = vsub.f32 %v1533, %v2520
    %v2522 = vand.u32 %v2521, 4294901760
    %2523 = vmatprep.subr.mxu0 %v2522
    %v2524 = vand.u32 %v1532, 4294901760
    %v2525 = vsub.f32 %v1532, %v2524
    %v2526 = vand.u32 %v2525, 4294901760
    %2527 = vmatpush1.msra.mxu0 %v2526
    %v2528 = vand.u32 %v1535, 4294901760
    %v2529 = vsub.f32 %v1535, %v2528
    %v2530 = vand.u32 %v2529, 4294901760
    %2531 = vmatprep.subr.mxu0 %v2530
    %v2532 = vand.u32 %v1534, 4294901760
    %v2533 = vsub.f32 %v1534, %v2532
    %v2534 = vand.u32 %v2533, 4294901760
    %2535 = vmatpush1.msra.mxu0 %v2534
    %v2536 = vand.u32 %v1537, 4294901760
    %v2537 = vsub.f32 %v1537, %v2536
    %v2538 = vand.u32 %v2537, 4294901760
    %2539 = vmatprep.subr.mxu0 %v2538
    %v2540 = vand.u32 %v1536, 4294901760
    %v2541 = vsub.f32 %v1536, %v2540
    %v2542 = vand.u32 %v2541, 4294901760
    %2543 = vmatpush1.msra.mxu0 %v2542
    %v2544 = vand.u32 %v1539, 4294901760
    %v2545 = vsub.f32 %v1539, %v2544
    %v2546 = vand.u32 %v2545, 4294901760
    %2547 = vmatprep.subr.mxu0 %v2546
    %v2548 = vand.u32 %v1538, 4294901760
    %v2549 = vsub.f32 %v1538, %v2548
    %v2550 = vand.u32 %v2549, 4294901760
    %2551 = vmatpush1.msra.mxu0 %v2550
    %v2552 = vand.u32 %v1541, 4294901760
    %v2553 = vsub.f32 %v1541, %v2552
    %v2554 = vand.u32 %v2553, 4294901760
    %2555 = vmatprep.subr.mxu0 %v2554
    %v2556 = vand.u32 %v1540, 4294901760
    %v2557 = vsub.f32 %v1540, %v2556
    %v2558 = vand.u32 %v2557, 4294901760
    %2559 = vmatpush1.msra.mxu0 %v2558
    %v2560 = vand.u32 %v1543, 4294901760
    %v2561 = vsub.f32 %v1543, %v2560
    %v2562 = vand.u32 %v2561, 4294901760
    %2563 = vmatprep.subr.mxu0 %v2562
    %v2564 = vand.u32 %v1542, 4294901760
    %v2565 = vsub.f32 %v1542, %v2564
    %v2566 = vand.u32 %v2565, 4294901760
    %2567 = vmatpush1.msra.mxu0 %v2566
    %v2568 = vand.u32 %v1545, 4294901760
    %v2569 = vsub.f32 %v1545, %v2568
    %v2570 = vand.u32 %v2569, 4294901760
    %2571 = vmatprep.subr.mxu0 %v2570
    %v2572 = vand.u32 %v1544, 4294901760
    %v2573 = vsub.f32 %v1544, %v2572
    %v2574 = vand.u32 %v2573, 4294901760
    %2575 = vmatpush1.msra.mxu0 %v2574
    %v2576 = vand.u32 %v1547, 4294901760
    %v2577 = vsub.f32 %v1547, %v2576
    %v2578 = vand.u32 %v2577, 4294901760
    %2579 = vmatprep.subr.mxu0 %v2578
    %v2580 = vand.u32 %v1546, 4294901760
    %v2581 = vsub.f32 %v1546, %v2580
    %v2582 = vand.u32 %v2581, 4294901760
    %2583 = vmatpush1.msra.mxu0 %v2582
    %v2584 = vand.u32 %v1549, 4294901760
    %v2585 = vsub.f32 %v1549, %v2584
    %v2586 = vand.u32 %v2585, 4294901760
    %2587 = vmatprep.subr.mxu0 %v2586
    %v2588 = vand.u32 %v1548, 4294901760
    %v2589 = vsub.f32 %v1548, %v2588
    %v2590 = vand.u32 %v2589, 4294901760
    %2591 = vmatpush1.msra.mxu0 %v2590
    %v2592 = vand.u32 %v1551, 4294901760
    %v2593 = vsub.f32 %v1551, %v2592
    %v2594 = vand.u32 %v2593, 4294901760
    %2595 = vmatprep.subr.mxu0 %v2594
    %v2596 = vand.u32 %v1550, 4294901760
    %v2597 = vsub.f32 %v1550, %v2596
    %v2598 = vand.u32 %v2597, 4294901760
    %2599 = vmatpush1.msra.mxu0 %v2598
    %v2600 = vand.u32 %v1553, 4294901760
    %v2601 = vsub.f32 %v1553, %v2600
    %v2602 = vand.u32 %v2601, 4294901760
    %2603 = vmatprep.subr.mxu0 %v2602
    %v2604 = vand.u32 %v1552, 4294901760
    %v2605 = vsub.f32 %v1552, %v2604
    %v2606 = vand.u32 %v2605, 4294901760
    %2607 = vmatpush1.msra.mxu0 %v2606
    %v2608 = vand.u32 %v1555, 4294901760
    %v2609 = vsub.f32 %v1555, %v2608
    %v2610 = vand.u32 %v2609, 4294901760
    %2611 = vmatprep.subr.mxu0 %v2610
    %v2612 = vand.u32 %v1554, 4294901760
    %v2613 = vsub.f32 %v1554, %v2612
    %v2614 = vand.u32 %v2613, 4294901760
    %2615 = vmatpush1.msra.mxu0 %v2614
    %v2616 = vand.u32 %v1557, 4294901760
    %v2617 = vsub.f32 %v1557, %v2616
    %v2618 = vand.u32 %v2617, 4294901760
    %2619 = vmatprep.subr.mxu0 %v2618
    %v2620 = vand.u32 %v1556, 4294901760
    %v2621 = vsub.f32 %v1556, %v2620
    %v2622 = vand.u32 %v2621, 4294901760
    %2623 = vmatpush1.msra.mxu0 %v2622
    %v2624 = vand.u32 %v1559, 4294901760
    %v2625 = vsub.f32 %v1559, %v2624
    %v2626 = vand.u32 %v2625, 4294901760
    %2627 = vmatprep.subr.mxu0 %v2626
    %v2628 = vand.u32 %v1558, 4294901760
    %v2629 = vsub.f32 %v1558, %v2628
    %v2630 = vand.u32 %v2629, 4294901760
    %2631 = vmatpush1.msra.mxu0 %v2630
    %v2632 = vand.u32 %v1561, 4294901760
    %v2633 = vsub.f32 %v1561, %v2632
    %v2634 = vand.u32 %v2633, 4294901760
    %2635 = vmatprep.subr.mxu0 %v2634
    %v2636 = vand.u32 %v1560, 4294901760
    %v2637 = vsub.f32 %v1560, %v2636
    %v2638 = vand.u32 %v2637, 4294901760
    %2639 = vmatpush1.msra.mxu0 %v2638
    %v2640 = vand.u32 %v1563, 4294901760
    %v2641 = vsub.f32 %v1563, %v2640
    %v2642 = vand.u32 %v2641, 4294901760
    %2643 = vmatprep.subr.mxu0 %v2642
    %v2644 = vand.u32 %v1562, 4294901760
    %v2645 = vsub.f32 %v1562, %v2644
    %v2646 = vand.u32 %v2645, 4294901760
    %2647 = vmatpush1.msra.mxu0 %v2646
    %v2648 = vand.u32 %v1565, 4294901760
    %v2649 = vsub.f32 %v1565, %v2648
    %v2650 = vand.u32 %v2649, 4294901760
    %2651 = vmatprep.subr.mxu0 %v2650
    %v2652 = vand.u32 %v1564, 4294901760
    %v2653 = vsub.f32 %v1564, %v2652
    %v2654 = vand.u32 %v2653, 4294901760
    %2655 = vmatpush1.msra.mxu0 %v2654
    %v2656 = vand.u32 %v1567, 4294901760
    %v2657 = vsub.f32 %v1567, %v2656
    %v2658 = vand.u32 %v2657, 4294901760
    %2659 = vmatprep.subr.mxu0 %v2658
    %v2660 = vand.u32 %v1566, 4294901760
    %v2661 = vsub.f32 %v1566, %v2660
    %v2662 = vand.u32 %v2661, 4294901760
    %2663 = vmatpush1.msra.mxu0 %v2662
    %v2664 = vand.u32 %v1569, 4294901760
    %v2665 = vsub.f32 %v1569, %v2664
    %v2666 = vand.u32 %v2665, 4294901760
    %2667 = vmatprep.subr.mxu0 %v2666
    %v2668 = vand.u32 %v1568, 4294901760
    %v2669 = vsub.f32 %v1568, %v2668
    %v2670 = vand.u32 %v2669, 4294901760
    %2671 = vmatpush1.msra.mxu0 %v2670
    %v2672 = vand.u32 %v1571, 4294901760
    %v2673 = vsub.f32 %v1571, %v2672
    %v2674 = vand.u32 %v2673, 4294901760
    %2675 = vmatprep.subr.mxu0 %v2674
    %v2676 = vand.u32 %v1570, 4294901760
    %v2677 = vsub.f32 %v1570, %v2676
    %v2678 = vand.u32 %v2677, 4294901760
    %2679 = vmatpush1.msra.mxu0 %v2678
    %v2680 = vand.u32 %v1573, 4294901760
    %v2681 = vsub.f32 %v1573, %v2680
    %v2682 = vand.u32 %v2681, 4294901760
    %2683 = vmatprep.subr.mxu0 %v2682
    %v2684 = vand.u32 %v1572, 4294901760
    %v2685 = vsub.f32 %v1572, %v2684
    %v2686 = vand.u32 %v2685, 4294901760
    %2687 = vmatpush1.msra.mxu0 %v2686
    %v2688 = vand.u32 %v1575, 4294901760
    %v2689 = vsub.f32 %v1575, %v2688
    %v2690 = vand.u32 %v2689, 4294901760
    %2691 = vmatprep.subr.mxu0 %v2690
    %v2692 = vand.u32 %v1574, 4294901760
    %v2693 = vsub.f32 %v1574, %v2692
    %v2694 = vand.u32 %v2693, 4294901760
    %2695 = vmatpush1.msra.mxu0 %v2694
    %v2696 = vand.u32 %v1577, 4294901760
    %v2697 = vsub.f32 %v1577, %v2696
    %v2698 = vand.u32 %v2697, 4294901760
    %2699 = vmatprep.subr.mxu0 %v2698
    %v2700 = vand.u32 %v1576, 4294901760
    %v2701 = vsub.f32 %v1576, %v2700
    %v2702 = vand.u32 %v2701, 4294901760
    %2703 = vmatpush1.msra.mxu0 %v2702
    %v2704 = vand.u32 %v1579, 4294901760
    %v2705 = vsub.f32 %v1579, %v2704
    %v2706 = vand.u32 %v2705, 4294901760
    %2707 = vmatprep.subr.mxu0 %v2706
    %v2708 = vand.u32 %v1578, 4294901760
    %v2709 = vsub.f32 %v1578, %v2708
    %v2710 = vand.u32 %v2709, 4294901760
    %2711 = vmatpush1.msra.mxu0 %v2710
    %v2712 = vand.u32 %v1581, 4294901760
    %v2713 = vsub.f32 %v1581, %v2712
    %v2714 = vand.u32 %v2713, 4294901760
    %2715 = vmatprep.subr.mxu0 %v2714
    %v2716 = vand.u32 %v1580, 4294901760
    %v2717 = vsub.f32 %v1580, %v2716
    %v2718 = vand.u32 %v2717, 4294901760
    %2719 = vmatpush1.msra.mxu0 %v2718
    %v2720 = vand.u32 %v1583, 4294901760
    %v2721 = vsub.f32 %v1583, %v2720
    %v2722 = vand.u32 %v2721, 4294901760
    %2723 = vmatprep.subr.mxu0 %v2722
    %v2724 = vand.u32 %v1582, 4294901760
    %v2725 = vsub.f32 %v1582, %v2724
    %v2726 = vand.u32 %v2725, 4294901760
    %2727 = vmatpush1.msra.mxu0 %v2726
    %v2728 = vand.u32 %v1585, 4294901760
    %v2729 = vsub.f32 %v1585, %v2728
    %v2730 = vand.u32 %v2729, 4294901760
    %2731 = vmatprep.subr.mxu0 %v2730
    %v2732 = vand.u32 %v1584, 4294901760
    %v2733 = vsub.f32 %v1584, %v2732
    %v2734 = vand.u32 %v2733, 4294901760
    %2735 = vmatpush1.msra.mxu0 %v2734
    %v2736 = vand.u32 %v1521, 4294901760
    %2737 = vmatprep.mubr.f32.mxu0 %v2736
    %v2738 = vand.u32 %v1520, 4294901760
    %2739 = vmatmul.mubr.f32.gmra.mrb[0].mxu0 %v2738
    %v2740 = vpop.f32.mrb[0].mxu0
    %v2741 = vadd.f32 %v2476, %v2740
    %v2742 = vpop.f32.mrb[0].mxu0
    %v2743 = vadd.f32 %v2478, %v2742
    %2744 = vdwg.mxu0
    %v2745 = vand.u32 %v1523, 4294901760
    %2746 = vmatprep.subr.mxu0 %v2745
    %v2747 = vand.u32 %v1522, 4294901760
    %2748 = vmatpush1.msra.mxu0 %v2747
    %v2749 = vand.u32 %v1525, 4294901760
    %2750 = vmatprep.subr.mxu0 %v2749
    %v2751 = vand.u32 %v1524, 4294901760
    %2752 = vmatpush1.msra.mxu0 %v2751
    %v2753 = vand.u32 %v1527, 4294901760
    %2754 = vmatprep.subr.mxu0 %v2753
    %v2755 = vand.u32 %v1526, 4294901760
    %2756 = vmatpush1.msra.mxu0 %v2755
    %v2757 = vand.u32 %v1529, 4294901760
    %2758 = vmatprep.subr.mxu0 %v2757
    %v2759 = vand.u32 %v1528, 4294901760
    %2760 = vmatpush1.msra.mxu0 %v2759
    %v2761 = vand.u32 %v1531, 4294901760
    %2762 = vmatprep.subr.mxu0 %v2761
    %v2763 = vand.u32 %v1530, 4294901760
    %2764 = vmatpush1.msra.mxu0 %v2763
    %v2765 = vand.u32 %v1533, 4294901760
    %2766 = vmatprep.subr.mxu0 %v2765
    %v2767 = vand.u32 %v1532, 4294901760
    %2768 = vmatpush1.msra.mxu0 %v2767
    %v2769 = vand.u32 %v1535, 4294901760
    %2770 = vmatprep.subr.mxu0 %v2769
    %v2771 = vand.u32 %v1534, 4294901760
    %2772 = vmatpush1.msra.mxu0 %v2771
    %v2773 = vand.u32 %v1537, 4294901760
    %2774 = vmatprep.subr.mxu0 %v2773
    %v2775 = vand.u32 %v1536, 4294901760
    %2776 = vmatpush1.msra.mxu0 %v2775
    %v2777 = vand.u32 %v1539, 4294901760
    %2778 = vmatprep.subr.mxu0 %v2777
    %v2779 = vand.u32 %v1538, 4294901760
    %2780 = vmatpush1.msra.mxu0 %v2779
    %v2781 = vand.u32 %v1541, 4294901760
    %2782 = vmatprep.subr.mxu0 %v2781
    %v2783 = vand.u32 %v1540, 4294901760
    %2784 = vmatpush1.msra.mxu0 %v2783
    %v2785 = vand.u32 %v1543, 4294901760
    %2786 = vmatprep.subr.mxu0 %v2785
    %v2787 = vand.u32 %v1542, 4294901760
    %2788 = vmatpush1.msra.mxu0 %v2787
    %v2789 = vand.u32 %v1545, 4294901760
    %2790 = vmatprep.subr.mxu0 %v2789
    %v2791 = vand.u32 %v1544, 4294901760
    %2792 = vmatpush1.msra.mxu0 %v2791
    %v2793 = vand.u32 %v1547, 4294901760
    %2794 = vmatprep.subr.mxu0 %v2793
    %v2795 = vand.u32 %v1546, 4294901760
    %2796 = vmatpush1.msra.mxu0 %v2795
    %v2797 = vand.u32 %v1549, 4294901760
    %2798 = vmatprep.subr.mxu0 %v2797
    %v2799 = vand.u32 %v1548, 4294901760
    %2800 = vmatpush1.msra.mxu0 %v2799
    %v2801 = vand.u32 %v1551, 4294901760
    %2802 = vmatprep.subr.mxu0 %v2801
    %v2803 = vand.u32 %v1550, 4294901760
    %2804 = vmatpush1.msra.mxu0 %v2803
    %v2805 = vand.u32 %v1553, 4294901760
    %2806 = vmatprep.subr.mxu0 %v2805
    %v2807 = vand.u32 %v1552, 4294901760
    %2808 = vmatpush1.msra.mxu0 %v2807
    %v2809 = vand.u32 %v1555, 4294901760
    %2810 = vmatprep.subr.mxu0 %v2809
    %v2811 = vand.u32 %v1554, 4294901760
    %2812 = vmatpush1.msra.mxu0 %v2811
    %v2813 = vand.u32 %v1557, 4294901760
    %2814 = vmatprep.subr.mxu0 %v2813
    %v2815 = vand.u32 %v1556, 4294901760
    %2816 = vmatpush1.msra.mxu0 %v2815
    %v2817 = vand.u32 %v1559, 4294901760
    %2818 = vmatprep.subr.mxu0 %v2817
    %v2819 = vand.u32 %v1558, 4294901760
    %2820 = vmatpush1.msra.mxu0 %v2819
    %v2821 = vand.u32 %v1561, 4294901760
    %2822 = vmatprep.subr.mxu0 %v2821
    %v2823 = vand.u32 %v1560, 4294901760
    %2824 = vmatpush1.msra.mxu0 %v2823
    %v2825 = vand.u32 %v1563, 4294901760
    %2826 = vmatprep.subr.mxu0 %v2825
    %v2827 = vand.u32 %v1562, 4294901760
    %2828 = vmatpush1.msra.mxu0 %v2827
    %v2829 = vand.u32 %v1565, 4294901760
    %2830 = vmatprep.subr.mxu0 %v2829
    %v2831 = vand.u32 %v1564, 4294901760
    %2832 = vmatpush1.msra.mxu0 %v2831
    %v2833 = vand.u32 %v1567, 4294901760
    %2834 = vmatprep.subr.mxu0 %v2833
    %v2835 = vand.u32 %v1566, 4294901760
    %2836 = vmatpush1.msra.mxu0 %v2835
    %v2837 = vand.u32 %v1569, 4294901760
    %2838 = vmatprep.subr.mxu0 %v2837
    %v2839 = vand.u32 %v1568, 4294901760
    %2840 = vmatpush1.msra.mxu0 %v2839
    %v2841 = vand.u32 %v1571, 4294901760
    %2842 = vmatprep.subr.mxu0 %v2841
    %v2843 = vand.u32 %v1570, 4294901760
    %2844 = vmatpush1.msra.mxu0 %v2843
    %v2845 = vand.u32 %v1573, 4294901760
    %2846 = vmatprep.subr.mxu0 %v2845
    %v2847 = vand.u32 %v1572, 4294901760
    %2848 = vmatpush1.msra.mxu0 %v2847
    %v2849 = vand.u32 %v1575, 4294901760
    %2850 = vmatprep.subr.mxu0 %v2849
    %v2851 = vand.u32 %v1574, 4294901760
    %2852 = vmatpush1.msra.mxu0 %v2851
    %v2853 = vand.u32 %v1577, 4294901760
    %2854 = vmatprep.subr.mxu0 %v2853
    %v2855 = vand.u32 %v1576, 4294901760
    %2856 = vmatpush1.msra.mxu0 %v2855
    %v2857 = vand.u32 %v1579, 4294901760
    %2858 = vmatprep.subr.mxu0 %v2857
    %v2859 = vand.u32 %v1578, 4294901760
    %2860 = vmatpush1.msra.mxu0 %v2859
    %v2861 = vand.u32 %v1581, 4294901760
    %2862 = vmatprep.subr.mxu0 %v2861
    %v2863 = vand.u32 %v1580, 4294901760
    %2864 = vmatpush1.msra.mxu0 %v2863
    %v2865 = vand.u32 %v1583, 4294901760
    %2866 = vmatprep.subr.mxu0 %v2865
    %v2867 = vand.u32 %v1582, 4294901760
    %2868 = vmatpush1.msra.mxu0 %v2867
    %v2869 = vand.u32 %v1585, 4294901760
    %2870 = vmatprep.subr.mxu0 %v2869
    %v2871 = vand.u32 %v1584, 4294901760
    %2872 = vmatpush1.msra.mxu0 %v2871
    %v2873 = vand.u32 %v1521, 4294901760
    %2874 = vmatprep.mubr.f32.mxu0 %v2873
    %v2875 = vand.u32 %v1520, 4294901760
    %2876 = vmatmul.mubr.f32.gmra.mrb[0].mxu0 %v2875
    %v2877 = vpop.f32.mrb[0].mxu0
    %v2878 = vadd.f32 %v2741, %v2877
    %v2879 = vpop.f32.mrb[0].mxu0
    %v2880 = vadd.f32 %v2743, %v2879
    %2881 = vdwg.mxu0
    %v2882 = vmax.f32 %v2878, 0.0
    %v2883 = vmax.f32 %v2880, 0.0
    %v2884 = vld [vmem:[%s7] sm:$0xff]
    %v2885 = vld [vmem:[%s7 + $0x8] sm:$0xff]
    %v2886 = vld [vmem:[%s7 + $0x10] sm:$0xff]
    %v2887 = vld [vmem:[%s7 + $0x18] sm:$0xff]
    %v2888 = vld [vmem:[%s7 + $0x20] sm:$0xff]
    %v2889 = vld [vmem:[%s7 + $0x28] sm:$0xff]
    %v2890 = vld [vmem:[%s7 + $0x30] sm:$0xff]
    %v2891 = vld [vmem:[%s7 + $0x38] sm:$0xff]
    %v2892 = vld [vmem:[%s7 + $0x40] sm:$0xff]
    %v2893 = vld [vmem:[%s7 + $0x48] sm:$0xff]
    %v2894 = vld [vmem:[%s7 + $0x50] sm:$0xff]
    %v2895 = vld [vmem:[%s7 + $0x58] sm:$0xff]
    %v2896 = vld [vmem:[%s7 + $0x60] sm:$0xff]
    %v2897 = vld [vmem:[%s7 + $0x68] sm:$0xff]
    %v2898 = vld [vmem:[%s7 + $0x70] sm:$0xff]
    %v2899 = vld [vmem:[%s7 + $0x78] sm:$0xff]
    %v2900 = vld [vmem:[%s7 + $0x80] sm:$0xff]
    %v2901 = vld [vmem:[%s7 + $0x88] sm:$0xff]
    %v2902 = vld [vmem:[%s7 + $0x90] sm:$0xff]
    %v2903 = vld [vmem:[%s7 + $0x98] sm:$0xff]
    %v2904 = vld [vmem:[%s7 + $0xa0] sm:$0xff]
    %v2905 = vld [vmem:[%s7 + $0xa8] sm:$0xff]
    %v2906 = vld [vmem:[%s7 + $0xb0] sm:$0xff]
    %v2907 = vld [vmem:[%s7 + $0xb8] sm:$0xff]
    %v2908 = vld [vmem:[%s7 + $0xc0] sm:$0xff]
    %v2909 = vld [vmem:[%s7 + $0xc8] sm:$0xff]
    %v2910 = vld [vmem:[%s7 + $0xd0] sm:$0xff]
    %v2911 = vld [vmem:[%s7 + $0xd8] sm:$0xff]
    %v2912 = vld [vmem:[%s7 + $0xe0] sm:$0xff]
    %v2913 = vld [vmem:[%s7 + $0xe8] sm:$0xff]
    %v2914 = vld [vmem:[%s7 + $0xf0] sm:$0xff]
    %v2915 = vld [vmem:[%s7 + $0xf8] sm:$0xff]
    %s2916 = sld [smem:[#allocation2]]
    %v2917 = vstv %s2916
    %2918 = vmatprep.subr.mxu0 0.0
    %v2919 = vand.u32 %v2884, 4294901760
    %2920 = vmatpush1.msra.mxu0 %v2919
    %2921 = vmatprep.subr.mxu0 0.0
    %v2922 = vand.u32 %v2885, 4294901760
    %2923 = vmatpush1.msra.mxu0 %v2922
    %2924 = vmatprep.subr.mxu0 0.0
    %v2925 = vand.u32 %v2886, 4294901760
    %2926 = vmatpush1.msra.mxu0 %v2925
    %2927 = vmatprep.subr.mxu0 0.0
    %v2928 = vand.u32 %v2887, 4294901760
    %2929 = vmatpush1.msra.mxu0 %v2928
    %2930 = vmatprep.subr.mxu0 0.0
    %v2931 = vand.u32 %v2888, 4294901760
    %2932 = vmatpush1.msra.mxu0 %v2931
    %2933 = vmatprep.subr.mxu0 0.0
    %v2934 = vand.u32 %v2889, 4294901760
    %2935 = vmatpush1.msra.mxu0 %v2934
    %2936 = vmatprep.subr.mxu0 0.0
    %v2937 = vand.u32 %v2890, 4294901760
    %2938 = vmatpush1.msra.mxu0 %v2937
    %2939 = vmatprep.subr.mxu0 0.0
    %v2940 = vand.u32 %v2891, 4294901760
    %2941 = vmatpush1.msra.mxu0 %v2940
    %2942 = vmatprep.subr.mxu0 0.0
    %v2943 = vand.u32 %v2892, 4294901760
    %2944 = vmatpush1.msra.mxu0 %v2943
    %2945 = vmatprep.subr.mxu0 0.0
    %v2946 = vand.u32 %v2893, 4294901760
    %2947 = vmatpush1.msra.mxu0 %v2946
    %2948 = vmatprep.subr.mxu0 0.0
    %v2949 = vand.u32 %v2894, 4294901760
    %2950 = vmatpush1.msra.mxu0 %v2949
    %2951 = vmatprep.subr.mxu0 0.0
    %v2952 = vand.u32 %v2895, 4294901760
    %2953 = vmatpush1.msra.mxu0 %v2952
    %2954 = vmatprep.subr.mxu0 0.0
    %v2955 = vand.u32 %v2896, 4294901760
    %2956 = vmatpush1.msra.mxu0 %v2955
    %2957 = vmatprep.subr.mxu0 0.0
    %v2958 = vand.u32 %v2897, 4294901760
    %2959 = vmatpush1.msra.mxu0 %v2958
    %2960 = vmatprep.subr.mxu0 0.0
    %v2961 = vand.u32 %v2898, 4294901760
    %2962 = vmatpush1.msra.mxu0 %v2961
    %2963 = vmatprep.subr.mxu0 0.0
    %v2964 = vand.u32 %v2899, 4294901760
    %2965 = vmatpush1.msra.mxu0 %v2964
    %2966 = vmatprep.subr.mxu0 0.0
    %v2967 = vand.u32 %v2900, 4294901760
    %2968 = vmatpush1.msra.mxu0 %v2967
    %2969 = vmatprep.subr.mxu0 0.0
    %v2970 = vand.u32 %v2901, 4294901760
    %2971 = vmatpush1.msra.mxu0 %v2970
    %2972 = vmatprep.subr.mxu0 0.0
    %v2973 = vand.u32 %v2902, 4294901760
    %2974 = vmatpush1.msra.mxu0 %v2973
    %2975 = vmatprep.subr.mxu0 0.0
    %v2976 = vand.u32 %v2903, 4294901760
    %2977 = vmatpush1.msra.mxu0 %v2976
    %2978 = vmatprep.subr.mxu0 0.0
    %v2979 = vand.u32 %v2904, 4294901760
    %2980 = vmatpush1.msra.mxu0 %v2979
    %2981 = vmatprep.subr.mxu0 0.0
    %v2982 = vand.u32 %v2905, 4294901760
    %2983 = vmatpush1.msra.mxu0 %v2982
    %2984 = vmatprep.subr.mxu0 0.0
    %v2985 = vand.u32 %v2906, 4294901760
    %2986 = vmatpush1.msra.mxu0 %v2985
    %2987 = vmatprep.subr.mxu0 0.0
    %v2988 = vand.u32 %v2907, 4294901760
    %2989 = vmatpush1.msra.mxu0 %v2988
    %2990 = vmatprep.subr.mxu0 0.0
    %v2991 = vand.u32 %v2908, 4294901760
    %2992 = vmatpush1.msra.mxu0 %v2991
    %2993 = vmatprep.subr.mxu0 0.0
    %v2994 = vand.u32 %v2909, 4294901760
    %2995 = vmatpush1.msra.mxu0 %v2994
    %2996 = vmatprep.subr.mxu0 0.0
    %v2997 = vand.u32 %v2910, 4294901760
    %2998 = vmatpush1.msra.mxu0 %v2997
    %2999 = vmatprep.subr.mxu0 0.0
    %v3000 = vand.u32 %v2911, 4294901760
    %3001 = vmatpush1.msra.mxu0 %v3000
    %3002 = vmatprep.subr.mxu0 0.0
    %v3003 = vand.u32 %v2912, 4294901760
    %3004 = vmatpush1.msra.mxu0 %v3003
    %3005 = vmatprep.subr.mxu0 0.0
    %v3006 = vand.u32 %v2913, 4294901760
    %3007 = vmatpush1.msra.mxu0 %v3006
    %3008 = vmatprep.subr.mxu0 0.0
    %v3009 = vand.u32 %v2914, 4294901760
    %3010 = vmatpush1.msra.mxu0 %v3009
    %3011 = vmatprep.subr.mxu0 0.0
    %v3012 = vand.u32 %v2915, 4294901760
    %3013 = vmatpush1.msra.mxu0 %v3012
    %v3014 = vand.u32 %v2883, 4294901760
    %v3015 = vsub.f32 %v2883, %v3014
    %v3016 = vand.u32 %v3015, 4294901760
    %v3017 = vsub.f32 %v3015, %v3016
    %v3018 = vand.u32 %v3017, 4294901760
    %3019 = vmatprep.mubr.f32.mxu0 %v3018
    %v3020 = vand.u32 %v2882, 4294901760
    %v3021 = vsub.f32 %v2882, %v3020
    %v3022 = vand.u32 %v3021, 4294901760
    %v3023 = vsub.f32 %v3021, %v3022
    %v3024 = vand.u32 %v3023, 4294901760
    %3025 = vmatmul.mubr.f32.gmra.mrb[0].mxu0 %v3024
    %v3026 = vpop.f32.mrb[0].mxu0
    %v3027 = vadd.f32 %v2917, %v3026
    %v3028 = vpop.f32.mrb[0].mxu0
    %3029 = vdwg.mxu0
    %3030 = vmatprep.subr.mxu0 0.0
    %v3031 = vand.u32 %v2884, 4294901760
    %v3032 = vsub.f32 %v2884, %v3031
    %v3033 = vand.u32 %v3032, 4294901760
    %v3034 = vsub.f32 %v3032, %v3033
    %v3035 = vand.u32 %v3034, 4294901760
    %3036 = vmatpush1.msra.mxu0 %v3035
    %3037 = vmatprep.subr.mxu0 0.0
    %v3038 = vand.u32 %v2885, 4294901760
    %v3039 = vsub.f32 %v2885, %v3038
    %v3040 = vand.u32 %v3039, 4294901760
    %v3041 = vsub.f32 %v3039, %v3040
    %v3042 = vand.u32 %v3041, 4294901760
    %3043 = vmatpush1.msra.mxu0 %v3042
    %3044 = vmatprep.subr.mxu0 0.0
    %v3045 = vand.u32 %v2886, 4294901760
    %v3046 = vsub.f32 %v2886, %v3045
    %v3047 = vand.u32 %v3046, 4294901760
    %v3048 = vsub.f32 %v3046, %v3047
    %v3049 = vand.u32 %v3048, 4294901760
    %3050 = vmatpush1.msra.mxu0 %v3049
    %3051 = vmatprep.subr.mxu0 0.0
    %v3052 = vand.u32 %v2887, 4294901760
    %v3053 = vsub.f32 %v2887, %v3052
    %v3054 = vand.u32 %v3053, 4294901760
    %v3055 = vsub.f32 %v3053, %v3054
    %v3056 = vand.u32 %v3055, 4294901760
    %3057 = vmatpush1.msra.mxu0 %v3056
    %3058 = vmatprep.subr.mxu0 0.0
    %v3059 = vand.u32 %v2888, 4294901760
    %v3060 = vsub.f32 %v2888, %v3059
    %v3061 = vand.u32 %v3060, 4294901760
    %v3062 = vsub.f32 %v3060, %v3061
    %v3063 = vand.u32 %v3062, 4294901760
    %3064 = vmatpush1.msra.mxu0 %v3063
    %3065 = vmatprep.subr.mxu0 0.0
    %v3066 = vand.u32 %v2889, 4294901760
    %v3067 = vsub.f32 %v2889, %v3066
    %v3068 = vand.u32 %v3067, 4294901760
    %v3069 = vsub.f32 %v3067, %v3068
    %v3070 = vand.u32 %v3069, 4294901760
    %3071 = vmatpush1.msra.mxu0 %v3070
    %3072 = vmatprep.subr.mxu0 0.0
    %v3073 = vand.u32 %v2890, 4294901760
    %v3074 = vsub.f32 %v2890, %v3073
    %v3075 = vand.u32 %v3074, 4294901760
    %v3076 = vsub.f32 %v3074, %v3075
    %v3077 = vand.u32 %v3076, 4294901760
    %3078 = vmatpush1.msra.mxu0 %v3077
    %3079 = vmatprep.subr.mxu0 0.0
    %v3080 = vand.u32 %v2891, 4294901760
    %v3081 = vsub.f32 %v2891, %v3080
    %v3082 = vand.u32 %v3081, 4294901760
    %v3083 = vsub.f32 %v3081, %v3082
    %v3084 = vand.u32 %v3083, 4294901760
    %3085 = vmatpush1.msra.mxu0 %v3084
    %3086 = vmatprep.subr.mxu0 0.0
    %v3087 = vand.u32 %v2892, 4294901760
    %v3088 = vsub.f32 %v2892, %v3087
    %v3089 = vand.u32 %v3088, 4294901760
    %v3090 = vsub.f32 %v3088, %v3089
    %v3091 = vand.u32 %v3090, 4294901760
    %3092 = vmatpush1.msra.mxu0 %v3091
    %3093 = vmatprep.subr.mxu0 0.0
    %v3094 = vand.u32 %v2893, 4294901760
    %v3095 = vsub.f32 %v2893, %v3094
    %v3096 = vand.u32 %v3095, 4294901760
    %v3097 = vsub.f32 %v3095, %v3096
    %v3098 = vand.u32 %v3097, 4294901760
    %3099 = vmatpush1.msra.mxu0 %v3098
    %3100 = vmatprep.subr.mxu0 0.0
    %v3101 = vand.u32 %v2894, 4294901760
    %v3102 = vsub.f32 %v2894, %v3101
    %v3103 = vand.u32 %v3102, 4294901760
    %v3104 = vsub.f32 %v3102, %v3103
    %v3105 = vand.u32 %v3104, 4294901760
    %3106 = vmatpush1.msra.mxu0 %v3105
    %3107 = vmatprep.subr.mxu0 0.0
    %v3108 = vand.u32 %v2895, 4294901760
    %v3109 = vsub.f32 %v2895, %v3108
    %v3110 = vand.u32 %v3109, 4294901760
    %v3111 = vsub.f32 %v3109, %v3110
    %v3112 = vand.u32 %v3111, 4294901760
    %3113 = vmatpush1.msra.mxu0 %v3112
    %3114 = vmatprep.subr.mxu0 0.0
    %v3115 = vand.u32 %v2896, 4294901760
    %v3116 = vsub.f32 %v2896, %v3115
    %v3117 = vand.u32 %v3116, 4294901760
    %v3118 = vsub.f32 %v3116, %v3117
    %v3119 = vand.u32 %v3118, 4294901760
    %3120 = vmatpush1.msra.mxu0 %v3119
    %3121 = vmatprep.subr.mxu0 0.0
    %v3122 = vand.u32 %v2897, 4294901760
    %v3123 = vsub.f32 %v2897, %v3122
    %v3124 = vand.u32 %v3123, 4294901760
    %v3125 = vsub.f32 %v3123, %v3124
    %v3126 = vand.u32 %v3125, 4294901760
    %3127 = vmatpush1.msra.mxu0 %v3126
    %3128 = vmatprep.subr.mxu0 0.0
    %v3129 = vand.u32 %v2898, 4294901760
    %v3130 = vsub.f32 %v2898, %v3129
    %v3131 = vand.u32 %v3130, 4294901760
    %v3132 = vsub.f32 %v3130, %v3131
    %v3133 = vand.u32 %v3132, 4294901760
    %3134 = vmatpush1.msra.mxu0 %v3133
    %3135 = vmatprep.subr.mxu0 0.0
    %v3136 = vand.u32 %v2899, 4294901760
    %v3137 = vsub.f32 %v2899, %v3136
    %v3138 = vand.u32 %v3137, 4294901760
    %v3139 = vsub.f32 %v3137, %v3138
    %v3140 = vand.u32 %v3139, 4294901760
    %3141 = vmatpush1.msra.mxu0 %v3140
    %3142 = vmatprep.subr.mxu0 0.0
    %v3143 = vand.u32 %v2900, 4294901760
    %v3144 = vsub.f32 %v2900, %v3143
    %v3145 = vand.u32 %v3144, 4294901760
    %v3146 = vsub.f32 %v3144, %v3145
    %v3147 = vand.u32 %v3146, 4294901760
    %3148 = vmatpush1.msra.mxu0 %v3147
    %3149 = vmatprep.subr.mxu0 0.0
    %v3150 = vand.u32 %v2901, 4294901760
    %v3151 = vsub.f32 %v2901, %v3150
    %v3152 = vand.u32 %v3151, 4294901760
    %v3153 = vsub.f32 %v3151, %v3152
    %v3154 = vand.u32 %v3153, 4294901760
    %3155 = vmatpush1.msra.mxu0 %v3154
    %3156 = vmatprep.subr.mxu0 0.0
    %v3157 = vand.u32 %v2902, 4294901760
    %v3158 = vsub.f32 %v2902, %v3157
    %v3159 = vand.u32 %v3158, 4294901760
    %v3160 = vsub.f32 %v3158, %v3159
    %v3161 = vand.u32 %v3160, 4294901760
    %3162 = vmatpush1.msra.mxu0 %v3161
    %3163 = vmatprep.subr.mxu0 0.0
    %v3164 = vand.u32 %v2903, 4294901760
    %v3165 = vsub.f32 %v2903, %v3164
    %v3166 = vand.u32 %v3165, 4294901760
    %v3167 = vsub.f32 %v3165, %v3166
    %v3168 = vand.u32 %v3167, 4294901760
    %3169 = vmatpush1.msra.mxu0 %v3168
    %3170 = vmatprep.subr.mxu0 0.0
    %v3171 = vand.u32 %v2904, 4294901760
    %v3172 = vsub.f32 %v2904, %v3171
    %v3173 = vand.u32 %v3172, 4294901760
    %v3174 = vsub.f32 %v3172, %v3173
    %v3175 = vand.u32 %v3174, 4294901760
    %3176 = vmatpush1.msra.mxu0 %v3175
    %3177 = vmatprep.subr.mxu0 0.0
    %v3178 = vand.u32 %v2905, 4294901760
    %v3179 = vsub.f32 %v2905, %v3178
    %v3180 = vand.u32 %v3179, 4294901760
    %v3181 = vsub.f32 %v3179, %v3180
    %v3182 = vand.u32 %v3181, 4294901760
    %3183 = vmatpush1.msra.mxu0 %v3182
    %3184 = vmatprep.subr.mxu0 0.0
    %v3185 = vand.u32 %v2906, 4294901760
    %v3186 = vsub.f32 %v2906, %v3185
    %v3187 = vand.u32 %v3186, 4294901760
    %v3188 = vsub.f32 %v3186, %v3187
    %v3189 = vand.u32 %v3188, 4294901760
    %3190 = vmatpush1.msra.mxu0 %v3189
    %3191 = vmatprep.subr.mxu0 0.0
    %v3192 = vand.u32 %v2907, 4294901760
    %v3193 = vsub.f32 %v2907, %v3192
    %v3194 = vand.u32 %v3193, 4294901760
    %v3195 = vsub.f32 %v3193, %v3194
    %v3196 = vand.u32 %v3195, 4294901760
    %3197 = vmatpush1.msra.mxu0 %v3196
    %3198 = vmatprep.subr.mxu0 0.0
    %v3199 = vand.u32 %v2908, 4294901760
    %v3200 = vsub.f32 %v2908, %v3199
    %v3201 = vand.u32 %v3200, 4294901760
    %v3202 = vsub.f32 %v3200, %v3201
    %v3203 = vand.u32 %v3202, 4294901760
    %3204 = vmatpush1.msra.mxu0 %v3203
    %3205 = vmatprep.subr.mxu0 0.0
    %v3206 = vand.u32 %v2909, 4294901760
    %v3207 = vsub.f32 %v2909, %v3206
    %v3208 = vand.u32 %v3207, 4294901760
    %v3209 = vsub.f32 %v3207, %v3208
    %v3210 = vand.u32 %v3209, 4294901760
    %3211 = vmatpush1.msra.mxu0 %v3210
    %3212 = vmatprep.subr.mxu0 0.0
    %v3213 = vand.u32 %v2910, 4294901760
    %v3214 = vsub.f32 %v2910, %v3213
    %v3215 = vand.u32 %v3214, 4294901760
    %v3216 = vsub.f32 %v3214, %v3215
    %v3217 = vand.u32 %v3216, 4294901760
    %3218 = vmatpush1.msra.mxu0 %v3217
    %3219 = vmatprep.subr.mxu0 0.0
    %v3220 = vand.u32 %v2911, 4294901760
    %v3221 = vsub.f32 %v2911, %v3220
    %v3222 = vand.u32 %v3221, 4294901760
    %v3223 = vsub.f32 %v3221, %v3222
    %v3224 = vand.u32 %v3223, 4294901760
    %3225 = vmatpush1.msra.mxu0 %v3224
    %3226 = vmatprep.subr.mxu0 0.0
    %v3227 = vand.u32 %v2912, 4294901760
    %v3228 = vsub.f32 %v2912, %v3227
    %v3229 = vand.u32 %v3228, 4294901760
    %v3230 = vsub.f32 %v3228, %v3229
    %v3231 = vand.u32 %v3230, 4294901760
    %3232 = vmatpush1.msra.mxu0 %v3231
    %3233 = vmatprep.subr.mxu0 0.0
    %v3234 = vand.u32 %v2913, 4294901760
    %v3235 = vsub.f32 %v2913, %v3234
    %v3236 = vand.u32 %v3235, 4294901760
    %v3237 = vsub.f32 %v3235, %v3236
    %v3238 = vand.u32 %v3237, 4294901760
    %3239 = vmatpush1.msra.mxu0 %v3238
    %3240 = vmatprep.subr.mxu0 0.0
    %v3241 = vand.u32 %v2914, 4294901760
    %v3242 = vsub.f32 %v2914, %v3241
    %v3243 = vand.u32 %v3242, 4294901760
    %v3244 = vsub.f32 %v3242, %v3243
    %v3245 = vand.u32 %v3244, 4294901760
    %3246 = vmatpush1.msra.mxu0 %v3245
    %3247 = vmatprep.subr.mxu0 0.0
    %v3248 = vand.u32 %v2915, 4294901760
    %v3249 = vsub.f32 %v2915, %v3248
    %v3250 = vand.u32 %v3249, 4294901760
    %v3251 = vsub.f32 %v3249, %v3250
    %v3252 = vand.u32 %v3251, 4294901760
    %3253 = vmatpush1.msra.mxu0 %v3252
    %v3254 = vand.u32 %v2883, 4294901760
    %3255 = vmatprep.mubr.f32.mxu0 %v3254
    %v3256 = vand.u32 %v2882, 4294901760
    %3257 = vmatmul.mubr.f32.gmra.mrb[0].mxu0 %v3256
    %v3258 = vpop.f32.mrb[0].mxu0
    %v3259 = vadd.f32 %v3027, %v3258
    %v3260 = vpop.f32.mrb[0].mxu0
    %3261 = vdwg.mxu0
    %3262 = vmatprep.subr.mxu0 0.0
    %v3263 = vand.u32 %v2884, 4294901760
    %v3264 = vsub.f32 %v2884, %v3263
    %3265 = vmatpush1.msra.mxu0 %v3264
    %3266 = vmatprep.subr.mxu0 0.0
    %v3267 = vand.u32 %v2885, 4294901760
    %v3268 = vsub.f32 %v2885, %v3267
    %3269 = vmatpush1.msra.mxu0 %v3268
    %3270 = vmatprep.subr.mxu0 0.0
    %v3271 = vand.u32 %v2886, 4294901760
    %v3272 = vsub.f32 %v2886, %v3271
    %3273 = vmatpush1.msra.mxu0 %v3272
    %3274 = vmatprep.subr.mxu0 0.0
    %v3275 = vand.u32 %v2887, 4294901760
    %v3276 = vsub.f32 %v2887, %v3275
    %3277 = vmatpush1.msra.mxu0 %v3276
    %3278 = vmatprep.subr.mxu0 0.0
    %v3279 = vand.u32 %v2888, 4294901760
    %v3280 = vsub.f32 %v2888, %v3279
    %3281 = vmatpush1.msra.mxu0 %v3280
    %3282 = vmatprep.subr.mxu0 0.0
    %v3283 = vand.u32 %v2889, 4294901760
    %v3284 = vsub.f32 %v2889, %v3283
    %3285 = vmatpush1.msra.mxu0 %v3284
    %3286 = vmatprep.subr.mxu0 0.0
    %v3287 = vand.u32 %v2890, 4294901760
    %v3288 = vsub.f32 %v2890, %v3287
    %3289 = vmatpush1.msra.mxu0 %v3288
    %3290 = vmatprep.subr.mxu0 0.0
    %v3291 = vand.u32 %v2891, 4294901760
    %v3292 = vsub.f32 %v2891, %v3291
    %3293 = vmatpush1.msra.mxu0 %v3292
    %3294 = vmatprep.subr.mxu0 0.0
    %v3295 = vand.u32 %v2892, 4294901760
    %v3296 = vsub.f32 %v2892, %v3295
    %3297 = vmatpush1.msra.mxu0 %v3296
    %3298 = vmatprep.subr.mxu0 0.0
    %v3299 = vand.u32 %v2893, 4294901760
    %v3300 = vsub.f32 %v2893, %v3299
    %3301 = vmatpush1.msra.mxu0 %v3300
    %3302 = vmatprep.subr.mxu0 0.0
    %v3303 = vand.u32 %v2894, 4294901760
    %v3304 = vsub.f32 %v2894, %v3303
    %3305 = vmatpush1.msra.mxu0 %v3304
    %3306 = vmatprep.subr.mxu0 0.0
    %v3307 = vand.u32 %v2895, 4294901760
    %v3308 = vsub.f32 %v2895, %v3307
    %3309 = vmatpush1.msra.mxu0 %v3308
    %3310 = vmatprep.subr.mxu0 0.0
    %v3311 = vand.u32 %v2896, 4294901760
    %v3312 = vsub.f32 %v2896, %v3311
    %3313 = vmatpush1.msra.mxu0 %v3312
    %3314 = vmatprep.subr.mxu0 0.0
    %v3315 = vand.u32 %v2897, 4294901760
    %v3316 = vsub.f32 %v2897, %v3315
    %3317 = vmatpush1.msra.mxu0 %v3316
    %3318 = vmatprep.subr.mxu0 0.0
    %v3319 = vand.u32 %v2898, 4294901760
    %v3320 = vsub.f32 %v2898, %v3319
    %3321 = vmatpush1.msra.mxu0 %v3320
    %3322 = vmatprep.subr.mxu0 0.0
    %v3323 = vand.u32 %v2899, 4294901760
    %v3324 = vsub.f32 %v2899, %v3323
    %3325 = vmatpush1.msra.mxu0 %v3324
    %3326 = vmatprep.subr.mxu0 0.0
    %v3327 = vand.u32 %v2900, 4294901760
    %v3328 = vsub.f32 %v2900, %v3327
    %3329 = vmatpush1.msra.mxu0 %v3328
    %3330 = vmatprep.subr.mxu0 0.0
    %v3331 = vand.u32 %v2901, 4294901760
    %v3332 = vsub.f32 %v2901, %v3331
    %3333 = vmatpush1.msra.mxu0 %v3332
    %3334 = vmatprep.subr.mxu0 0.0
    %v3335 = vand.u32 %v2902, 4294901760
    %v3336 = vsub.f32 %v2902, %v3335
    %3337 = vmatpush1.msra.mxu0 %v3336
    %3338 = vmatprep.subr.mxu0 0.0
    %v3339 = vand.u32 %v2903, 4294901760
    %v3340 = vsub.f32 %v2903, %v3339
    %3341 = vmatpush1.msra.mxu0 %v3340
    %3342 = vmatprep.subr.mxu0 0.0
    %v3343 = vand.u32 %v2904, 4294901760
    %v3344 = vsub.f32 %v2904, %v3343
    %3345 = vmatpush1.msra.mxu0 %v3344
    %3346 = vmatprep.subr.mxu0 0.0
    %v3347 = vand.u32 %v2905, 4294901760
    %v3348 = vsub.f32 %v2905, %v3347
    %3349 = vmatpush1.msra.mxu0 %v3348
    %3350 = vmatprep.subr.mxu0 0.0
    %v3351 = vand.u32 %v2906, 4294901760
    %v3352 = vsub.f32 %v2906, %v3351
    %3353 = vmatpush1.msra.mxu0 %v3352
    %3354 = vmatprep.subr.mxu0 0.0
    %v3355 = vand.u32 %v2907, 4294901760
    %v3356 = vsub.f32 %v2907, %v3355
    %3357 = vmatpush1.msra.mxu0 %v3356
    %3358 = vmatprep.subr.mxu0 0.0
    %v3359 = vand.u32 %v2908, 4294901760
    %v3360 = vsub.f32 %v2908, %v3359
    %3361 = vmatpush1.msra.mxu0 %v3360
    %3362 = vmatprep.subr.mxu0 0.0
    %v3363 = vand.u32 %v2909, 4294901760
    %v3364 = vsub.f32 %v2909, %v3363
    %3365 = vmatpush1.msra.mxu0 %v3364
    %3366 = vmatprep.subr.mxu0 0.0
    %v3367 = vand.u32 %v2910, 4294901760
    %v3368 = vsub.f32 %v2910, %v3367
    %3369 = vmatpush1.msra.mxu0 %v3368
    %3370 = vmatprep.subr.mxu0 0.0
    %v3371 = vand.u32 %v2911, 4294901760
    %v3372 = vsub.f32 %v2911, %v3371
    %3373 = vmatpush1.msra.mxu0 %v3372
    %3374 = vmatprep.subr.mxu0 0.0
    %v3375 = vand.u32 %v2912, 4294901760
    %v3376 = vsub.f32 %v2912, %v3375
    %3377 = vmatpush1.msra.mxu0 %v3376
    %3378 = vmatprep.subr.mxu0 0.0
    %v3379 = vand.u32 %v2913, 4294901760
    %v3380 = vsub.f32 %v2913, %v3379
    %3381 = vmatpush1.msra.mxu0 %v3380
    %3382 = vmatprep.subr.mxu0 0.0
    %v3383 = vand.u32 %v2914, 4294901760
    %v3384 = vsub.f32 %v2914, %v3383
    %3385 = vmatpush1.msra.mxu0 %v3384
    %3386 = vmatprep.subr.mxu0 0.0
    %v3387 = vand.u32 %v2915, 4294901760
    %v3388 = vsub.f32 %v2915, %v3387
    %3389 = vmatpush1.msra.mxu0 %v3388
    %v3390 = vand.u32 %v2883, 4294901760
    %v3391 = vsub.f32 %v2883, %v3390
    %3392 = vmatprep.mubr.f32.mxu0 %v3391
    %v3393 = vand.u32 %v2882, 4294901760
    %v3394 = vsub.f32 %v2882, %v3393
    %3395 = vmatmul.mubr.f32.gmra.mrb[0].mxu0 %v3394
    %v3396 = vpop.f32.mrb[0].mxu0
    %v3397 = vadd.f32 %v3259, %v3396
    %v3398 = vpop.f32.mrb[0].mxu0
    %3399 = vdwg.mxu0
    %3400 = vmatprep.subr.mxu0 0.0
    %v3401 = vand.u32 %v2884, 4294901760
    %3402 = vmatpush1.msra.mxu0 %v3401
    %3403 = vmatprep.subr.mxu0 0.0
    %v3404 = vand.u32 %v2885, 4294901760
    %3405 = vmatpush1.msra.mxu0 %v3404
    %3406 = vmatprep.subr.mxu0 0.0
    %v3407 = vand.u32 %v2886, 4294901760
    %3408 = vmatpush1.msra.mxu0 %v3407
    %3409 = vmatprep.subr.mxu0 0.0
    %v3410 = vand.u32 %v2887, 4294901760
    %3411 = vmatpush1.msra.mxu0 %v3410
    %3412 = vmatprep.subr.mxu0 0.0
    %v3413 = vand.u32 %v2888, 4294901760
    %3414 = vmatpush1.msra.mxu0 %v3413
    %3415 = vmatprep.subr.mxu0 0.0
    %v3416 = vand.u32 %v2889, 4294901760
    %3417 = vmatpush1.msra.mxu0 %v3416
    %3418 = vmatprep.subr.mxu0 0.0
    %v3419 = vand.u32 %v2890, 4294901760
    %3420 = vmatpush1.msra.mxu0 %v3419
    %3421 = vmatprep.subr.mxu0 0.0
    %v3422 = vand.u32 %v2891, 4294901760
    %3423 = vmatpush1.msra.mxu0 %v3422
    %3424 = vmatprep.subr.mxu0 0.0
    %v3425 = vand.u32 %v2892, 4294901760
    %3426 = vmatpush1.msra.mxu0 %v3425
    %3427 = vmatprep.subr.mxu0 0.0
    %v3428 = vand.u32 %v2893, 4294901760
    %3429 = vmatpush1.msra.mxu0 %v3428
    %3430 = vmatprep.subr.mxu0 0.0
    %v3431 = vand.u32 %v2894, 4294901760
    %3432 = vmatpush1.msra.mxu0 %v3431
    %3433 = vmatprep.subr.mxu0 0.0
    %v3434 = vand.u32 %v2895, 4294901760
    %3435 = vmatpush1.msra.mxu0 %v3434
    %3436 = vmatprep.subr.mxu0 0.0
    %v3437 = vand.u32 %v2896, 4294901760
    %3438 = vmatpush1.msra.mxu0 %v3437
    %3439 = vmatprep.subr.mxu0 0.0
    %v3440 = vand.u32 %v2897, 4294901760
    %3441 = vmatpush1.msra.mxu0 %v3440
    %3442 = vmatprep.subr.mxu0 0.0
    %v3443 = vand.u32 %v2898, 4294901760
    %3444 = vmatpush1.msra.mxu0 %v3443
    %3445 = vmatprep.subr.mxu0 0.0
    %v3446 = vand.u32 %v2899, 4294901760
    %3447 = vmatpush1.msra.mxu0 %v3446
    %3448 = vmatprep.subr.mxu0 0.0
    %v3449 = vand.u32 %v2900, 4294901760
    %3450 = vmatpush1.msra.mxu0 %v3449
    %3451 = vmatprep.subr.mxu0 0.0
    %v3452 = vand.u32 %v2901, 4294901760
    %3453 = vmatpush1.msra.mxu0 %v3452
    %3454 = vmatprep.subr.mxu0 0.0
    %v3455 = vand.u32 %v2902, 4294901760
    %3456 = vmatpush1.msra.mxu0 %v3455
    %3457 = vmatprep.subr.mxu0 0.0
    %v3458 = vand.u32 %v2903, 4294901760
    %3459 = vmatpush1.msra.mxu0 %v3458
    %3460 = vmatprep.subr.mxu0 0.0
    %v3461 = vand.u32 %v2904, 4294901760
    %3462 = vmatpush1.msra.mxu0 %v3461
    %3463 = vmatprep.subr.mxu0 0.0
    %v3464 = vand.u32 %v2905, 4294901760
    %3465 = vmatpush1.msra.mxu0 %v3464
    %3466 = vmatprep.subr.mxu0 0.0
    %v3467 = vand.u32 %v2906, 4294901760
    %3468 = vmatpush1.msra.mxu0 %v3467
    %3469 = vmatprep.subr.mxu0 0.0
    %v3470 = vand.u32 %v2907, 4294901760
    %3471 = vmatpush1.msra.mxu0 %v3470
    %3472 = vmatprep.subr.mxu0 0.0
    %v3473 = vand.u32 %v2908, 4294901760
    %3474 = vmatpush1.msra.mxu0 %v3473
    %3475 = vmatprep.subr.mxu0 0.0
    %v3476 = vand.u32 %v2909, 4294901760
    %3477 = vmatpush1.msra.mxu0 %v3476
    %3478 = vmatprep.subr.mxu0 0.0
    %v3479 = vand.u32 %v2910, 4294901760
    %3480 = vmatpush1.msra.mxu0 %v3479
    %3481 = vmatprep.subr.mxu0 0.0
    %v3482 = vand.u32 %v2911, 4294901760
    %3483 = vmatpush1.msra.mxu0 %v3482
    %3484 = vmatprep.subr.mxu0 0.0
    %v3485 = vand.u32 %v2912, 4294901760
    %3486 = vmatpush1.msra.mxu0 %v3485
    %3487 = vmatprep.subr.mxu0 0.0
    %v3488 = vand.u32 %v2913, 4294901760
    %3489 = vmatpush1.msra.mxu0 %v3488
    %3490 = vmatprep.subr.mxu0 0.0
    %v3491 = vand.u32 %v2914, 4294901760
    %3492 = vmatpush1.msra.mxu0 %v3491
    %3493 = vmatprep.subr.mxu0 0.0
    %v3494 = vand.u32 %v2915, 4294901760
    %3495 = vmatpush1.msra.mxu0 %v3494
    %v3496 = vand.u32 %v2883, 4294901760
    %v3497 = vsub.f32 %v2883, %v3496
    %v3498 = vand.u32 %v3497, 4294901760
    %3499 = vmatprep.mubr.f32.mxu0 %v3498
    %v3500 = vand.u32 %v2882, 4294901760
    %v3501 = vsub.f32 %v2882, %v3500
    %v3502 = vand.u32 %v3501, 4294901760
    %3503 = vmatmul.mubr.f32.gmra.mrb[0].mxu0 %v3502
    %v3504 = vpop.f32.mrb[0].mxu0
    %v3505 = vadd.f32 %v3397, %v3504
    %v3506 = vpop.f32.mrb[0].mxu0
    %3507 = vdwg.mxu0
    %3508 = vmatprep.subr.mxu0 0.0
    %v3509 = vand.u32 %v2884, 4294901760
    %v3510 = vsub.f32 %v2884, %v3509
    %v3511 = vand.u32 %v3510, 4294901760
    %3512 = vmatpush1.msra.mxu0 %v3511
    %3513 = vmatprep.subr.mxu0 0.0
    %v3514 = vand.u32 %v2885, 4294901760
    %v3515 = vsub.f32 %v2885, %v3514
    %v3516 = vand.u32 %v3515, 4294901760
    %3517 = vmatpush1.msra.mxu0 %v3516
    %3518 = vmatprep.subr.mxu0 0.0
    %v3519 = vand.u32 %v2886, 4294901760
    %v3520 = vsub.f32 %v2886, %v3519
    %v3521 = vand.u32 %v3520, 4294901760
    %3522 = vmatpush1.msra.mxu0 %v3521
    %3523 = vmatprep.subr.mxu0 0.0
    %v3524 = vand.u32 %v2887, 4294901760
    %v3525 = vsub.f32 %v2887, %v3524
    %v3526 = vand.u32 %v3525, 4294901760
    %3527 = vmatpush1.msra.mxu0 %v3526
    %3528 = vmatprep.subr.mxu0 0.0
    %v3529 = vand.u32 %v2888, 4294901760
    %v3530 = vsub.f32 %v2888, %v3529
    %v3531 = vand.u32 %v3530, 4294901760
    %3532 = vmatpush1.msra.mxu0 %v3531
    %3533 = vmatprep.subr.mxu0 0.0
    %v3534 = vand.u32 %v2889, 4294901760
    %v3535 = vsub.f32 %v2889, %v3534
    %v3536 = vand.u32 %v3535, 4294901760
    %3537 = vmatpush1.msra.mxu0 %v3536
    %3538 = vmatprep.subr.mxu0 0.0
    %v3539 = vand.u32 %v2890, 4294901760
    %v3540 = vsub.f32 %v2890, %v3539
    %v3541 = vand.u32 %v3540, 4294901760
    %3542 = vmatpush1.msra.mxu0 %v3541
    %3543 = vmatprep.subr.mxu0 0.0
    %v3544 = vand.u32 %v2891, 4294901760
    %v3545 = vsub.f32 %v2891, %v3544
    %v3546 = vand.u32 %v3545, 4294901760
    %3547 = vmatpush1.msra.mxu0 %v3546
    %3548 = vmatprep.subr.mxu0 0.0
    %v3549 = vand.u32 %v2892, 4294901760
    %v3550 = vsub.f32 %v2892, %v3549
    %v3551 = vand.u32 %v3550, 4294901760
    %3552 = vmatpush1.msra.mxu0 %v3551
    %3553 = vmatprep.subr.mxu0 0.0
    %v3554 = vand.u32 %v2893, 4294901760
    %v3555 = vsub.f32 %v2893, %v3554
    %v3556 = vand.u32 %v3555, 4294901760
    %3557 = vmatpush1.msra.mxu0 %v3556
    %3558 = vmatprep.subr.mxu0 0.0
    %v3559 = vand.u32 %v2894, 4294901760
    %v3560 = vsub.f32 %v2894, %v3559
    %v3561 = vand.u32 %v3560, 4294901760
    %3562 = vmatpush1.msra.mxu0 %v3561
    %3563 = vmatprep.subr.mxu0 0.0
    %v3564 = vand.u32 %v2895, 4294901760
    %v3565 = vsub.f32 %v2895, %v3564
    %v3566 = vand.u32 %v3565, 4294901760
    %3567 = vmatpush1.msra.mxu0 %v3566
    %3568 = vmatprep.subr.mxu0 0.0
    %v3569 = vand.u32 %v2896, 4294901760
    %v3570 = vsub.f32 %v2896, %v3569
    %v3571 = vand.u32 %v3570, 4294901760
    %3572 = vmatpush1.msra.mxu0 %v3571
    %3573 = vmatprep.subr.mxu0 0.0
    %v3574 = vand.u32 %v2897, 4294901760
    %v3575 = vsub.f32 %v2897, %v3574
    %v3576 = vand.u32 %v3575, 4294901760
    %3577 = vmatpush1.msra.mxu0 %v3576
    %3578 = vmatprep.subr.mxu0 0.0
    %v3579 = vand.u32 %v2898, 4294901760
    %v3580 = vsub.f32 %v2898, %v3579
    %v3581 = vand.u32 %v3580, 4294901760
    %3582 = vmatpush1.msra.mxu0 %v3581
    %3583 = vmatprep.subr.mxu0 0.0
    %v3584 = vand.u32 %v2899, 4294901760
    %v3585 = vsub.f32 %v2899, %v3584
    %v3586 = vand.u32 %v3585, 4294901760
    %3587 = vmatpush1.msra.mxu0 %v3586
    %3588 = vmatprep.subr.mxu0 0.0
    %v3589 = vand.u32 %v2900, 4294901760
    %v3590 = vsub.f32 %v2900, %v3589
    %v3591 = vand.u32 %v3590, 4294901760
    %3592 = vmatpush1.msra.mxu0 %v3591
    %3593 = vmatprep.subr.mxu0 0.0
    %v3594 = vand.u32 %v2901, 4294901760
    %v3595 = vsub.f32 %v2901, %v3594
    %v3596 = vand.u32 %v3595, 4294901760
    %3597 = vmatpush1.msra.mxu0 %v3596
    %3598 = vmatprep.subr.mxu0 0.0
    %v3599 = vand.u32 %v2902, 4294901760
    %v3600 = vsub.f32 %v2902, %v3599
    %v3601 = vand.u32 %v3600, 4294901760
    %3602 = vmatpush1.msra.mxu0 %v3601
    %3603 = vmatprep.subr.mxu0 0.0
    %v3604 = vand.u32 %v2903, 4294901760
    %v3605 = vsub.f32 %v2903, %v3604
    %v3606 = vand.u32 %v3605, 4294901760
    %3607 = vmatpush1.msra.mxu0 %v3606
    %3608 = vmatprep.subr.mxu0 0.0
    %v3609 = vand.u32 %v2904, 4294901760
    %v3610 = vsub.f32 %v2904, %v3609
    %v3611 = vand.u32 %v3610, 4294901760
    %3612 = vmatpush1.msra.mxu0 %v3611
    %3613 = vmatprep.subr.mxu0 0.0
    %v3614 = vand.u32 %v2905, 4294901760
    %v3615 = vsub.f32 %v2905, %v3614
    %v3616 = vand.u32 %v3615, 4294901760
    %3617 = vmatpush1.msra.mxu0 %v3616
    %3618 = vmatprep.subr.mxu0 0.0
    %v3619 = vand.u32 %v2906, 4294901760
    %v3620 = vsub.f32 %v2906, %v3619
    %v3621 = vand.u32 %v3620, 4294901760
    %3622 = vmatpush1.msra.mxu0 %v3621
    %3623 = vmatprep.subr.mxu0 0.0
    %v3624 = vand.u32 %v2907, 4294901760
    %v3625 = vsub.f32 %v2907, %v3624
    %v3626 = vand.u32 %v3625, 4294901760
    %3627 = vmatpush1.msra.mxu0 %v3626
    %3628 = vmatprep.subr.mxu0 0.0
    %v3629 = vand.u32 %v2908, 4294901760
    %v3630 = vsub.f32 %v2908, %v3629
    %v3631 = vand.u32 %v3630, 4294901760
    %3632 = vmatpush1.msra.mxu0 %v3631
    %3633 = vmatprep.subr.mxu0 0.0
    %v3634 = vand.u32 %v2909, 4294901760
    %v3635 = vsub.f32 %v2909, %v3634
    %v3636 = vand.u32 %v3635, 4294901760
    %3637 = vmatpush1.msra.mxu0 %v3636
    %3638 = vmatprep.subr.mxu0 0.0
    %v3639 = vand.u32 %v2910, 4294901760
    %v3640 = vsub.f32 %v2910, %v3639
    %v3641 = vand.u32 %v3640, 4294901760
    %3642 = vmatpush1.msra.mxu0 %v3641
    %3643 = vmatprep.subr.mxu0 0.0
    %v3644 = vand.u32 %v2911, 4294901760
    %v3645 = vsub.f32 %v2911, %v3644
    %v3646 = vand.u32 %v3645, 4294901760
    %3647 = vmatpush1.msra.mxu0 %v3646
    %3648 = vmatprep.subr.mxu0 0.0
    %v3649 = vand.u32 %v2912, 4294901760
    %v3650 = vsub.f32 %v2912, %v3649
    %v3651 = vand.u32 %v3650, 4294901760
    %3652 = vmatpush1.msra.mxu0 %v3651
    %3653 = vmatprep.subr.mxu0 0.0
    %v3654 = vand.u32 %v2913, 4294901760
    %v3655 = vsub.f32 %v2913, %v3654
    %v3656 = vand.u32 %v3655, 4294901760
    %3657 = vmatpush1.msra.mxu0 %v3656
    %3658 = vmatprep.subr.mxu0 0.0
    %v3659 = vand.u32 %v2914, 4294901760
    %v3660 = vsub.f32 %v2914, %v3659
    %v3661 = vand.u32 %v3660, 4294901760
    %3662 = vmatpush1.msra.mxu0 %v3661
    %3663 = vmatprep.subr.mxu0 0.0
    %v3664 = vand.u32 %v2915, 4294901760
    %v3665 = vsub.f32 %v2915, %v3664
    %v3666 = vand.u32 %v3665, 4294901760
    %3667 = vmatpush1.msra.mxu0 %v3666
    %v3668 = vand.u32 %v2883, 4294901760
    %3669 = vmatprep.mubr.f32.mxu0 %v3668
    %v3670 = vand.u32 %v2882, 4294901760
    %3671 = vmatmul.mubr.f32.gmra.mrb[0].mxu0 %v3670
    %v3672 = vpop.f32.mrb[0].mxu0
    %v3673 = vadd.f32 %v3505, %v3672
    %v3674 = vpop.f32.mrb[0].mxu0
    %3675 = vdwg.mxu0
    %3676 = vmatprep.subr.mxu0 0.0
    %v3677 = vand.u32 %v2884, 4294901760
    %3678 = vmatpush1.msra.mxu0 %v3677
    %3679 = vmatprep.subr.mxu0 0.0
    %v3680 = vand.u32 %v2885, 4294901760
    %3681 = vmatpush1.msra.mxu0 %v3680
    %3682 = vmatprep.subr.mxu0 0.0
    %v3683 = vand.u32 %v2886, 4294901760
    %3684 = vmatpush1.msra.mxu0 %v3683
    %3685 = vmatprep.subr.mxu0 0.0
    %v3686 = vand.u32 %v2887, 4294901760
    %3687 = vmatpush1.msra.mxu0 %v3686
    %3688 = vmatprep.subr.mxu0 0.0
    %v3689 = vand.u32 %v2888, 4294901760
    %3690 = vmatpush1.msra.mxu0 %v3689
    %3691 = vmatprep.subr.mxu0 0.0
    %v3692 = vand.u32 %v2889, 4294901760
    %3693 = vmatpush1.msra.mxu0 %v3692
    %3694 = vmatprep.subr.mxu0 0.0
    %v3695 = vand.u32 %v2890, 4294901760
    %3696 = vmatpush1.msra.mxu0 %v3695
    %3697 = vmatprep.subr.mxu0 0.0
    %v3698 = vand.u32 %v2891, 4294901760
    %3699 = vmatpush1.msra.mxu0 %v3698
    %3700 = vmatprep.subr.mxu0 0.0
    %v3701 = vand.u32 %v2892, 4294901760
    %3702 = vmatpush1.msra.mxu0 %v3701
    %3703 = vmatprep.subr.mxu0 0.0
    %v3704 = vand.u32 %v2893, 4294901760
    %3705 = vmatpush1.msra.mxu0 %v3704
    %3706 = vmatprep.subr.mxu0 0.0
    %v3707 = vand.u32 %v2894, 4294901760
    %3708 = vmatpush1.msra.mxu0 %v3707
    %3709 = vmatprep.subr.mxu0 0.0
    %v3710 = vand.u32 %v2895, 4294901760
    %3711 = vmatpush1.msra.mxu0 %v3710
    %3712 = vmatprep.subr.mxu0 0.0
    %v3713 = vand.u32 %v2896, 4294901760
    %3714 = vmatpush1.msra.mxu0 %v3713
    %3715 = vmatprep.subr.mxu0 0.0
    %v3716 = vand.u32 %v2897, 4294901760
    %3717 = vmatpush1.msra.mxu0 %v3716
    %3718 = vmatprep.subr.mxu0 0.0
    %v3719 = vand.u32 %v2898, 4294901760
    %3720 = vmatpush1.msra.mxu0 %v3719
    %3721 = vmatprep.subr.mxu0 0.0
    %v3722 = vand.u32 %v2899, 4294901760
    %3723 = vmatpush1.msra.mxu0 %v3722
    %3724 = vmatprep.subr.mxu0 0.0
    %v3725 = vand.u32 %v2900, 4294901760
    %3726 = vmatpush1.msra.mxu0 %v3725
    %3727 = vmatprep.subr.mxu0 0.0
    %v3728 = vand.u32 %v2901, 4294901760
    %3729 = vmatpush1.msra.mxu0 %v3728
    %3730 = vmatprep.subr.mxu0 0.0
    %v3731 = vand.u32 %v2902, 4294901760
    %3732 = vmatpush1.msra.mxu0 %v3731
    %3733 = vmatprep.subr.mxu0 0.0
    %v3734 = vand.u32 %v2903, 4294901760
    %3735 = vmatpush1.msra.mxu0 %v3734
    %3736 = vmatprep.subr.mxu0 0.0
    %v3737 = vand.u32 %v2904, 4294901760
    %3738 = vmatpush1.msra.mxu0 %v3737
    %3739 = vmatprep.subr.mxu0 0.0
    %v3740 = vand.u32 %v2905, 4294901760
    %3741 = vmatpush1.msra.mxu0 %v3740
    %3742 = vmatprep.subr.mxu0 0.0
    %v3743 = vand.u32 %v2906, 4294901760
    %3744 = vmatpush1.msra.mxu0 %v3743
    %3745 = vmatprep.subr.mxu0 0.0
    %v3746 = vand.u32 %v2907, 4294901760
    %3747 = vmatpush1.msra.mxu0 %v3746
    %3748 = vmatprep.subr.mxu0 0.0
    %v3749 = vand.u32 %v2908, 4294901760
    %3750 = vmatpush1.msra.mxu0 %v3749
    %3751 = vmatprep.subr.mxu0 0.0
    %v3752 = vand.u32 %v2909, 4294901760
    %3753 = vmatpush1.msra.mxu0 %v3752
    %3754 = vmatprep.subr.mxu0 0.0
    %v3755 = vand.u32 %v2910, 4294901760
    %3756 = vmatpush1.msra.mxu0 %v3755
    %3757 = vmatprep.subr.mxu0 0.0
    %v3758 = vand.u32 %v2911, 4294901760
    %3759 = vmatpush1.msra.mxu0 %v3758
    %3760 = vmatprep.subr.mxu0 0.0
    %v3761 = vand.u32 %v2912, 4294901760
    %3762 = vmatpush1.msra.mxu0 %v3761
    %3763 = vmatprep.subr.mxu0 0.0
    %v3764 = vand.u32 %v2913, 4294901760
    %3765 = vmatpush1.msra.mxu0 %v3764
    %3766 = vmatprep.subr.mxu0 0.0
    %v3767 = vand.u32 %v2914, 4294901760
    %3768 = vmatpush1.msra.mxu0 %v3767
    %3769 = vmatprep.subr.mxu0 0.0
    %v3770 = vand.u32 %v2915, 4294901760
    %3771 = vmatpush1.msra.mxu0 %v3770
    %v3772 = vand.u32 %v2883, 4294901760
    %3773 = vmatprep.mubr.f32.mxu0 %v3772
    %v3774 = vand.u32 %v2882, 4294901760
    %3775 = vmatmul.mubr.f32.gmra.mrb[0].mxu0 %v3774
    %v3776 = vpop.f32.mrb[0].mxu0
    %v3777 = vadd.f32 %v3673, %v3776
    %v3778 = vpop.f32.mrb[0].mxu0
    %3779 = vdwg.mxu0
    %vm3780 = vcmask 64512
    %3781 = vst.msk [vmem:[#allocation8] sm:$0xff] %vm3780, %v3777
    // Predicated region
    $region46: #{tpu_custom_call.1} parent=1 // pred_check
      _
    $region47: #{tpu_custom_call.1} parent=1 // pred_check_branch
      %3783 = sbr.rel (0) target = $region49
    $region48: #{tpu_custom_call.1} parent=1 // pred_region
      %s3785 = ssub.s32 128, 128
      %3786 = vsyncadd [#allocation5], %s3785
      %s3788 = sshll.u32 [#allocation8], 4
      %s3789 = int_to_ptr.vmem [resolvable:$true] %s3788
      %3791 = dma.vmem_to_hbm [thread:$0]  %s3789, 128, %s9, [#allocation5]
    $region49: #{tpu_custom_call.1} parent=1 // pred_fallthru
      _
    // Predicated region
    $region50: #{tpu_custom_call.1} parent=1 // pred_check
      _
    $region51: #{tpu_custom_call.1} parent=1 // pred_check_branch
      %3793 = sbr.rel (0) target = $region53
    $region52: #{tpu_custom_call.1} parent=1 // pred_region
      %3794 = dma.done [#allocation5], 128
    $region53: #{tpu_custom_call.1} parent=1 // pred_fallthru
      _
    %3795 = vsyncpa [#allocation4], 1
    %3796 = vsyncpa [#allocation7], 1
    %3797 = vsyncpa [#allocation5], 1

</llo_original>
